<compile_context>
chip_gen: v5e
topology: v5e:2x2
jax: 0.10.0
libtpu: 0.0.40
codegen_flags: <defaults>
</compile_context>

<pallas_src>
import functools
import math

import jax
import jax.numpy as jnp
from jax.experimental import pallas as pl
from jax.experimental.pallas import tpu as pltpu


# ----------------------------- in-kernel helpers -----------------------------

def _layer_norm(x, w, b, eps=1e-5):
    """LayerNorm over the last dim. x: (M, D) f32; w, b: (1, D) f32."""
    mu = jnp.mean(x, axis=-1, keepdims=True)
    xc = x - mu
    var = jnp.mean(xc * xc, axis=-1, keepdims=True)
    return xc * jax.lax.rsqrt(var + eps) * w + b          # rsqrt -> EUP slot


def _mm_nt(a, w_bf16):
    """(M, K) f32 @ (N, K) bf16 ^T -> (M, N) f32. bf16 MXU operands, f32 accum."""
    return jax.lax.dot_general(a.astype(jnp.bfloat16), w_bf16,
                               (((1,), (1,)), ((), ())),
                               preferred_element_type=jnp.float32)


# --------------------------------- kernel ------------------------------------

def _gate_cross_attn_kernel(
        cross_ref, ft_ref,
        sa_in_w_ref, sa_out_w_ref,
        ca_in_w_ref, ca_out_w_ref,
        ffn_w1_ref, ffn_w2_ref,
        in_b_ref,        # (2, 3D) f32 rows: [sa_in_b ; ca_in_b] (Q part pre-scaled)
        dvec_ref,        # (11, D) f32 packed biases / LayerNorm params
        ffn_b1_ref,      # (1, HID) f32
        out_ref, attmap_ref,
        *, n_heads, bool_sa, bt, lq, lk):
    d = ft_ref.shape[-1]
    dh = d // n_heads
    inv_h = 1.0 / n_heads

    x = ft_ref[...].astype(jnp.float32)            # (Bt*Lq, D)
    cross = cross_ref[...].astype(jnp.float32)     # (Bt*Lk, D)
    dvec = dvec_ref[...]
    in_b = in_b_ref[...]

    def vec(i):                                    # (1, D) broadcast row
        return dvec[i:i + 1, :]

    def mha(q2d, kv2d, lkv, in_w_ref, in_bias, out_w_ref, out_bias, need_att):
        """nn.MultiheadAttention (batch_first) on Bt batch elements at once.

        q2d: (Bt*Lq, D), kv2d: (Bt*lkv, D).  QKV projection and out-projection are
        single K=D MXU matmuls on the flattened row block; the 1/sqrt(dh) Q scale
        was folded into the in_proj weights/bias by the wrapper.
        """
        w = in_w_ref[...]                                            # (3D, D) bf16
        q = _mm_nt(q2d, w[0:d]) + in_bias[:, 0:d]
        k = _mm_nt(kv2d, w[d:2 * d]) + in_bias[:, d:2 * d]
        v = _mm_nt(kv2d, w[2 * d:3 * d]) + in_bias[:, 2 * d:3 * d]
        q3 = q.reshape(bt, lq, d)
        k3 = k.reshape(bt, lkv, d)
        v3 = v.reshape(bt, lkv, d)

        att = jnp.zeros((bt, lq, lkv), jnp.float32) if need_att else None
        o_parts = []
        for h in range(n_heads):                   # static unroll, n_heads is small
            sl = slice(h * dh, (h + 1) * dh)
            s = jnp.einsum('bqc,bkc->bqk',
                           q3[..., sl].astype(jnp.bfloat16),
                           k3[..., sl].astype(jnp.bfloat16),
                           preferred_element_type=jnp.float32)       # (Bt, Lq, lkv)
            s = s - jnp.max(s, axis=-1, keepdims=True)
            e = jnp.exp(s)                                           # EUP
            p = e * pl.reciprocal(jnp.sum(e, axis=-1, keepdims=True), approx=True)
            if need_att:
                att = att + p
            o_h = jnp.einsum('bqk,bkc->bqc',
                             p.astype(jnp.bfloat16),
                             v3[..., sl].astype(jnp.bfloat16),
                             preferred_element_type=jnp.float32)     # (Bt, Lq, dh)
            o_parts.append(o_h.reshape(bt * lq, dh))
        o = jnp.concatenate(o_parts, axis=-1)                        # (Bt*Lq, D)
        out = _mm_nt(o, out_w_ref[...]) + out_bias                   # single K=D out-proj
        if need_att:
            att = att * inv_h
        return out, att

    # --- self-attention block (dropout == identity at inference) ---
    if bool_sa:
        residual = x
        sa_out, _ = mha(x, x, lq, sa_in_w_ref, in_b[0:1, :], sa_out_w_ref, vec(0),
                        need_att=False)
        x = _layer_norm(sa_out + residual, vec(1), vec(2))

    original = x

    # --- cross-attention block ---
    residual = x
    ca_out, att_map = mha(x, cross, lk, ca_in_w_ref, in_b[1:2, :], ca_out_w_ref, vec(3),
                          need_att=True)
    x = _layer_norm(ca_out + residual, vec(4), vec(5))

    # --- FFN block ---
    residual = x
    hdn = jnp.maximum(_mm_nt(x, ffn_w1_ref[...]) + ffn_b1_ref[...], 0.0)
    y = _mm_nt(hdn, ffn_w2_ref[...]) + vec(6)
    x = _layer_norm(y + residual, vec(7), vec(8))

    # --- gating block: softmax over the sequence axis of <ft, original> ---
    residual = x
    x3 = x.reshape(bt, lq, d)
    g = jnp.sum(x3 * original.reshape(bt, lq, d), axis=-1, keepdims=True)  # (Bt, Lq, 1)
    g = g - jnp.max(g, axis=1, keepdims=True)
    e = jnp.exp(g)
    g = e * pl.reciprocal(jnp.sum(e, axis=1, keepdims=True), approx=True)
    x = _layer_norm((x3 * g).reshape(bt * lq, d) + residual, vec(9), vec(10))

    out_ref[...] = x.astype(out_ref.dtype)
    attmap_ref[...] = att_map.reshape(bt * lq, lk).astype(attmap_ref.dtype)


# --------------------------------- wrapper -----------------------------------

def gate_cross_attention_layer(cross_ft, ft, params, *, n_heads, bool_sa=True,
                               block_b=None, single_buffer_weights=True):
    """cross_ft: (B, Lk, D), ft: (B, Lq, D) -> (out (B, Lq, D), att_map (B, Lq, Lk))."""
    B, Lq, D = ft.shape
    Lk = cross_ft.shape[1]
    assert cross_ft.shape[0] == B and cross_ft.shape[2] == D
    assert D % n_heads == 0, "n_heads must divide dim_feature"
    scale = 1.0 / math.sqrt(D // n_heads)

    # Row blocking: Bt batch elements per grid step.  Keep the grid length >= 2
    # so both TensorCores of a v7x megacore get balanced work.
    if block_b is None:
        block_b = 1
        for cand in range(B, 0, -1):
            if B % cand == 0 and B // cand >= 2:
                block_b = cand
                break
    assert B % block_b == 0
    grid_b = B // block_b

    f32, bf16 = jnp.float32, jnp.bfloat16

    def fold_q_scale_w(w):       # fold 1/sqrt(dh) into the Q rows of in_proj
        return jnp.concatenate([w[:D] * scale, w[D:]], axis=0)

    def fold_q_scale_b(b):
        return jnp.concatenate([b[:D] * scale, b[D:]], axis=0)

    if bool_sa:
        sa_in_w = fold_q_scale_w(params["sa_in_w"].astype(f32)).astype(bf16)
        sa_out_w = params["sa_out_w"].astype(bf16)
        sa_in_b = fold_q_scale_b(params["sa_in_b"].astype(f32))
        sa_out_b = params["sa_out_b"].astype(f32)
        sa_ln_w = params["sa_ln_w"].astype(f32)
        sa_ln_b = params["sa_ln_b"].astype(f32)
    else:  # placeholders: DMA'd once but never read (kernel skips the SA block)
        sa_in_w = jnp.zeros((3 * D, D), bf16)
        sa_out_w = jnp.zeros((D, D), bf16)
        sa_in_b = jnp.zeros((3 * D,), f32)
        sa_out_b = jnp.zeros((D,), f32)
        sa_ln_w = jnp.ones((D,), f32)
        sa_ln_b = jnp.zeros((D,), f32)

    ca_in_w = fold_q_scale_w(params["ca_in_w"].astype(f32)).astype(bf16)
    ca_out_w = params["ca_out_w"].astype(bf16)
    ffn_w1 = params["ffn_w1"].astype(bf16)
    ffn_w2 = params["ffn_w2"].astype(bf16)

    # Pack the 14 small bias / LayerNorm vectors into 3 stacked slabs.
    dvecs = jnp.stack([
        sa_out_b, sa_ln_w, sa_ln_b,
        params["ca_out_b"].astype(f32),
        params["ln1_w"].astype(f32), params["ln1_b"].astype(f32),
        params["ffn_b2"].astype(f32),
        params["ln2_w"].astype(f32), params["ln2_b"].astype(f32),
        params["ln3_w"].astype(f32), params["ln3_b"].astype(f32),
    ], axis=0)                                                              # (11, D)
    in_biases = jnp.stack(
        [sa_in_b, fold_q_scale_b(params["ca_in_b"].astype(f32))], axis=0)   # (2, 3D)
    ffn_b1 = params["ffn_b1"].astype(f32).reshape(1, -1)                    # (1, HID)

    weights = [sa_in_w, sa_out_w, ca_in_w, ca_out_w, ffn_w1, ffn_w2,
               in_biases, dvecs, ffn_b1]

    # Constant index maps: each weight slab is DMA'd into VMEM once and stays
    # resident across the grid; Buffered(1) drops the pointless second buffer.
    def w_spec(w):
        if single_buffer_weights:
            return pl.BlockSpec(w.shape, lambda b: (0, 0),
                                pipeline_mode=pl.Buffered(1))
        return pl.BlockSpec(w.shape, lambda b: (0, 0))

    # Explicit VMEM budget: single-buffered weights + double-buffered act slabs.
    def nbytes(a):
        return a.size * a.dtype.itemsize
    wmul = 1 if single_buffer_weights else 2
    act_bytes = 2 * block_b * (2 * Lq * D * ft.dtype.itemsize
                               + Lk * D * cross_ft.dtype.itemsize
                               + Lq * Lk * 4)
    need = wmul * sum(nbytes(w) for w in weights) + act_bytes
    vmem_limit = int(min(128 * 1024 * 1024, max(4 * need, 32 * 1024 * 1024)))

    # Contiguous 2D row slabs in/out (lane/sublane-dense loads & stores).
    ft2d = ft.reshape(B * Lq, D)
    cross2d = cross_ft.reshape(B * Lk, D)

    kernel = functools.partial(_gate_cross_attn_kernel, n_heads=n_heads,
                               bool_sa=bool_sa, bt=block_b, lq=Lq, lk=Lk)

    out2d, att2d = pl.pallas_call(
        kernel,
        out_shape=(jax.ShapeDtypeStruct((B * Lq, D), ft.dtype),
                   jax.ShapeDtypeStruct((B * Lq, Lk), jnp.float32)),
        grid_spec=pltpu.PrefetchScalarGridSpec(
            num_scalar_prefetch=0,
            grid=(grid_b,),
            in_specs=[
                pl.BlockSpec((block_b * Lk, D), lambda b: (b, 0)),   # cross_ft rows
                pl.BlockSpec((block_b * Lq, D), lambda b: (b, 0)),   # ft rows
            ] + [w_spec(w) for w in weights],
            out_specs=[
                pl.BlockSpec((block_b * Lq, D), lambda b: (b, 0)),
                pl.BlockSpec((block_b * Lq, Lk), lambda b: (b, 0)),
            ],
        ),
        compiler_params=pltpu.CompilerParams(
            dimension_semantics=("parallel",),   # batch-block axis -> megacore sharding
            vmem_limit_bytes=vmem_limit,
        ),
    )(cross2d, ft2d, *weights)

    return out2d.reshape(B, Lq, D), att2d.reshape(B, Lq, Lk)


# ------------------------------ plain-JAX reference --------------------------

_HI = jax.lax.Precision.HIGHEST


def _layer_norm_ref(x, w, b, eps=1e-5):
    mu = jnp.mean(x, axis=-1, keepdims=True)
    var = jnp.mean((x - mu) ** 2, axis=-1, keepdims=True)
    return (x - mu) / jnp.sqrt(var + eps) * w + b


def _mha_ref(q_in, kv_in, in_w, in_b, out_w, out_b, n_heads):
    B, Lq, D = q_in.shape
    Lk = kv_in.shape[1]
    dh = D // n_heads
    q = jnp.einsum("bld,ed->ble", q_in, in_w[:D], precision=_HI) + in_b[:D]
    k = jnp.einsum("bld,ed->ble", kv_in, in_w[D:2 * D], precision=_HI) + in_b[D:2 * D]
    v = jnp.einsum("bld,ed->ble", kv_in, in_w[2 * D:], precision=_HI) + in_b[2 * D:]
    q = q.reshape(B, Lq, n_heads, dh).transpose(0, 2, 1, 3)
    k = k.reshape(B, Lk, n_heads, dh).transpose(0, 2, 1, 3)
    v = v.reshape(B, Lk, n_heads, dh).transpose(0, 2, 1, 3)
    s = jnp.einsum("bhqd,bhkd->bhqk", q, k, precision=_HI) / math.sqrt(dh)
    p = jax.nn.softmax(s, axis=-1)
    o = jnp.einsum("bhqk,bhkd->bhqd", p, v, precision=_HI)
    o = o.transpose(0, 2, 1, 3).reshape(B, Lq, D)
    o = jnp.einsum("bld,ed->ble", o, out_w, precision=_HI) + out_b
    return o, p.mean(axis=1)


def gate_cross_attention_ref(cross_ft, ft, params, *, n_heads, bool_sa=True):
    x = ft
    if bool_sa:
        res = x
        sa, _ = _mha_ref(x, x, params["sa_in_w"], params["sa_in_b"],
                         params["sa_out_w"], params["sa_out_b"], n_heads)
        x = _layer_norm_ref(sa + res, params["sa_ln_w"], params["sa_ln_b"])
    original = x
    res = x
    ca, att_map = _mha_ref(x, cross_ft, params["ca_in_w"], params["ca_in_b"],
                           params["ca_out_w"], params["ca_out_b"], n_heads)
    x = _layer_norm_ref(ca + res, params["ln1_w"], params["ln1_b"])
    res = x
    h = jax.nn.relu(jnp.einsum("bld,ed->ble", x, params["ffn_w1"], precision=_HI)
                    + params["ffn_b1"])
    y = jnp.einsum("blh,eh->ble", h, params["ffn_w2"], precision=_HI) + params["ffn_b2"]
    x = _layer_norm_ref(y + res, params["ln2_w"], params["ln2_b"])
    res = x
    g = jnp.einsum("blc,blc->bl", x, original, precision=_HI)
    g = jax.nn.softmax(g, axis=-1)[..., None]
    x = _layer_norm_ref(x * g + res, params["ln3_w"], params["ln3_b"])
    return x, att_map


# ----------------------------------- main ------------------------------------

if __name__ == "__main__":
    B, Lq, Lk = 4, 8, 8          # batch, query seq (ft), key/value seq (cross_ft)
    D, HID, NH = 32, 64, 4       # dim_feature, dim_hidden, n_heads

    key = jax.random.PRNGKey(0)
    keys = list(jax.random.split(key, 32))
    ki = iter(keys)

    def uni(shape, fan_in):
        bound = 1.0 / math.sqrt(fan_in)
        return jax.random.uniform(next(ki), shape, jnp.float32, -bound, bound)

    def ln_w(shape):
        return 1.0 + 0.1 * jax.random.normal(next(ki), shape, jnp.float32)

    def ln_b(shape):
        return 0.1 * jax.random.normal(next(ki), shape, jnp.float32)

    params = {
        "sa_in_w": uni((3 * D, D), D), "sa_in_b": uni((3 * D,), D),
        "sa_out_w": uni((D, D), D), "sa_out_b": uni((D,), D),
        "sa_ln_w": ln_w((D,)), "sa_ln_b": ln_b((D,)),
        "ca_in_w": uni((3 * D, D), D), "ca_in_b": uni((3 * D,), D),
        "ca_out_w": uni((D, D), D), "ca_out_b": uni((D,), D),
        "ln1_w": ln_w((D,)), "ln1_b": ln_b((D,)),
        "ffn_w1": uni((HID, D), D), "ffn_b1": uni((HID,), D),
        "ffn_w2": uni((D, HID), HID), "ffn_b2": uni((D,), HID),
        "ln2_w": ln_w((D,)), "ln2_b": ln_b((D,)),
        "ln3_w": ln_w((D,)), "ln3_b": ln_b((D,)),
    }

    ft = jax.random.normal(next(ki), (B, Lq, D), jnp.float32)
    cross_ft = jax.random.normal(next(ki), (B, Lk, D), jnp.float32)

    try:
        out, att = gate_cross_attention_layer(cross_ft, ft, params,
                                              n_heads=NH, bool_sa=True)
        out, att = jax.block_until_ready((out, att))
    except Exception:
        # TODO(synk): pl.Buffered(1) single-buffered weight windows unavailable on
        # this jax build; rerun with default double-buffered weight BlockSpecs.
        out, att = gate_cross_attention_layer(cross_ft, ft, params, n_heads=NH,
                                              bool_sa=True,
                                              single_buffer_weights=False)
        out, att = jax.block_until_ready((out, att))

    ref_out, ref_att = gate_cross_attention_ref(cross_ft, ft, params,
                                                n_heads=NH, bool_sa=True)

    # Tolerance covers bf16 MXU operands + approx EUP reciprocals vs f32 XLA ref.
    err_out = float(jnp.max(jnp.abs(out - ref_out)))
    err_att = float(jnp.max(jnp.abs(att - ref_att)))
    if not jnp.allclose(out, ref_out, atol=5e-2, rtol=5e-2):
        raise AssertionError(f"ft output mismatch: max abs err {err_out}")
    if not jnp.allclose(att, ref_att, atol=2e-2, rtol=2e-2):
        raise AssertionError(f"att_map mismatch: max abs err {err_att}")

    print("KERNEL_OK")
</pallas_src>

<mosaic_0001>
module attributes {stable_mosaic.version = 11 : i64} {
  func.func @_gate_cross_attn_kernel(%arg0: i32, %arg1: memref<16x32xf32, #tpu.memory_space<vmem>>, %arg2: memref<16x32xf32, #tpu.memory_space<vmem>>, %arg3: memref<96x32xbf16, #tpu.memory_space<vmem>>, %arg4: memref<32x32xbf16, #tpu.memory_space<vmem>>, %arg5: memref<96x32xbf16, #tpu.memory_space<vmem>>, %arg6: memref<32x32xbf16, #tpu.memory_space<vmem>>, %arg7: memref<64x32xbf16, #tpu.memory_space<vmem>>, %arg8: memref<32x64xbf16, #tpu.memory_space<vmem>>, %arg9: memref<2x96xf32, #tpu.memory_space<vmem>>, %arg10: memref<11x32xf32, #tpu.memory_space<vmem>>, %arg11: memref<1x64xf32, #tpu.memory_space<vmem>>, %arg12: memref<16x32xf32, #tpu.memory_space<vmem>>, %arg13: memref<16x8xf32, #tpu.memory_space<vmem>>) attributes {dimension_semantics = [#tpu.dimension_semantics<parallel>], iteration_bounds = array<i64: 2>, scalar_prefetch = 0 : i64, scratch_operands = 0 : i64, tpu.core_type = #tpu.core_type<tc>, window_params = [{transform_indices = @transform_0, window_bounds = array<i64: 16, 32>}, {transform_indices = @transform_1, window_bounds = array<i64: 16, 32>}, {pipeline_mode = #tpu.pipeline_mode<synchronous>, transform_indices = @transform_2, window_bounds = array<i64: 96, 32>}, {pipeline_mode = #tpu.pipeline_mode<synchronous>, transform_indices = @transform_3, window_bounds = array<i64: 32, 32>}, {pipeline_mode = #tpu.pipeline_mode<synchronous>, transform_indices = @transform_4, window_bounds = array<i64: 96, 32>}, {pipeline_mode = #tpu.pipeline_mode<synchronous>, transform_indices = @transform_5, window_bounds = array<i64: 32, 32>}, {pipeline_mode = #tpu.pipeline_mode<synchronous>, transform_indices = @transform_6, window_bounds = array<i64: 64, 32>}, {pipeline_mode = #tpu.pipeline_mode<synchronous>, transform_indices = @transform_7, window_bounds = array<i64: 32, 64>}, {pipeline_mode = #tpu.pipeline_mode<synchronous>, transform_indices = @transform_8, window_bounds = array<i64: 2, 96>}, {pipeline_mode = #tpu.pipeline_mode<synchronous>, transform_indices = @transform_9, window_bounds = array<i64: 11, 32>}, {pipeline_mode = #tpu.pipeline_mode<synchronous>, transform_indices = @transform_10, window_bounds = array<i64: 1, 64>}, {transform_indices = @transform_11, window_bounds = array<i64: 16, 32>}, {transform_indices = @transform_12, window_bounds = array<i64: 16, 8>}]} {
    %c0 = arith.constant 0 : index
    %c0_0 = arith.constant 0 : index
    %0 = vector.load %arg2[%c0, %c0_0] : memref<16x32xf32, #tpu.memory_space<vmem>>, vector<16x32xf32>
    %c0_1 = arith.constant 0 : index
    %c0_2 = arith.constant 0 : index
    %1 = vector.load %arg1[%c0_1, %c0_2] : memref<16x32xf32, #tpu.memory_space<vmem>>, vector<16x32xf32>
    %c0_3 = arith.constant 0 : index
    %c0_4 = arith.constant 0 : index
    %2 = vector.load %arg10[%c0_3, %c0_4] : memref<11x32xf32, #tpu.memory_space<vmem>>, vector<11x32xf32>
    %c0_5 = arith.constant 0 : index
    %c0_6 = arith.constant 0 : index
    %3 = vector.load %arg9[%c0_5, %c0_6] : memref<2x96xf32, #tpu.memory_space<vmem>>, vector<2x96xf32>
    %4 = vector.extract_strided_slice %3 {offsets = [0, 0], sizes = [1, 96], strides = [1, 1]} : vector<2x96xf32> to vector<1x96xf32>
    %5 = vector.extract_strided_slice %2 {offsets = [0, 0], sizes = [1, 32], strides = [1, 1]} : vector<11x32xf32> to vector<1x32xf32>
    %c0_7 = arith.constant 0 : index
    %c0_8 = arith.constant 0 : index
    %6 = vector.load %arg3[%c0_7, %c0_8] : memref<96x32xbf16, #tpu.memory_space<vmem>>, vector<96x32xbf16>
    %7 = vector.extract_strided_slice %6 {offsets = [0, 0], sizes = [32, 32], strides = [1, 1]} : vector<96x32xbf16> to vector<32x32xbf16>
    %8 = arith.truncf %0 : vector<16x32xf32> to vector<16x32xbf16>
    %cst = arith.constant dense<0.000000e+00> : vector<16x32xf32>
    %9 = tpu.matmul %8, %7, %cst {dimension_numbers = #tpu.dot_dimension_numbers<[1], [1], [0], [0], [0, 0, 1, 0], [], []>} : vector<16x32xbf16>, vector<32x32xbf16>, vector<16x32xf32> -> vector<16x32xf32>
    %10 = vector.extract_strided_slice %4 {offsets = [0, 0], sizes = [1, 32], strides = [1, 1]} : vector<1x96xf32> to vector<1x32xf32>
    %11 = vector.broadcast %10 : vector<1x32xf32> to vector<16x32xf32>
    %12 = arith.addf %9, %11 : vector<16x32xf32>
    %13 = vector.extract_strided_slice %6 {offsets = [32, 0], sizes = [32, 32], strides = [1, 1]} : vector<96x32xbf16> to vector<32x32xbf16>
    %14 = arith.truncf %0 : vector<16x32xf32> to vector<16x32xbf16>
    %cst_9 = arith.constant dense<0.000000e+00> : vector<16x32xf32>
    %15 = tpu.matmul %14, %13, %cst_9 {dimension_numbers = #tpu.dot_dimension_numbers<[1], [1], [0], [0], [0, 0, 1, 0], [], []>} : vector<16x32xbf16>, vector<32x32xbf16>, vector<16x32xf32> -> vector<16x32xf32>
    %16 = vector.extract_strided_slice %4 {offsets = [0, 32], sizes = [1, 32], strides = [1, 1]} : vector<1x96xf32> to vector<1x32xf32>
    %17 = vector.broadcast %16 : vector<1x32xf32> to vector<16x32xf32>
    %18 = arith.addf %15, %17 : vector<16x32xf32>
    %19 = vector.extract_strided_slice %6 {offsets = [64, 0], sizes = [32, 32], strides = [1, 1]} : vector<96x32xbf16> to vector<32x32xbf16>
    %20 = arith.truncf %0 : vector<16x32xf32> to vector<16x32xbf16>
    %cst_10 = arith.constant dense<0.000000e+00> : vector<16x32xf32>
    %21 = tpu.matmul %20, %19, %cst_10 {dimension_numbers = #tpu.dot_dimension_numbers<[1], [1], [0], [0], [0, 0, 1, 0], [], []>} : vector<16x32xbf16>, vector<32x32xbf16>, vector<16x32xf32> -> vector<16x32xf32>
    %22 = vector.extract_strided_slice %4 {offsets = [0, 64], sizes = [1, 32], strides = [1, 1]} : vector<1x96xf32> to vector<1x32xf32>
    %23 = vector.broadcast %22 : vector<1x32xf32> to vector<16x32xf32>
    %24 = arith.addf %21, %23 : vector<16x32xf32>
    %25 = vector.shape_cast %12 : vector<16x32xf32> to vector<2x8x32xf32>
    %26 = vector.shape_cast %18 : vector<16x32xf32> to vector<2x8x32xf32>
    %27 = vector.shape_cast %24 : vector<16x32xf32> to vector<2x8x32xf32>
    %28 = vector.extract_strided_slice %25 {offsets = [0, 0, 0], sizes = [2, 8, 8], strides = [1, 1, 1]} : vector<2x8x32xf32> to vector<2x8x8xf32>
    %29 = arith.truncf %28 : vector<2x8x8xf32> to vector<2x8x8xbf16>
    %30 = vector.extract_strided_slice %26 {offsets = [0, 0, 0], sizes = [2, 8, 8], strides = [1, 1, 1]} : vector<2x8x32xf32> to vector<2x8x8xf32>
    %31 = arith.truncf %30 : vector<2x8x8xf32> to vector<2x8x8xbf16>
    "tpu.trace_start"() <{level = 10 : i32, message = "bqc,bkc->bqk"}> : () -> ()
    %cst_11 = arith.constant dense<0.000000e+00> : vector<2x8x8xf32>
    %32 = tpu.matmul %29, %31, %cst_11 {dimension_numbers = #tpu.dot_dimension_numbers<[2], [2], [1], [1], [0, 0, 0, 1, 1, 1], [0], [0]>} : vector<2x8x8xbf16>, vector<2x8x8xbf16>, vector<2x8x8xf32> -> vector<2x8x8xf32>
    "tpu.trace_stop"() : () -> ()
    %cst_12 = arith.constant dense<0xFF800000> : vector<2x8xf32>
    %33 = vector.multi_reduction <maximumf>, %32, %cst_12 [2] : vector<2x8x8xf32> to vector<2x8xf32>
    %34 = vector.shape_cast %33 : vector<2x8xf32> to vector<2x8x1xf32>
    %35 = vector.broadcast %34 : vector<2x8x1xf32> to vector<2x8x8xf32>
    %36 = arith.subf %32, %35 : vector<2x8x8xf32>
    %37 = math.exp %36 : vector<2x8x8xf32>
    %cst_13 = arith.constant dense<0.000000e+00> : vector<2x8xf32>
    %38 = vector.multi_reduction <add>, %37, %cst_13 [2] : vector<2x8x8xf32> to vector<2x8xf32>
    %39 = vector.shape_cast %38 : vector<2x8xf32> to vector<2x8x1xf32>
    %40 = tpu.reciprocal %39 {approx = true} : vector<2x8x1xf32> -> vector<2x8x1xf32>
    %41 = vector.broadcast %40 : vector<2x8x1xf32> to vector<2x8x8xf32>
    %42 = arith.mulf %37, %41 : vector<2x8x8xf32>
    %43 = arith.truncf %42 : vector<2x8x8xf32> to vector<2x8x8xbf16>
    %44 = vector.extract_strided_slice %27 {offsets = [0, 0, 0], sizes = [2, 8, 8], strides = [1, 1, 1]} : vector<2x8x32xf32> to vector<2x8x8xf32>
    %45 = arith.truncf %44 : vector<2x8x8xf32> to vector<2x8x8xbf16>
    "tpu.trace_start"() <{level = 10 : i32, message = "bqk,bkc->bqc"}> : () -> ()
    %cst_14 = arith.constant dense<0.000000e+00> : vector<2x8x8xf32>
    %46 = tpu.matmul %43, %45, %cst_14 {dimension_numbers = #tpu.dot_dimension_numbers<[2], [1], [1], [2], [0, 0, 0, 1, 1, 2], [0], [0]>} : vector<2x8x8xbf16>, vector<2x8x8xbf16>, vector<2x8x8xf32> -> vector<2x8x8xf32>
    "tpu.trace_stop"() : () -> ()
    %47 = vector.shape_cast %46 : vector<2x8x8xf32> to vector<16x8xf32>
    %48 = vector.extract_strided_slice %25 {offsets = [0, 0, 8], sizes = [2, 8, 8], strides = [1, 1, 1]} : vector<2x8x32xf32> to vector<2x8x8xf32>
    %49 = arith.truncf %48 : vector<2x8x8xf32> to vector<2x8x8xbf16>
    %50 = vector.extract_strided_slice %26 {offsets = [0, 0, 8], sizes = [2, 8, 8], strides = [1, 1, 1]} : vector<2x8x32xf32> to vector<2x8x8xf32>
    %51 = arith.truncf %50 : vector<2x8x8xf32> to vector<2x8x8xbf16>
    "tpu.trace_start"() <{level = 10 : i32, message = "bqc,bkc->bqk"}> : () -> ()
    %cst_15 = arith.constant dense<0.000000e+00> : vector<2x8x8xf32>
    %52 = tpu.matmul %49, %51, %cst_15 {dimension_numbers = #tpu.dot_dimension_numbers<[2], [2], [1], [1], [0, 0, 0, 1, 1, 1], [0], [0]>} : vector<2x8x8xbf16>, vector<2x8x8xbf16>, vector<2x8x8xf32> -> vector<2x8x8xf32>
    "tpu.trace_stop"() : () -> ()
    %cst_16 = arith.constant dense<0xFF800000> : vector<2x8xf32>
    %53 = vector.multi_reduction <maximumf>, %52, %cst_16 [2] : vector<2x8x8xf32> to vector<2x8xf32>
    %54 = vector.shape_cast %53 : vector<2x8xf32> to vector<2x8x1xf32>
    %55 = vector.broadcast %54 : vector<2x8x1xf32> to vector<2x8x8xf32>
    %56 = arith.subf %52, %55 : vector<2x8x8xf32>
    %57 = math.exp %56 : vector<2x8x8xf32>
    %cst_17 = arith.constant dense<0.000000e+00> : vector<2x8xf32>
    %58 = vector.multi_reduction <add>, %57, %cst_17 [2] : vector<2x8x8xf32> to vector<2x8xf32>
    %59 = vector.shape_cast %58 : vector<2x8xf32> to vector<2x8x1xf32>
    %60 = tpu.reciprocal %59 {approx = true} : vector<2x8x1xf32> -> vector<2x8x1xf32>
    %61 = vector.broadcast %60 : vector<2x8x1xf32> to vector<2x8x8xf32>
    %62 = arith.mulf %57, %61 : vector<2x8x8xf32>
    %63 = arith.truncf %62 : vector<2x8x8xf32> to vector<2x8x8xbf16>
    %64 = vector.extract_strided_slice %27 {offsets = [0, 0, 8], sizes = [2, 8, 8], strides = [1, 1, 1]} : vector<2x8x32xf32> to vector<2x8x8xf32>
    %65 = arith.truncf %64 : vector<2x8x8xf32> to vector<2x8x8xbf16>
    "tpu.trace_start"() <{level = 10 : i32, message = "bqk,bkc->bqc"}> : () -> ()
    %cst_18 = arith.constant dense<0.000000e+00> : vector<2x8x8xf32>
    %66 = tpu.matmul %63, %65, %cst_18 {dimension_numbers = #tpu.dot_dimension_numbers<[2], [1], [1], [2], [0, 0, 0, 1, 1, 2], [0], [0]>} : vector<2x8x8xbf16>, vector<2x8x8xbf16>, vector<2x8x8xf32> -> vector<2x8x8xf32>
    "tpu.trace_stop"() : () -> ()
    %67 = vector.shape_cast %66 : vector<2x8x8xf32> to vector<16x8xf32>
    %68 = vector.extract_strided_slice %25 {offsets = [0, 0, 16], sizes = [2, 8, 8], strides = [1, 1, 1]} : vector<2x8x32xf32> to vector<2x8x8xf32>
    %69 = arith.truncf %68 : vector<2x8x8xf32> to vector<2x8x8xbf16>
    %70 = vector.extract_strided_slice %26 {offsets = [0, 0, 16], sizes = [2, 8, 8], strides = [1, 1, 1]} : vector<2x8x32xf32> to vector<2x8x8xf32>
    %71 = arith.truncf %70 : vector<2x8x8xf32> to vector<2x8x8xbf16>
    "tpu.trace_start"() <{level = 10 : i32, message = "bqc,bkc->bqk"}> : () -> ()
    %cst_19 = arith.constant dense<0.000000e+00> : vector<2x8x8xf32>
    %72 = tpu.matmul %69, %71, %cst_19 {dimension_numbers = #tpu.dot_dimension_numbers<[2], [2], [1], [1], [0, 0, 0, 1, 1, 1], [0], [0]>} : vector<2x8x8xbf16>, vector<2x8x8xbf16>, vector<2x8x8xf32> -> vector<2x8x8xf32>
    "tpu.trace_stop"() : () -> ()
    %cst_20 = arith.constant dense<0xFF800000> : vector<2x8xf32>
    %73 = vector.multi_reduction <maximumf>, %72, %cst_20 [2] : vector<2x8x8xf32> to vector<2x8xf32>
    %74 = vector.shape_cast %73 : vector<2x8xf32> to vector<2x8x1xf32>
    %75 = vector.broadcast %74 : vector<2x8x1xf32> to vector<2x8x8xf32>
    %76 = arith.subf %72, %75 : vector<2x8x8xf32>
    %77 = math.exp %76 : vector<2x8x8xf32>
    %cst_21 = arith.constant dense<0.000000e+00> : vector<2x8xf32>
    %78 = vector.multi_reduction <add>, %77, %cst_21 [2] : vector<2x8x8xf32> to vector<2x8xf32>
    %79 = vector.shape_cast %78 : vector<2x8xf32> to vector<2x8x1xf32>
    %80 = tpu.reciprocal %79 {approx = true} : vector<2x8x1xf32> -> vector<2x8x1xf32>
    %81 = vector.broadcast %80 : vector<2x8x1xf32> to vector<2x8x8xf32>
    %82 = arith.mulf %77, %81 : vector<2x8x8xf32>
    %83 = arith.truncf %82 : vector<2x8x8xf32> to vector<2x8x8xbf16>
    %84 = vector.extract_strided_slice %27 {offsets = [0, 0, 16], sizes = [2, 8, 8], strides = [1, 1, 1]} : vector<2x8x32xf32> to vector<2x8x8xf32>
    %85 = arith.truncf %84 : vector<2x8x8xf32> to vector<2x8x8xbf16>
    "tpu.trace_start"() <{level = 10 : i32, message = "bqk,bkc->bqc"}> : () -> ()
    %cst_22 = arith.constant dense<0.000000e+00> : vector<2x8x8xf32>
    %86 = tpu.matmul %83, %85, %cst_22 {dimension_numbers = #tpu.dot_dimension_numbers<[2], [1], [1], [2], [0, 0, 0, 1, 1, 2], [0], [0]>} : vector<2x8x8xbf16>, vector<2x8x8xbf16>, vector<2x8x8xf32> -> vector<2x8x8xf32>
    "tpu.trace_stop"() : () -> ()
    %87 = vector.shape_cast %86 : vector<2x8x8xf32> to vector<16x8xf32>
    %88 = vector.extract_strided_slice %25 {offsets = [0, 0, 24], sizes = [2, 8, 8], strides = [1, 1, 1]} : vector<2x8x32xf32> to vector<2x8x8xf32>
    %89 = arith.truncf %88 : vector<2x8x8xf32> to vector<2x8x8xbf16>
    %90 = vector.extract_strided_slice %26 {offsets = [0, 0, 24], sizes = [2, 8, 8], strides = [1, 1, 1]} : vector<2x8x32xf32> to vector<2x8x8xf32>
    %91 = arith.truncf %90 : vector<2x8x8xf32> to vector<2x8x8xbf16>
    "tpu.trace_start"() <{level = 10 : i32, message = "bqc,bkc->bqk"}> : () -> ()
    %cst_23 = arith.constant dense<0.000000e+00> : vector<2x8x8xf32>
    %92 = tpu.matmul %89, %91, %cst_23 {dimension_numbers = #tpu.dot_dimension_numbers<[2], [2], [1], [1], [0, 0, 0, 1, 1, 1], [0], [0]>} : vector<2x8x8xbf16>, vector<2x8x8xbf16>, vector<2x8x8xf32> -> vector<2x8x8xf32>
    "tpu.trace_stop"() : () -> ()
    %cst_24 = arith.constant dense<0xFF800000> : vector<2x8xf32>
    %93 = vector.multi_reduction <maximumf>, %92, %cst_24 [2] : vector<2x8x8xf32> to vector<2x8xf32>
    %94 = vector.shape_cast %93 : vector<2x8xf32> to vector<2x8x1xf32>
    %95 = vector.broadcast %94 : vector<2x8x1xf32> to vector<2x8x8xf32>
    %96 = arith.subf %92, %95 : vector<2x8x8xf32>
    %97 = math.exp %96 : vector<2x8x8xf32>
    %cst_25 = arith.constant dense<0.000000e+00> : vector<2x8xf32>
    %98 = vector.multi_reduction <add>, %97, %cst_25 [2] : vector<2x8x8xf32> to vector<2x8xf32>
    %99 = vector.shape_cast %98 : vector<2x8xf32> to vector<2x8x1xf32>
    %100 = tpu.reciprocal %99 {approx = true} : vector<2x8x1xf32> -> vector<2x8x1xf32>
    %101 = vector.broadcast %100 : vector<2x8x1xf32> to vector<2x8x8xf32>
    %102 = arith.mulf %97, %101 : vector<2x8x8xf32>
    %103 = arith.truncf %102 : vector<2x8x8xf32> to vector<2x8x8xbf16>
    %104 = vector.extract_strided_slice %27 {offsets = [0, 0, 24], sizes = [2, 8, 8], strides = [1, 1, 1]} : vector<2x8x32xf32> to vector<2x8x8xf32>
    %105 = arith.truncf %104 : vector<2x8x8xf32> to vector<2x8x8xbf16>
    "tpu.trace_start"() <{level = 10 : i32, message = "bqk,bkc->bqc"}> : () -> ()
    %cst_26 = arith.constant dense<0.000000e+00> : vector<2x8x8xf32>
    %106 = tpu.matmul %103, %105, %cst_26 {dimension_numbers = #tpu.dot_dimension_numbers<[2], [1], [1], [2], [0, 0, 0, 1, 1, 2], [0], [0]>} : vector<2x8x8xbf16>, vector<2x8x8xbf16>, vector<2x8x8xf32> -> vector<2x8x8xf32>
    "tpu.trace_stop"() : () -> ()
    %107 = vector.shape_cast %106 : vector<2x8x8xf32> to vector<16x8xf32>
    %108 = tpu.concatenate %47, %67, %87, %107 in 1 : vector<16x8xf32>, vector<16x8xf32>, vector<16x8xf32>, vector<16x8xf32> -> vector<16x32xf32>
    %c0_27 = arith.constant 0 : index
    %c0_28 = arith.constant 0 : index
    %109 = vector.load %arg4[%c0_27, %c0_28] : memref<32x32xbf16, #tpu.memory_space<vmem>>, vector<32x32xbf16>
    %110 = arith.truncf %108 : vector<16x32xf32> to vector<16x32xbf16>
    %cst_29 = arith.constant dense<0.000000e+00> : vector<16x32xf32>
    %111 = tpu.matmul %110, %109, %cst_29 {dimension_numbers = #tpu.dot_dimension_numbers<[1], [1], [0], [0], [0, 0, 1, 0], [], []>} : vector<16x32xbf16>, vector<32x32xbf16>, vector<16x32xf32> -> vector<16x32xf32>
    %112 = vector.broadcast %5 : vector<1x32xf32> to vector<16x32xf32>
    %113 = arith.addf %111, %112 : vector<16x32xf32>
    %114 = arith.addf %113, %0 : vector<16x32xf32>
    %115 = vector.extract_strided_slice %2 {offsets = [1, 0], sizes = [1, 32], strides = [1, 1]} : vector<11x32xf32> to vector<1x32xf32>
    %116 = vector.extract_strided_slice %2 {offsets = [2, 0], sizes = [1, 32], strides = [1, 1]} : vector<11x32xf32> to vector<1x32xf32>
    %cst_30 = arith.constant dense<0.000000e+00> : vector<16xf32>
    %117 = vector.multi_reduction <add>, %114, %cst_30 [1] : vector<16x32xf32> to vector<16xf32>
    %118 = vector.shape_cast %117 : vector<16xf32> to vector<16x1xf32>
    %cst_31 = arith.constant 3.200000e+01 : f32
    %119 = vector.broadcast %cst_31 : f32 to vector<16x1xf32>
    %120 = arith.divf %118, %119 : vector<16x1xf32>
    %121 = vector.broadcast %120 : vector<16x1xf32> to vector<16x32xf32>
    %122 = arith.subf %114, %121 : vector<16x32xf32>
    %123 = arith.mulf %122, %122 : vector<16x32xf32>
    %cst_32 = arith.constant dense<0.000000e+00> : vector<16xf32>
    %124 = vector.multi_reduction <add>, %123, %cst_32 [1] : vector<16x32xf32> to vector<16xf32>
    %125 = vector.shape_cast %124 : vector<16xf32> to vector<16x1xf32>
    %cst_33 = arith.constant 3.200000e+01 : f32
    %126 = vector.broadcast %cst_33 : f32 to vector<16x1xf32>
    %127 = arith.divf %125, %126 : vector<16x1xf32>
    %cst_34 = arith.constant 9.99999974E-6 : f32
    %128 = vector.broadcast %cst_34 : f32 to vector<16x1xf32>
    %129 = arith.addf %127, %128 : vector<16x1xf32>
    %130 = math.rsqrt %129 : vector<16x1xf32>
    %131 = vector.broadcast %130 : vector<16x1xf32> to vector<16x32xf32>
    %132 = arith.mulf %122, %131 : vector<16x32xf32>
    %133 = vector.broadcast %115 : vector<1x32xf32> to vector<16x32xf32>
    %134 = arith.mulf %132, %133 : vector<16x32xf32>
    %135 = vector.broadcast %116 : vector<1x32xf32> to vector<16x32xf32>
    %136 = arith.addf %134, %135 : vector<16x32xf32>
    %137 = vector.extract_strided_slice %3 {offsets = [1, 0], sizes = [1, 96], strides = [1, 1]} : vector<2x96xf32> to vector<1x96xf32>
    %138 = vector.extract_strided_slice %2 {offsets = [3, 0], sizes = [1, 32], strides = [1, 1]} : vector<11x32xf32> to vector<1x32xf32>
    %c0_35 = arith.constant 0 : index
    %c0_36 = arith.constant 0 : index
    %139 = vector.load %arg5[%c0_35, %c0_36] : memref<96x32xbf16, #tpu.memory_space<vmem>>, vector<96x32xbf16>
    %140 = vector.extract_strided_slice %139 {offsets = [0, 0], sizes = [32, 32], strides = [1, 1]} : vector<96x32xbf16> to vector<32x32xbf16>
    %141 = arith.truncf %136 : vector<16x32xf32> to vector<16x32xbf16>
    %cst_37 = arith.constant dense<0.000000e+00> : vector<16x32xf32>
    %142 = tpu.matmul %141, %140, %cst_37 {dimension_numbers = #tpu.dot_dimension_numbers<[1], [1], [0], [0], [0, 0, 1, 0], [], []>} : vector<16x32xbf16>, vector<32x32xbf16>, vector<16x32xf32> -> vector<16x32xf32>
    %143 = vector.extract_strided_slice %137 {offsets = [0, 0], sizes = [1, 32], strides = [1, 1]} : vector<1x96xf32> to vector<1x32xf32>
    %144 = vector.broadcast %143 : vector<1x32xf32> to vector<16x32xf32>
    %145 = arith.addf %142, %144 : vector<16x32xf32>
    %146 = vector.extract_strided_slice %139 {offsets = [32, 0], sizes = [32, 32], strides = [1, 1]} : vector<96x32xbf16> to vector<32x32xbf16>
    %147 = arith.truncf %1 : vector<16x32xf32> to vector<16x32xbf16>
    %cst_38 = arith.constant dense<0.000000e+00> : vector<16x32xf32>
    %148 = tpu.matmul %147, %146, %cst_38 {dimension_numbers = #tpu.dot_dimension_numbers<[1], [1], [0], [0], [0, 0, 1, 0], [], []>} : vector<16x32xbf16>, vector<32x32xbf16>, vector<16x32xf32> -> vector<16x32xf32>
    %149 = vector.extract_strided_slice %137 {offsets = [0, 32], sizes = [1, 32], strides = [1, 1]} : vector<1x96xf32> to vector<1x32xf32>
    %150 = vector.broadcast %149 : vector<1x32xf32> to vector<16x32xf32>
    %151 = arith.addf %148, %150 : vector<16x32xf32>
    %152 = vector.extract_strided_slice %139 {offsets = [64, 0], sizes = [32, 32], strides = [1, 1]} : vector<96x32xbf16> to vector<32x32xbf16>
    %153 = arith.truncf %1 : vector<16x32xf32> to vector<16x32xbf16>
    %cst_39 = arith.constant dense<0.000000e+00> : vector<16x32xf32>
    %154 = tpu.matmul %153, %152, %cst_39 {dimension_numbers = #tpu.dot_dimension_numbers<[1], [1], [0], [0], [0, 0, 1, 0], [], []>} : vector<16x32xbf16>, vector<32x32xbf16>, vector<16x32xf32> -> vector<16x32xf32>
    %155 = vector.extract_strided_slice %137 {offsets = [0, 64], sizes = [1, 32], strides = [1, 1]} : vector<1x96xf32> to vector<1x32xf32>
    %156 = vector.broadcast %155 : vector<1x32xf32> to vector<16x32xf32>
    %157 = arith.addf %154, %156 : vector<16x32xf32>
    %158 = vector.shape_cast %145 : vector<16x32xf32> to vector<2x8x32xf32>
    %159 = vector.shape_cast %151 : vector<16x32xf32> to vector<2x8x32xf32>
    %160 = vector.shape_cast %157 : vector<16x32xf32> to vector<2x8x32xf32>
    %cst_40 = arith.constant 0.000000e+00 : f32
    %161 = vector.broadcast %cst_40 : f32 to vector<2x8x8xf32>
    %162 = vector.extract_strided_slice %158 {offsets = [0, 0, 0], sizes = [2, 8, 8], strides = [1, 1, 1]} : vector<2x8x32xf32> to vector<2x8x8xf32>
    %163 = arith.truncf %162 : vector<2x8x8xf32> to vector<2x8x8xbf16>
    %164 = vector.extract_strided_slice %159 {offsets = [0, 0, 0], sizes = [2, 8, 8], strides = [1, 1, 1]} : vector<2x8x32xf32> to vector<2x8x8xf32>
    %165 = arith.truncf %164 : vector<2x8x8xf32> to vector<2x8x8xbf16>
    "tpu.trace_start"() <{level = 10 : i32, message = "bqc,bkc->bqk"}> : () -> ()
    %cst_41 = arith.constant dense<0.000000e+00> : vector<2x8x8xf32>
    %166 = tpu.matmul %163, %165, %cst_41 {dimension_numbers = #tpu.dot_dimension_numbers<[2], [2], [1], [1], [0, 0, 0, 1, 1, 1], [0], [0]>} : vector<2x8x8xbf16>, vector<2x8x8xbf16>, vector<2x8x8xf32> -> vector<2x8x8xf32>
    "tpu.trace_stop"() : () -> ()
    %cst_42 = arith.constant dense<0xFF800000> : vector<2x8xf32>
    %167 = vector.multi_reduction <maximumf>, %166, %cst_42 [2] : vector<2x8x8xf32> to vector<2x8xf32>
    %168 = vector.shape_cast %167 : vector<2x8xf32> to vector<2x8x1xf32>
    %169 = vector.broadcast %168 : vector<2x8x1xf32> to vector<2x8x8xf32>
    %170 = arith.subf %166, %169 : vector<2x8x8xf32>
    %171 = math.exp %170 : vector<2x8x8xf32>
    %cst_43 = arith.constant dense<0.000000e+00> : vector<2x8xf32>
    %172 = vector.multi_reduction <add>, %171, %cst_43 [2] : vector<2x8x8xf32> to vector<2x8xf32>
    %173 = vector.shape_cast %172 : vector<2x8xf32> to vector<2x8x1xf32>
    %174 = tpu.reciprocal %173 {approx = true} : vector<2x8x1xf32> -> vector<2x8x1xf32>
    %175 = vector.broadcast %174 : vector<2x8x1xf32> to vector<2x8x8xf32>
    %176 = arith.mulf %171, %175 : vector<2x8x8xf32>
    %177 = arith.addf %161, %176 : vector<2x8x8xf32>
    %178 = arith.truncf %176 : vector<2x8x8xf32> to vector<2x8x8xbf16>
    %179 = vector.extract_strided_slice %160 {offsets = [0, 0, 0], sizes = [2, 8, 8], strides = [1, 1, 1]} : vector<2x8x32xf32> to vector<2x8x8xf32>
    %180 = arith.truncf %179 : vector<2x8x8xf32> to vector<2x8x8xbf16>
    "tpu.trace_start"() <{level = 10 : i32, message = "bqk,bkc->bqc"}> : () -> ()
    %cst_44 = arith.constant dense<0.000000e+00> : vector<2x8x8xf32>
    %181 = tpu.matmul %178, %180, %cst_44 {dimension_numbers = #tpu.dot_dimension_numbers<[2], [1], [1], [2], [0, 0, 0, 1, 1, 2], [0], [0]>} : vector<2x8x8xbf16>, vector<2x8x8xbf16>, vector<2x8x8xf32> -> vector<2x8x8xf32>
    "tpu.trace_stop"() : () -> ()
    %182 = vector.shape_cast %181 : vector<2x8x8xf32> to vector<16x8xf32>
    %183 = vector.extract_strided_slice %158 {offsets = [0, 0, 8], sizes = [2, 8, 8], strides = [1, 1, 1]} : vector<2x8x32xf32> to vector<2x8x8xf32>
    %184 = arith.truncf %183 : vector<2x8x8xf32> to vector<2x8x8xbf16>
    %185 = vector.extract_strided_slice %159 {offsets = [0, 0, 8], sizes = [2, 8, 8], strides = [1, 1, 1]} : vector<2x8x32xf32> to vector<2x8x8xf32>
    %186 = arith.truncf %185 : vector<2x8x8xf32> to vector<2x8x8xbf16>
    "tpu.trace_start"() <{level = 10 : i32, message = "bqc,bkc->bqk"}> : () -> ()
    %cst_45 = arith.constant dense<0.000000e+00> : vector<2x8x8xf32>
    %187 = tpu.matmul %184, %186, %cst_45 {dimension_numbers = #tpu.dot_dimension_numbers<[2], [2], [1], [1], [0, 0, 0, 1, 1, 1], [0], [0]>} : vector<2x8x8xbf16>, vector<2x8x8xbf16>, vector<2x8x8xf32> -> vector<2x8x8xf32>
    "tpu.trace_stop"() : () -> ()
    %cst_46 = arith.constant dense<0xFF800000> : vector<2x8xf32>
    %188 = vector.multi_reduction <maximumf>, %187, %cst_46 [2] : vector<2x8x8xf32> to vector<2x8xf32>
    %189 = vector.shape_cast %188 : vector<2x8xf32> to vector<2x8x1xf32>
    %190 = vector.broadcast %189 : vector<2x8x1xf32> to vector<2x8x8xf32>
    %191 = arith.subf %187, %190 : vector<2x8x8xf32>
    %192 = math.exp %191 : vector<2x8x8xf32>
    %cst_47 = arith.constant dense<0.000000e+00> : vector<2x8xf32>
    %193 = vector.multi_reduction <add>, %192, %cst_47 [2] : vector<2x8x8xf32> to vector<2x8xf32>
    %194 = vector.shape_cast %193 : vector<2x8xf32> to vector<2x8x1xf32>
    %195 = tpu.reciprocal %194 {approx = true} : vector<2x8x1xf32> -> vector<2x8x1xf32>
    %196 = vector.broadcast %195 : vector<2x8x1xf32> to vector<2x8x8xf32>
    %197 = arith.mulf %192, %196 : vector<2x8x8xf32>
    %198 = arith.addf %177, %197 : vector<2x8x8xf32>
    %199 = arith.truncf %197 : vector<2x8x8xf32> to vector<2x8x8xbf16>
    %200 = vector.extract_strided_slice %160 {offsets = [0, 0, 8], sizes = [2, 8, 8], strides = [1, 1, 1]} : vector<2x8x32xf32> to vector<2x8x8xf32>
    %201 = arith.truncf %200 : vector<2x8x8xf32> to vector<2x8x8xbf16>
    "tpu.trace_start"() <{level = 10 : i32, message = "bqk,bkc->bqc"}> : () -> ()
    %cst_48 = arith.constant dense<0.000000e+00> : vector<2x8x8xf32>
    %202 = tpu.matmul %199, %201, %cst_48 {dimension_numbers = #tpu.dot_dimension_numbers<[2], [1], [1], [2], [0, 0, 0, 1, 1, 2], [0], [0]>} : vector<2x8x8xbf16>, vector<2x8x8xbf16>, vector<2x8x8xf32> -> vector<2x8x8xf32>
    "tpu.trace_stop"() : () -> ()
    %203 = vector.shape_cast %202 : vector<2x8x8xf32> to vector<16x8xf32>
    %204 = vector.extract_strided_slice %158 {offsets = [0, 0, 16], sizes = [2, 8, 8], strides = [1, 1, 1]} : vector<2x8x32xf32> to vector<2x8x8xf32>
    %205 = arith.truncf %204 : vector<2x8x8xf32> to vector<2x8x8xbf16>
    %206 = vector.extract_strided_slice %159 {offsets = [0, 0, 16], sizes = [2, 8, 8], strides = [1, 1, 1]} : vector<2x8x32xf32> to vector<2x8x8xf32>
    %207 = arith.truncf %206 : vector<2x8x8xf32> to vector<2x8x8xbf16>
    "tpu.trace_start"() <{level = 10 : i32, message = "bqc,bkc->bqk"}> : () -> ()
    %cst_49 = arith.constant dense<0.000000e+00> : vector<2x8x8xf32>
    %208 = tpu.matmul %205, %207, %cst_49 {dimension_numbers = #tpu.dot_dimension_numbers<[2], [2], [1], [1], [0, 0, 0, 1, 1, 1], [0], [0]>} : vector<2x8x8xbf16>, vector<2x8x8xbf16>, vector<2x8x8xf32> -> vector<2x8x8xf32>
    "tpu.trace_stop"() : () -> ()
    %cst_50 = arith.constant dense<0xFF800000> : vector<2x8xf32>
    %209 = vector.multi_reduction <maximumf>, %208, %cst_50 [2] : vector<2x8x8xf32> to vector<2x8xf32>
    %210 = vector.shape_cast %209 : vector<2x8xf32> to vector<2x8x1xf32>
    %211 = vector.broadcast %210 : vector<2x8x1xf32> to vector<2x8x8xf32>
    %212 = arith.subf %208, %211 : vector<2x8x8xf32>
    %213 = math.exp %212 : vector<2x8x8xf32>
    %cst_51 = arith.constant dense<0.000000e+00> : vector<2x8xf32>
    %214 = vector.multi_reduction <add>, %213, %cst_51 [2] : vector<2x8x8xf32> to vector<2x8xf32>
    %215 = vector.shape_cast %214 : vector<2x8xf32> to vector<2x8x1xf32>
    %216 = tpu.reciprocal %215 {approx = true} : vector<2x8x1xf32> -> vector<2x8x1xf32>
    %217 = vector.broadcast %216 : vector<2x8x1xf32> to vector<2x8x8xf32>
    %218 = arith.mulf %213, %217 : vector<2x8x8xf32>
    %219 = arith.addf %198, %218 : vector<2x8x8xf32>
    %220 = arith.truncf %218 : vector<2x8x8xf32> to vector<2x8x8xbf16>
    %221 = vector.extract_strided_slice %160 {offsets = [0, 0, 16], sizes = [2, 8, 8], strides = [1, 1, 1]} : vector<2x8x32xf32> to vector<2x8x8xf32>
    %222 = arith.truncf %221 : vector<2x8x8xf32> to vector<2x8x8xbf16>
    "tpu.trace_start"() <{level = 10 : i32, message = "bqk,bkc->bqc"}> : () -> ()
    %cst_52 = arith.constant dense<0.000000e+00> : vector<2x8x8xf32>
    %223 = tpu.matmul %220, %222, %cst_52 {dimension_numbers = #tpu.dot_dimension_numbers<[2], [1], [1], [2], [0, 0, 0, 1, 1, 2], [0], [0]>} : vector<2x8x8xbf16>, vector<2x8x8xbf16>, vector<2x8x8xf32> -> vector<2x8x8xf32>
    "tpu.trace_stop"() : () -> ()
    %224 = vector.shape_cast %223 : vector<2x8x8xf32> to vector<16x8xf32>
    %225 = vector.extract_strided_slice %158 {offsets = [0, 0, 24], sizes = [2, 8, 8], strides = [1, 1, 1]} : vector<2x8x32xf32> to vector<2x8x8xf32>
    %226 = arith.truncf %225 : vector<2x8x8xf32> to vector<2x8x8xbf16>
    %227 = vector.extract_strided_slice %159 {offsets = [0, 0, 24], sizes = [2, 8, 8], strides = [1, 1, 1]} : vector<2x8x32xf32> to vector<2x8x8xf32>
    %228 = arith.truncf %227 : vector<2x8x8xf32> to vector<2x8x8xbf16>
    "tpu.trace_start"() <{level = 10 : i32, message = "bqc,bkc->bqk"}> : () -> ()
    %cst_53 = arith.constant dense<0.000000e+00> : vector<2x8x8xf32>
    %229 = tpu.matmul %226, %228, %cst_53 {dimension_numbers = #tpu.dot_dimension_numbers<[2], [2], [1], [1], [0, 0, 0, 1, 1, 1], [0], [0]>} : vector<2x8x8xbf16>, vector<2x8x8xbf16>, vector<2x8x8xf32> -> vector<2x8x8xf32>
    "tpu.trace_stop"() : () -> ()
    %cst_54 = arith.constant dense<0xFF800000> : vector<2x8xf32>
    %230 = vector.multi_reduction <maximumf>, %229, %cst_54 [2] : vector<2x8x8xf32> to vector<2x8xf32>
    %231 = vector.shape_cast %230 : vector<2x8xf32> to vector<2x8x1xf32>
    %232 = vector.broadcast %231 : vector<2x8x1xf32> to vector<2x8x8xf32>
    %233 = arith.subf %229, %232 : vector<2x8x8xf32>
    %234 = math.exp %233 : vector<2x8x8xf32>
    %cst_55 = arith.constant dense<0.000000e+00> : vector<2x8xf32>
    %235 = vector.multi_reduction <add>, %234, %cst_55 [2] : vector<2x8x8xf32> to vector<2x8xf32>
    %236 = vector.shape_cast %235 : vector<2x8xf32> to vector<2x8x1xf32>
    %237 = tpu.reciprocal %236 {approx = true} : vector<2x8x1xf32> -> vector<2x8x1xf32>
    %238 = vector.broadcast %237 : vector<2x8x1xf32> to vector<2x8x8xf32>
    %239 = arith.mulf %234, %238 : vector<2x8x8xf32>
    %240 = arith.addf %219, %239 : vector<2x8x8xf32>
    %241 = arith.truncf %239 : vector<2x8x8xf32> to vector<2x8x8xbf16>
    %242 = vector.extract_strided_slice %160 {offsets = [0, 0, 24], sizes = [2, 8, 8], strides = [1, 1, 1]} : vector<2x8x32xf32> to vector<2x8x8xf32>
    %243 = arith.truncf %242 : vector<2x8x8xf32> to vector<2x8x8xbf16>
    "tpu.trace_start"() <{level = 10 : i32, message = "bqk,bkc->bqc"}> : () -> ()
    %cst_56 = arith.constant dense<0.000000e+00> : vector<2x8x8xf32>
    %244 = tpu.matmul %241, %243, %cst_56 {dimension_numbers = #tpu.dot_dimension_numbers<[2], [1], [1], [2], [0, 0, 0, 1, 1, 2], [0], [0]>} : vector<2x8x8xbf16>, vector<2x8x8xbf16>, vector<2x8x8xf32> -> vector<2x8x8xf32>
    "tpu.trace_stop"() : () -> ()
    %245 = vector.shape_cast %244 : vector<2x8x8xf32> to vector<16x8xf32>
    %246 = tpu.concatenate %182, %203, %224, %245 in 1 : vector<16x8xf32>, vector<16x8xf32>, vector<16x8xf32>, vector<16x8xf32> -> vector<16x32xf32>
    %c0_57 = arith.constant 0 : index
    %c0_58 = arith.constant 0 : index
    %247 = vector.load %arg6[%c0_57, %c0_58] : memref<32x32xbf16, #tpu.memory_space<vmem>>, vector<32x32xbf16>
    %248 = arith.truncf %246 : vector<16x32xf32> to vector<16x32xbf16>
    %cst_59 = arith.constant dense<0.000000e+00> : vector<16x32xf32>
    %249 = tpu.matmul %248, %247, %cst_59 {dimension_numbers = #tpu.dot_dimension_numbers<[1], [1], [0], [0], [0, 0, 1, 0], [], []>} : vector<16x32xbf16>, vector<32x32xbf16>, vector<16x32xf32> -> vector<16x32xf32>
    %250 = vector.broadcast %138 : vector<1x32xf32> to vector<16x32xf32>
    %251 = arith.addf %249, %250 : vector<16x32xf32>
    %cst_60 = arith.constant 2.500000e-01 : f32
    %252 = vector.broadcast %cst_60 : f32 to vector<2x8x8xf32>
    %253 = arith.mulf %240, %252 : vector<2x8x8xf32>
    %254 = arith.addf %251, %136 : vector<16x32xf32>
    %255 = vector.extract_strided_slice %2 {offsets = [4, 0], sizes = [1, 32], strides = [1, 1]} : vector<11x32xf32> to vector<1x32xf32>
    %256 = vector.extract_strided_slice %2 {offsets = [5, 0], sizes = [1, 32], strides = [1, 1]} : vector<11x32xf32> to vector<1x32xf32>
    %cst_61 = arith.constant dense<0.000000e+00> : vector<16xf32>
    %257 = vector.multi_reduction <add>, %254, %cst_61 [1] : vector<16x32xf32> to vector<16xf32>
    %258 = vector.shape_cast %257 : vector<16xf32> to vector<16x1xf32>
    %cst_62 = arith.constant 3.200000e+01 : f32
    %259 = vector.broadcast %cst_62 : f32 to vector<16x1xf32>
    %260 = arith.divf %258, %259 : vector<16x1xf32>
    %261 = vector.broadcast %260 : vector<16x1xf32> to vector<16x32xf32>
    %262 = arith.subf %254, %261 : vector<16x32xf32>
    %263 = arith.mulf %262, %262 : vector<16x32xf32>
    %cst_63 = arith.constant dense<0.000000e+00> : vector<16xf32>
    %264 = vector.multi_reduction <add>, %263, %cst_63 [1] : vector<16x32xf32> to vector<16xf32>
    %265 = vector.shape_cast %264 : vector<16xf32> to vector<16x1xf32>
    %cst_64 = arith.constant 3.200000e+01 : f32
    %266 = vector.broadcast %cst_64 : f32 to vector<16x1xf32>
    %267 = arith.divf %265, %266 : vector<16x1xf32>
    %cst_65 = arith.constant 9.99999974E-6 : f32
    %268 = vector.broadcast %cst_65 : f32 to vector<16x1xf32>
    %269 = arith.addf %267, %268 : vector<16x1xf32>
    %270 = math.rsqrt %269 : vector<16x1xf32>
    %271 = vector.broadcast %270 : vector<16x1xf32> to vector<16x32xf32>
    %272 = arith.mulf %262, %271 : vector<16x32xf32>
    %273 = vector.broadcast %255 : vector<1x32xf32> to vector<16x32xf32>
    %274 = arith.mulf %272, %273 : vector<16x32xf32>
    %275 = vector.broadcast %256 : vector<1x32xf32> to vector<16x32xf32>
    %276 = arith.addf %274, %275 : vector<16x32xf32>
    %c0_66 = arith.constant 0 : index
    %c0_67 = arith.constant 0 : index
    %277 = vector.load %arg7[%c0_66, %c0_67] : memref<64x32xbf16, #tpu.memory_space<vmem>>, vector<64x32xbf16>
    %278 = arith.truncf %276 : vector<16x32xf32> to vector<16x32xbf16>
    %cst_68 = arith.constant dense<0.000000e+00> : vector<16x64xf32>
    %279 = tpu.matmul %278, %277, %cst_68 {dimension_numbers = #tpu.dot_dimension_numbers<[1], [1], [0], [0], [0, 0, 1, 0], [], []>} : vector<16x32xbf16>, vector<64x32xbf16>, vector<16x64xf32> -> vector<16x64xf32>
    %c0_69 = arith.constant 0 : index
    %c0_70 = arith.constant 0 : index
    %280 = vector.load %arg11[%c0_69, %c0_70] : memref<1x64xf32, #tpu.memory_space<vmem>>, vector<1x64xf32>
    %281 = vector.broadcast %280 : vector<1x64xf32> to vector<16x64xf32>
    %282 = arith.addf %279, %281 : vector<16x64xf32>
    %cst_71 = arith.constant 0.000000e+00 : f32
    %283 = vector.broadcast %cst_71 : f32 to vector<16x64xf32>
    %284 = arith.maximumf %282, %283 : vector<16x64xf32>
    %c0_72 = arith.constant 0 : index
    %c0_73 = arith.constant 0 : index
    %285 = vector.load %arg8[%c0_72, %c0_73] : memref<32x64xbf16, #tpu.memory_space<vmem>>, vector<32x64xbf16>
    %286 = arith.truncf %284 : vector<16x64xf32> to vector<16x64xbf16>
    %cst_74 = arith.constant dense<0.000000e+00> : vector<16x32xf32>
    %287 = tpu.matmul %286, %285, %cst_74 {dimension_numbers = #tpu.dot_dimension_numbers<[1], [1], [0], [0], [0, 0, 1, 0], [], []>} : vector<16x64xbf16>, vector<32x64xbf16>, vector<16x32xf32> -> vector<16x32xf32>
    %288 = vector.extract_strided_slice %2 {offsets = [6, 0], sizes = [1, 32], strides = [1, 1]} : vector<11x32xf32> to vector<1x32xf32>
    %289 = vector.broadcast %288 : vector<1x32xf32> to vector<16x32xf32>
    %290 = arith.addf %287, %289 : vector<16x32xf32>
    %291 = arith.addf %290, %276 : vector<16x32xf32>
    %292 = vector.extract_strided_slice %2 {offsets = [7, 0], sizes = [1, 32], strides = [1, 1]} : vector<11x32xf32> to vector<1x32xf32>
    %293 = vector.extract_strided_slice %2 {offsets = [8, 0], sizes = [1, 32], strides = [1, 1]} : vector<11x32xf32> to vector<1x32xf32>
    %cst_75 = arith.constant dense<0.000000e+00> : vector<16xf32>
    %294 = vector.multi_reduction <add>, %291, %cst_75 [1] : vector<16x32xf32> to vector<16xf32>
    %295 = vector.shape_cast %294 : vector<16xf32> to vector<16x1xf32>
    %cst_76 = arith.constant 3.200000e+01 : f32
    %296 = vector.broadcast %cst_76 : f32 to vector<16x1xf32>
    %297 = arith.divf %295, %296 : vector<16x1xf32>
    %298 = vector.broadcast %297 : vector<16x1xf32> to vector<16x32xf32>
    %299 = arith.subf %291, %298 : vector<16x32xf32>
    %300 = arith.mulf %299, %299 : vector<16x32xf32>
    %cst_77 = arith.constant dense<0.000000e+00> : vector<16xf32>
    %301 = vector.multi_reduction <add>, %300, %cst_77 [1] : vector<16x32xf32> to vector<16xf32>
    %302 = vector.shape_cast %301 : vector<16xf32> to vector<16x1xf32>
    %cst_78 = arith.constant 3.200000e+01 : f32
    %303 = vector.broadcast %cst_78 : f32 to vector<16x1xf32>
    %304 = arith.divf %302, %303 : vector<16x1xf32>
    %cst_79 = arith.constant 9.99999974E-6 : f32
    %305 = vector.broadcast %cst_79 : f32 to vector<16x1xf32>
    %306 = arith.addf %304, %305 : vector<16x1xf32>
    %307 = math.rsqrt %306 : vector<16x1xf32>
    %308 = vector.broadcast %307 : vector<16x1xf32> to vector<16x32xf32>
    %309 = arith.mulf %299, %308 : vector<16x32xf32>
    %310 = vector.broadcast %292 : vector<1x32xf32> to vector<16x32xf32>
    %311 = arith.mulf %309, %310 : vector<16x32xf32>
    %312 = vector.broadcast %293 : vector<1x32xf32> to vector<16x32xf32>
    %313 = arith.addf %311, %312 : vector<16x32xf32>
    %314 = vector.shape_cast %313 : vector<16x32xf32> to vector<2x8x32xf32>
    %315 = vector.shape_cast %136 : vector<16x32xf32> to vector<2x8x32xf32>
    %316 = arith.mulf %314, %315 : vector<2x8x32xf32>
    %cst_80 = arith.constant dense<0.000000e+00> : vector<2x8xf32>
    %317 = vector.multi_reduction <add>, %316, %cst_80 [2] : vector<2x8x32xf32> to vector<2x8xf32>
    %318 = vector.shape_cast %317 : vector<2x8xf32> to vector<2x8x1xf32>
    %cst_81 = arith.constant dense<0xFF800000> : vector<2x1xf32>
    %319 = vector.multi_reduction <maximumf>, %318, %cst_81 [1] : vector<2x8x1xf32> to vector<2x1xf32>
    %320 = vector.shape_cast %319 : vector<2x1xf32> to vector<2x1x1xf32>
    %321 = vector.broadcast %320 : vector<2x1x1xf32> to vector<2x8x1xf32>
    %322 = arith.subf %318, %321 : vector<2x8x1xf32>
    %323 = math.exp %322 : vector<2x8x1xf32>
    %cst_82 = arith.constant dense<0.000000e+00> : vector<2x1xf32>
    %324 = vector.multi_reduction <add>, %323, %cst_82 [1] : vector<2x8x1xf32> to vector<2x1xf32>
    %325 = vector.shape_cast %324 : vector<2x1xf32> to vector<2x1x1xf32>
    %326 = tpu.reciprocal %325 {approx = true} : vector<2x1x1xf32> -> vector<2x1x1xf32>
    %327 = vector.broadcast %326 : vector<2x1x1xf32> to vector<2x8x1xf32>
    %328 = arith.mulf %323, %327 : vector<2x8x1xf32>
    %329 = vector.broadcast %328 : vector<2x8x1xf32> to vector<2x8x32xf32>
    %330 = arith.mulf %314, %329 : vector<2x8x32xf32>
    %331 = vector.shape_cast %330 : vector<2x8x32xf32> to vector<16x32xf32>
    %332 = arith.addf %331, %313 : vector<16x32xf32>
    %333 = vector.extract_strided_slice %2 {offsets = [9, 0], sizes = [1, 32], strides = [1, 1]} : vector<11x32xf32> to vector<1x32xf32>
    %334 = vector.extract_strided_slice %2 {offsets = [10, 0], sizes = [1, 32], strides = [1, 1]} : vector<11x32xf32> to vector<1x32xf32>
    %cst_83 = arith.constant dense<0.000000e+00> : vector<16xf32>
    %335 = vector.multi_reduction <add>, %332, %cst_83 [1] : vector<16x32xf32> to vector<16xf32>
    %336 = vector.shape_cast %335 : vector<16xf32> to vector<16x1xf32>
    %cst_84 = arith.constant 3.200000e+01 : f32
    %337 = vector.broadcast %cst_84 : f32 to vector<16x1xf32>
    %338 = arith.divf %336, %337 : vector<16x1xf32>
    %339 = vector.broadcast %338 : vector<16x1xf32> to vector<16x32xf32>
    %340 = arith.subf %332, %339 : vector<16x32xf32>
    %341 = arith.mulf %340, %340 : vector<16x32xf32>
    %cst_85 = arith.constant dense<0.000000e+00> : vector<16xf32>
    %342 = vector.multi_reduction <add>, %341, %cst_85 [1] : vector<16x32xf32> to vector<16xf32>
    %343 = vector.shape_cast %342 : vector<16xf32> to vector<16x1xf32>
    %cst_86 = arith.constant 3.200000e+01 : f32
    %344 = vector.broadcast %cst_86 : f32 to vector<16x1xf32>
    %345 = arith.divf %343, %344 : vector<16x1xf32>
    %cst_87 = arith.constant 9.99999974E-6 : f32
    %346 = vector.broadcast %cst_87 : f32 to vector<16x1xf32>
    %347 = arith.addf %345, %346 : vector<16x1xf32>
    %348 = math.rsqrt %347 : vector<16x1xf32>
    %349 = vector.broadcast %348 : vector<16x1xf32> to vector<16x32xf32>
    %350 = arith.mulf %340, %349 : vector<16x32xf32>
    %351 = vector.broadcast %333 : vector<1x32xf32> to vector<16x32xf32>
    %352 = arith.mulf %350, %351 : vector<16x32xf32>
    %353 = vector.broadcast %334 : vector<1x32xf32> to vector<16x32xf32>
    %354 = arith.addf %352, %353 : vector<16x32xf32>
    %c0_88 = arith.constant 0 : index
    %c0_89 = arith.constant 0 : index
    %355 = vector.load %arg12[%c0_88, %c0_89] : memref<16x32xf32, #tpu.memory_space<vmem>>, vector<16x32xf32>
    tpu.vector_store %arg12[%c0_88, %c0_89], %354 {strides = array<i32>} : memref<16x32xf32, #tpu.memory_space<vmem>>, vector<16x32xf32>,
    %356 = vector.shape_cast %253 : vector<2x8x8xf32> to vector<16x8xf32>
    %c0_90 = arith.constant 0 : index
    %c0_91 = arith.constant 0 : index
    %357 = vector.load %arg13[%c0_90, %c0_91] : memref<16x8xf32, #tpu.memory_space<vmem>>, vector<16x8xf32>
    tpu.vector_store %arg13[%c0_90, %c0_91], %356 {strides = array<i32>} : memref<16x8xf32, #tpu.memory_space<vmem>>, vector<16x8xf32>,
    return
  }
  func.func @transform_0(%arg0: i32) -> (i32, i32) {
    %c0_i32 = arith.constant 0 : i32
    %c0_i32_0 = arith.constant 0 : i32
    return %arg0, %c0_i32 : i32, i32
  }
  func.func @transform_1(%arg0: i32) -> (i32, i32) {
    %c0_i32 = arith.constant 0 : i32
    %c0_i32_0 = arith.constant 0 : i32
    return %arg0, %c0_i32 : i32, i32
  }
  func.func @transform_2(%arg0: i32) -> (i32, i32) {
    %c0_i32 = arith.constant 0 : i32
    %c0_i32_0 = arith.constant 0 : i32
    %c0_i32_1 = arith.constant 0 : i32
    return %c0_i32, %c0_i32_0 : i32, i32
  }
  func.func @transform_3(%arg0: i32) -> (i32, i32) {
    %c0_i32 = arith.constant 0 : i32
    %c0_i32_0 = arith.constant 0 : i32
    %c0_i32_1 = arith.constant 0 : i32
    return %c0_i32, %c0_i32_0 : i32, i32
  }
  func.func @transform_4(%arg0: i32) -> (i32, i32) {
    %c0_i32 = arith.constant 0 : i32
    %c0_i32_0 = arith.constant 0 : i32
    %c0_i32_1 = arith.constant 0 : i32
    return %c0_i32, %c0_i32_0 : i32, i32
  }
  func.func @transform_5(%arg0: i32) -> (i32, i32) {
    %c0_i32 = arith.constant 0 : i32
    %c0_i32_0 = arith.constant 0 : i32
    %c0_i32_1 = arith.constant 0 : i32
    return %c0_i32, %c0_i32_0 : i32, i32
  }
  func.func @transform_6(%arg0: i32) -> (i32, i32) {
    %c0_i32 = arith.constant 0 : i32
    %c0_i32_0 = arith.constant 0 : i32
    %c0_i32_1 = arith.constant 0 : i32
    return %c0_i32, %c0_i32_0 : i32, i32
  }
  func.func @transform_7(%arg0: i32) -> (i32, i32) {
    %c0_i32 = arith.constant 0 : i32
    %c0_i32_0 = arith.constant 0 : i32
    %c0_i32_1 = arith.constant 0 : i32
    return %c0_i32, %c0_i32_0 : i32, i32
  }
  func.func @transform_8(%arg0: i32) -> (i32, i32) {
    %c0_i32 = arith.constant 0 : i32
    %c0_i32_0 = arith.constant 0 : i32
    %c0_i32_1 = arith.constant 0 : i32
    return %c0_i32, %c0_i32_0 : i32, i32
  }
  func.func @transform_9(%arg0: i32) -> (i32, i32) {
    %c0_i32 = arith.constant 0 : i32
    %c0_i32_0 = arith.constant 0 : i32
    %c0_i32_1 = arith.constant 0 : i32
    return %c0_i32, %c0_i32_0 : i32, i32
  }
  func.func @transform_10(%arg0: i32) -> (i32, i32) {
    %c0_i32 = arith.constant 0 : i32
    %c0_i32_0 = arith.constant 0 : i32
    %c0_i32_1 = arith.constant 0 : i32
    return %c0_i32, %c0_i32_0 : i32, i32
  }
  func.func @transform_11(%arg0: i32) -> (i32, i32) {
    %c0_i32 = arith.constant 0 : i32
    %c0_i32_0 = arith.constant 0 : i32
    return %arg0, %c0_i32 : i32, i32
  }
  func.func @transform_12(%arg0: i32) -> (i32, i32) {
    %c0_i32 = arith.constant 0 : i32
    %c0_i32_0 = arith.constant 0 : i32
    return %arg0, %c0_i32 : i32, i32
  }
}

module attributes {stable_mosaic.version = 11 : i64} {
  func.func @_gate_cross_attn_kernel(%arg0: i32, %arg1: memref<16x32xf32, #tpu.memory_space<vmem>>, %arg2: memref<16x32xf32, #tpu.memory_space<vmem>>, %arg3: memref<96x32xbf16, #tpu.memory_space<vmem>>, %arg4: memref<32x32xbf16, #tpu.memory_space<vmem>>, %arg5: memref<96x32xbf16, #tpu.memory_space<vmem>>, %arg6: memref<32x32xbf16, #tpu.memory_space<vmem>>, %arg7: memref<64x32xbf16, #tpu.memory_space<vmem>>, %arg8: memref<32x64xbf16, #tpu.memory_space<vmem>>, %arg9: memref<2x96xf32, #tpu.memory_space<vmem>>, %arg10: memref<11x32xf32, #tpu.memory_space<vmem>>, %arg11: memref<1x64xf32, #tpu.memory_space<vmem>>, %arg12: memref<16x32xf32, #tpu.memory_space<vmem>>, %arg13: memref<16x8xf32, #tpu.memory_space<vmem>>) attributes {dimension_semantics = [#tpu.dimension_semantics<parallel>], iteration_bounds = array<i64: 2>, scalar_prefetch = 0 : i64, scratch_operands = 0 : i64, tpu.core_type = #tpu.core_type<tc>, window_params = [{transform_indices = @transform_0, window_bounds = array<i64: 16, 32>}, {transform_indices = @transform_1, window_bounds = array<i64: 16, 32>}, {pipeline_mode = #tpu.pipeline_mode<synchronous>, transform_indices = @transform_2, window_bounds = array<i64: 96, 32>}, {pipeline_mode = #tpu.pipeline_mode<synchronous>, transform_indices = @transform_3, window_bounds = array<i64: 32, 32>}, {pipeline_mode = #tpu.pipeline_mode<synchronous>, transform_indices = @transform_4, window_bounds = array<i64: 96, 32>}, {pipeline_mode = #tpu.pipeline_mode<synchronous>, transform_indices = @transform_5, window_bounds = array<i64: 32, 32>}, {pipeline_mode = #tpu.pipeline_mode<synchronous>, transform_indices = @transform_6, window_bounds = array<i64: 64, 32>}, {pipeline_mode = #tpu.pipeline_mode<synchronous>, transform_indices = @transform_7, window_bounds = array<i64: 32, 64>}, {pipeline_mode = #tpu.pipeline_mode<synchronous>, transform_indices = @transform_8, window_bounds = array<i64: 2, 96>}, {pipeline_mode = #tpu.pipeline_mode<synchronous>, transform_indices = @transform_9, window_bounds = array<i64: 11, 32>}, {pipeline_mode = #tpu.pipeline_mode<synchronous>, transform_indices = @transform_10, window_bounds = array<i64: 1, 64>}, {transform_indices = @transform_11, window_bounds = array<i64: 16, 32>}, {transform_indices = @transform_12, window_bounds = array<i64: 16, 8>}]} {
    %c0 = arith.constant 0 : index
    %c0_0 = arith.constant 0 : index
    %0 = vector.load %arg2[%c0, %c0_0] : memref<16x32xf32, #tpu.memory_space<vmem>>, vector<16x32xf32>
    %c0_1 = arith.constant 0 : index
    %c0_2 = arith.constant 0 : index
    %1 = vector.load %arg1[%c0_1, %c0_2] : memref<16x32xf32, #tpu.memory_space<vmem>>, vector<16x32xf32>
    %c0_3 = arith.constant 0 : index
    %c0_4 = arith.constant 0 : index
    %2 = vector.load %arg10[%c0_3, %c0_4] : memref<11x32xf32, #tpu.memory_space<vmem>>, vector<11x32xf32>
    %c0_5 = arith.constant 0 : index
    %c0_6 = arith.constant 0 : index
    %3 = vector.load %arg9[%c0_5, %c0_6] : memref<2x96xf32, #tpu.memory_space<vmem>>, vector<2x96xf32>
    %4 = vector.extract_strided_slice %3 {offsets = [0, 0], sizes = [1, 96], strides = [1, 1]} : vector<2x96xf32> to vector<1x96xf32>
    %5 = vector.extract_strided_slice %2 {offsets = [0, 0], sizes = [1, 32], strides = [1, 1]} : vector<11x32xf32> to vector<1x32xf32>
    %c0_7 = arith.constant 0 : index
    %c0_8 = arith.constant 0 : index
    %6 = vector.load %arg3[%c0_7, %c0_8] : memref<96x32xbf16, #tpu.memory_space<vmem>>, vector<96x32xbf16>
    %7 = vector.extract_strided_slice %6 {offsets = [0, 0], sizes = [32, 32], strides = [1, 1]} : vector<96x32xbf16> to vector<32x32xbf16>
    %8 = arith.truncf %0 : vector<16x32xf32> to vector<16x32xbf16>
    %cst = arith.constant dense<0.000000e+00> : vector<16x32xf32>
    %9 = tpu.matmul %8, %7, %cst {dimension_numbers = #tpu.dot_dimension_numbers<[1], [1], [0], [0], [0, 0, 1, 0], [], []>} : vector<16x32xbf16>, vector<32x32xbf16>, vector<16x32xf32> -> vector<16x32xf32>
    %10 = vector.extract_strided_slice %4 {offsets = [0, 0], sizes = [1, 32], strides = [1, 1]} : vector<1x96xf32> to vector<1x32xf32>
    %11 = vector.broadcast %10 : vector<1x32xf32> to vector<16x32xf32>
    %12 = arith.addf %9, %11 : vector<16x32xf32>
    %13 = vector.extract_strided_slice %6 {offsets = [32, 0], sizes = [32, 32], strides = [1, 1]} : vector<96x32xbf16> to vector<32x32xbf16>
    %14 = arith.truncf %0 : vector<16x32xf32> to vector<16x32xbf16>
    %cst_9 = arith.constant dense<0.000000e+00> : vector<16x32xf32>
    %15 = tpu.matmul %14, %13, %cst_9 {dimension_numbers = #tpu.dot_dimension_numbers<[1], [1], [0], [0], [0, 0, 1, 0], [], []>} : vector<16x32xbf16>, vector<32x32xbf16>, vector<16x32xf32> -> vector<16x32xf32>
    %16 = vector.extract_strided_slice %4 {offsets = [0, 32], sizes = [1, 32], strides = [1, 1]} : vector<1x96xf32> to vector<1x32xf32>
    %17 = vector.broadcast %16 : vector<1x32xf32> to vector<16x32xf32>
    %18 = arith.addf %15, %17 : vector<16x32xf32>
    %19 = vector.extract_strided_slice %6 {offsets = [64, 0], sizes = [32, 32], strides = [1, 1]} : vector<96x32xbf16> to vector<32x32xbf16>
    %20 = arith.truncf %0 : vector<16x32xf32> to vector<16x32xbf16>
    %cst_10 = arith.constant dense<0.000000e+00> : vector<16x32xf32>
    %21 = tpu.matmul %20, %19, %cst_10 {dimension_numbers = #tpu.dot_dimension_numbers<[1], [1], [0], [0], [0, 0, 1, 0], [], []>} : vector<16x32xbf16>, vector<32x32xbf16>, vector<16x32xf32> -> vector<16x32xf32>
    %22 = vector.extract_strided_slice %4 {offsets = [0, 64], sizes = [1, 32], strides = [1, 1]} : vector<1x96xf32> to vector<1x32xf32>
    %23 = vector.broadcast %22 : vector<1x32xf32> to vector<16x32xf32>
    %24 = arith.addf %21, %23 : vector<16x32xf32>
    %25 = vector.shape_cast %12 : vector<16x32xf32> to vector<2x8x32xf32>
    %26 = vector.shape_cast %18 : vector<16x32xf32> to vector<2x8x32xf32>
    %27 = vector.shape_cast %24 : vector<16x32xf32> to vector<2x8x32xf32>
    %28 = vector.extract_strided_slice %25 {offsets = [0, 0, 0], sizes = [2, 8, 8], strides = [1, 1, 1]} : vector<2x8x32xf32> to vector<2x8x8xf32>
    %29 = arith.truncf %28 : vector<2x8x8xf32> to vector<2x8x8xbf16>
    %30 = vector.extract_strided_slice %26 {offsets = [0, 0, 0], sizes = [2, 8, 8], strides = [1, 1, 1]} : vector<2x8x32xf32> to vector<2x8x8xf32>
    %31 = arith.truncf %30 : vector<2x8x8xf32> to vector<2x8x8xbf16>
    "tpu.trace_start"() <{level = 10 : i32, message = "bqc,bkc->bqk"}> : () -> ()
    %cst_11 = arith.constant dense<0.000000e+00> : vector<2x8x8xf32>
    %32 = tpu.matmul %29, %31, %cst_11 {dimension_numbers = #tpu.dot_dimension_numbers<[2], [2], [1], [1], [0, 0, 0, 1, 1, 1], [0], [0]>} : vector<2x8x8xbf16>, vector<2x8x8xbf16>, vector<2x8x8xf32> -> vector<2x8x8xf32>
    "tpu.trace_stop"() : () -> ()
    %cst_12 = arith.constant dense<0xFF800000> : vector<2x8xf32>
    %33 = vector.multi_reduction <maximumf>, %32, %cst_12 [2] : vector<2x8x8xf32> to vector<2x8xf32>
    %34 = vector.shape_cast %33 : vector<2x8xf32> to vector<2x8x1xf32>
    %35 = vector.broadcast %34 : vector<2x8x1xf32> to vector<2x8x8xf32>
    %36 = arith.subf %32, %35 : vector<2x8x8xf32>
    %37 = math.exp %36 : vector<2x8x8xf32>
    %cst_13 = arith.constant dense<0.000000e+00> : vector<2x8xf32>
    %38 = vector.multi_reduction <add>, %37, %cst_13 [2] : vector<2x8x8xf32> to vector<2x8xf32>
    %39 = vector.shape_cast %38 : vector<2x8xf32> to vector<2x8x1xf32>
    %40 = tpu.reciprocal %39 {approx = true} : vector<2x8x1xf32> -> vector<2x8x1xf32>
    %41 = vector.broadcast %40 : vector<2x8x1xf32> to vector<2x8x8xf32>
    %42 = arith.mulf %37, %41 : vector<2x8x8xf32>
    %43 = arith.truncf %42 : vector<2x8x8xf32> to vector<2x8x8xbf16>
    %44 = vector.extract_strided_slice %27 {offsets = [0, 0, 0], sizes = [2, 8, 8], strides = [1, 1, 1]} : vector<2x8x32xf32> to vector<2x8x8xf32>
    %45 = arith.truncf %44 : vector<2x8x8xf32> to vector<2x8x8xbf16>
    "tpu.trace_start"() <{level = 10 : i32, message = "bqk,bkc->bqc"}> : () -> ()
    %cst_14 = arith.constant dense<0.000000e+00> : vector<2x8x8xf32>
    %46 = tpu.matmul %43, %45, %cst_14 {dimension_numbers = #tpu.dot_dimension_numbers<[2], [1], [1], [2], [0, 0, 0, 1, 1, 2], [0], [0]>} : vector<2x8x8xbf16>, vector<2x8x8xbf16>, vector<2x8x8xf32> -> vector<2x8x8xf32>
    "tpu.trace_stop"() : () -> ()
    %47 = vector.shape_cast %46 : vector<2x8x8xf32> to vector<16x8xf32>
    %48 = vector.extract_strided_slice %25 {offsets = [0, 0, 8], sizes = [2, 8, 8], strides = [1, 1, 1]} : vector<2x8x32xf32> to vector<2x8x8xf32>
    %49 = arith.truncf %48 : vector<2x8x8xf32> to vector<2x8x8xbf16>
    %50 = vector.extract_strided_slice %26 {offsets = [0, 0, 8], sizes = [2, 8, 8], strides = [1, 1, 1]} : vector<2x8x32xf32> to vector<2x8x8xf32>
    %51 = arith.truncf %50 : vector<2x8x8xf32> to vector<2x8x8xbf16>
    "tpu.trace_start"() <{level = 10 : i32, message = "bqc,bkc->bqk"}> : () -> ()
    %cst_15 = arith.constant dense<0.000000e+00> : vector<2x8x8xf32>
    %52 = tpu.matmul %49, %51, %cst_15 {dimension_numbers = #tpu.dot_dimension_numbers<[2], [2], [1], [1], [0, 0, 0, 1, 1, 1], [0], [0]>} : vector<2x8x8xbf16>, vector<2x8x8xbf16>, vector<2x8x8xf32> -> vector<2x8x8xf32>
    "tpu.trace_stop"() : () -> ()
    %cst_16 = arith.constant dense<0xFF800000> : vector<2x8xf32>
    %53 = vector.multi_reduction <maximumf>, %52, %cst_16 [2] : vector<2x8x8xf32> to vector<2x8xf32>
    %54 = vector.shape_cast %53 : vector<2x8xf32> to vector<2x8x1xf32>
    %55 = vector.broadcast %54 : vector<2x8x1xf32> to vector<2x8x8xf32>
    %56 = arith.subf %52, %55 : vector<2x8x8xf32>
    %57 = math.exp %56 : vector<2x8x8xf32>
    %cst_17 = arith.constant dense<0.000000e+00> : vector<2x8xf32>
    %58 = vector.multi_reduction <add>, %57, %cst_17 [2] : vector<2x8x8xf32> to vector<2x8xf32>
    %59 = vector.shape_cast %58 : vector<2x8xf32> to vector<2x8x1xf32>
    %60 = tpu.reciprocal %59 {approx = true} : vector<2x8x1xf32> -> vector<2x8x1xf32>
    %61 = vector.broadcast %60 : vector<2x8x1xf32> to vector<2x8x8xf32>
    %62 = arith.mulf %57, %61 : vector<2x8x8xf32>
    %63 = arith.truncf %62 : vector<2x8x8xf32> to vector<2x8x8xbf16>
    %64 = vector.extract_strided_slice %27 {offsets = [0, 0, 8], sizes = [2, 8, 8], strides = [1, 1, 1]} : vector<2x8x32xf32> to vector<2x8x8xf32>
    %65 = arith.truncf %64 : vector<2x8x8xf32> to vector<2x8x8xbf16>
    "tpu.trace_start"() <{level = 10 : i32, message = "bqk,bkc->bqc"}> : () -> ()
    %cst_18 = arith.constant dense<0.000000e+00> : vector<2x8x8xf32>
    %66 = tpu.matmul %63, %65, %cst_18 {dimension_numbers = #tpu.dot_dimension_numbers<[2], [1], [1], [2], [0, 0, 0, 1, 1, 2], [0], [0]>} : vector<2x8x8xbf16>, vector<2x8x8xbf16>, vector<2x8x8xf32> -> vector<2x8x8xf32>
    "tpu.trace_stop"() : () -> ()
    %67 = vector.shape_cast %66 : vector<2x8x8xf32> to vector<16x8xf32>
    %68 = vector.extract_strided_slice %25 {offsets = [0, 0, 16], sizes = [2, 8, 8], strides = [1, 1, 1]} : vector<2x8x32xf32> to vector<2x8x8xf32>
    %69 = arith.truncf %68 : vector<2x8x8xf32> to vector<2x8x8xbf16>
    %70 = vector.extract_strided_slice %26 {offsets = [0, 0, 16], sizes = [2, 8, 8], strides = [1, 1, 1]} : vector<2x8x32xf32> to vector<2x8x8xf32>
    %71 = arith.truncf %70 : vector<2x8x8xf32> to vector<2x8x8xbf16>
    "tpu.trace_start"() <{level = 10 : i32, message = "bqc,bkc->bqk"}> : () -> ()
    %cst_19 = arith.constant dense<0.000000e+00> : vector<2x8x8xf32>
    %72 = tpu.matmul %69, %71, %cst_19 {dimension_numbers = #tpu.dot_dimension_numbers<[2], [2], [1], [1], [0, 0, 0, 1, 1, 1], [0], [0]>} : vector<2x8x8xbf16>, vector<2x8x8xbf16>, vector<2x8x8xf32> -> vector<2x8x8xf32>
    "tpu.trace_stop"() : () -> ()
    %cst_20 = arith.constant dense<0xFF800000> : vector<2x8xf32>
    %73 = vector.multi_reduction <maximumf>, %72, %cst_20 [2] : vector<2x8x8xf32> to vector<2x8xf32>
    %74 = vector.shape_cast %73 : vector<2x8xf32> to vector<2x8x1xf32>
    %75 = vector.broadcast %74 : vector<2x8x1xf32> to vector<2x8x8xf32>
    %76 = arith.subf %72, %75 : vector<2x8x8xf32>
    %77 = math.exp %76 : vector<2x8x8xf32>
    %cst_21 = arith.constant dense<0.000000e+00> : vector<2x8xf32>
    %78 = vector.multi_reduction <add>, %77, %cst_21 [2] : vector<2x8x8xf32> to vector<2x8xf32>
    %79 = vector.shape_cast %78 : vector<2x8xf32> to vector<2x8x1xf32>
    %80 = tpu.reciprocal %79 {approx = true} : vector<2x8x1xf32> -> vector<2x8x1xf32>
    %81 = vector.broadcast %80 : vector<2x8x1xf32> to vector<2x8x8xf32>
    %82 = arith.mulf %77, %81 : vector<2x8x8xf32>
    %83 = arith.truncf %82 : vector<2x8x8xf32> to vector<2x8x8xbf16>
    %84 = vector.extract_strided_slice %27 {offsets = [0, 0, 16], sizes = [2, 8, 8], strides = [1, 1, 1]} : vector<2x8x32xf32> to vector<2x8x8xf32>
    %85 = arith.truncf %84 : vector<2x8x8xf32> to vector<2x8x8xbf16>
    "tpu.trace_start"() <{level = 10 : i32, message = "bqk,bkc->bqc"}> : () -> ()
    %cst_22 = arith.constant dense<0.000000e+00> : vector<2x8x8xf32>
    %86 = tpu.matmul %83, %85, %cst_22 {dimension_numbers = #tpu.dot_dimension_numbers<[2], [1], [1], [2], [0, 0, 0, 1, 1, 2], [0], [0]>} : vector<2x8x8xbf16>, vector<2x8x8xbf16>, vector<2x8x8xf32> -> vector<2x8x8xf32>
    "tpu.trace_stop"() : () -> ()
    %87 = vector.shape_cast %86 : vector<2x8x8xf32> to vector<16x8xf32>
    %88 = vector.extract_strided_slice %25 {offsets = [0, 0, 24], sizes = [2, 8, 8], strides = [1, 1, 1]} : vector<2x8x32xf32> to vector<2x8x8xf32>
    %89 = arith.truncf %88 : vector<2x8x8xf32> to vector<2x8x8xbf16>
    %90 = vector.extract_strided_slice %26 {offsets = [0, 0, 24], sizes = [2, 8, 8], strides = [1, 1, 1]} : vector<2x8x32xf32> to vector<2x8x8xf32>
    %91 = arith.truncf %90 : vector<2x8x8xf32> to vector<2x8x8xbf16>
    "tpu.trace_start"() <{level = 10 : i32, message = "bqc,bkc->bqk"}> : () -> ()
    %cst_23 = arith.constant dense<0.000000e+00> : vector<2x8x8xf32>
    %92 = tpu.matmul %89, %91, %cst_23 {dimension_numbers = #tpu.dot_dimension_numbers<[2], [2], [1], [1], [0, 0, 0, 1, 1, 1], [0], [0]>} : vector<2x8x8xbf16>, vector<2x8x8xbf16>, vector<2x8x8xf32> -> vector<2x8x8xf32>
    "tpu.trace_stop"() : () -> ()
    %cst_24 = arith.constant dense<0xFF800000> : vector<2x8xf32>
    %93 = vector.multi_reduction <maximumf>, %92, %cst_24 [2] : vector<2x8x8xf32> to vector<2x8xf32>
    %94 = vector.shape_cast %93 : vector<2x8xf32> to vector<2x8x1xf32>
    %95 = vector.broadcast %94 : vector<2x8x1xf32> to vector<2x8x8xf32>
    %96 = arith.subf %92, %95 : vector<2x8x8xf32>
    %97 = math.exp %96 : vector<2x8x8xf32>
    %cst_25 = arith.constant dense<0.000000e+00> : vector<2x8xf32>
    %98 = vector.multi_reduction <add>, %97, %cst_25 [2] : vector<2x8x8xf32> to vector<2x8xf32>
    %99 = vector.shape_cast %98 : vector<2x8xf32> to vector<2x8x1xf32>
    %100 = tpu.reciprocal %99 {approx = true} : vector<2x8x1xf32> -> vector<2x8x1xf32>
    %101 = vector.broadcast %100 : vector<2x8x1xf32> to vector<2x8x8xf32>
    %102 = arith.mulf %97, %101 : vector<2x8x8xf32>
    %103 = arith.truncf %102 : vector<2x8x8xf32> to vector<2x8x8xbf16>
    %104 = vector.extract_strided_slice %27 {offsets = [0, 0, 24], sizes = [2, 8, 8], strides = [1, 1, 1]} : vector<2x8x32xf32> to vector<2x8x8xf32>
    %105 = arith.truncf %104 : vector<2x8x8xf32> to vector<2x8x8xbf16>
    "tpu.trace_start"() <{level = 10 : i32, message = "bqk,bkc->bqc"}> : () -> ()
    %cst_26 = arith.constant dense<0.000000e+00> : vector<2x8x8xf32>
    %106 = tpu.matmul %103, %105, %cst_26 {dimension_numbers = #tpu.dot_dimension_numbers<[2], [1], [1], [2], [0, 0, 0, 1, 1, 2], [0], [0]>} : vector<2x8x8xbf16>, vector<2x8x8xbf16>, vector<2x8x8xf32> -> vector<2x8x8xf32>
    "tpu.trace_stop"() : () -> ()
    %107 = vector.shape_cast %106 : vector<2x8x8xf32> to vector<16x8xf32>
    %108 = tpu.concatenate %47, %67, %87, %107 in 1 : vector<16x8xf32>, vector<16x8xf32>, vector<16x8xf32>, vector<16x8xf32> -> vector<16x32xf32>
    %c0_27 = arith.constant 0 : index
    %c0_28 = arith.constant 0 : index
    %109 = vector.load %arg4[%c0_27, %c0_28] : memref<32x32xbf16, #tpu.memory_space<vmem>>, vector<32x32xbf16>
    %110 = arith.truncf %108 : vector<16x32xf32> to vector<16x32xbf16>
    %cst_29 = arith.constant dense<0.000000e+00> : vector<16x32xf32>
    %111 = tpu.matmul %110, %109, %cst_29 {dimension_numbers = #tpu.dot_dimension_numbers<[1], [1], [0], [0], [0, 0, 1, 0], [], []>} : vector<16x32xbf16>, vector<32x32xbf16>, vector<16x32xf32> -> vector<16x32xf32>
    %112 = vector.broadcast %5 : vector<1x32xf32> to vector<16x32xf32>
    %113 = arith.addf %111, %112 : vector<16x32xf32>
    %114 = arith.addf %113, %0 : vector<16x32xf32>
    %115 = vector.extract_strided_slice %2 {offsets = [1, 0], sizes = [1, 32], strides = [1, 1]} : vector<11x32xf32> to vector<1x32xf32>
    %116 = vector.extract_strided_slice %2 {offsets = [2, 0], sizes = [1, 32], strides = [1, 1]} : vector<11x32xf32> to vector<1x32xf32>
    %cst_30 = arith.constant dense<0.000000e+00> : vector<16xf32>
    %117 = vector.multi_reduction <add>, %114, %cst_30 [1] : vector<16x32xf32> to vector<16xf32>
    %118 = vector.shape_cast %117 : vector<16xf32> to vector<16x1xf32>
    %cst_31 = arith.constant 3.200000e+01 : f32
    %119 = vector.broadcast %cst_31 : f32 to vector<16x1xf32>
    %120 = arith.divf %118, %119 : vector<16x1xf32>
    %121 = vector.broadcast %120 : vector<16x1xf32> to vector<16x32xf32>
    %122 = arith.subf %114, %121 : vector<16x32xf32>
    %123 = arith.mulf %122, %122 : vector<16x32xf32>
    %cst_32 = arith.constant dense<0.000000e+00> : vector<16xf32>
    %124 = vector.multi_reduction <add>, %123, %cst_32 [1] : vector<16x32xf32> to vector<16xf32>
    %125 = vector.shape_cast %124 : vector<16xf32> to vector<16x1xf32>
    %cst_33 = arith.constant 3.200000e+01 : f32
    %126 = vector.broadcast %cst_33 : f32 to vector<16x1xf32>
    %127 = arith.divf %125, %126 : vector<16x1xf32>
    %cst_34 = arith.constant 9.99999974E-6 : f32
    %128 = vector.broadcast %cst_34 : f32 to vector<16x1xf32>
    %129 = arith.addf %127, %128 : vector<16x1xf32>
    %130 = math.rsqrt %129 : vector<16x1xf32>
    %131 = vector.broadcast %130 : vector<16x1xf32> to vector<16x32xf32>
    %132 = arith.mulf %122, %131 : vector<16x32xf32>
    %133 = vector.broadcast %115 : vector<1x32xf32> to vector<16x32xf32>
    %134 = arith.mulf %132, %133 : vector<16x32xf32>
    %135 = vector.broadcast %116 : vector<1x32xf32> to vector<16x32xf32>
    %136 = arith.addf %134, %135 : vector<16x32xf32>
    %137 = vector.extract_strided_slice %3 {offsets = [1, 0], sizes = [1, 96], strides = [1, 1]} : vector<2x96xf32> to vector<1x96xf32>
    %138 = vector.extract_strided_slice %2 {offsets = [3, 0], sizes = [1, 32], strides = [1, 1]} : vector<11x32xf32> to vector<1x32xf32>
    %c0_35 = arith.constant 0 : index
    %c0_36 = arith.constant 0 : index
    %139 = vector.load %arg5[%c0_35, %c0_36] : memref<96x32xbf16, #tpu.memory_space<vmem>>, vector<96x32xbf16>
    %140 = vector.extract_strided_slice %139 {offsets = [0, 0], sizes = [32, 32], strides = [1, 1]} : vector<96x32xbf16> to vector<32x32xbf16>
    %141 = arith.truncf %136 : vector<16x32xf32> to vector<16x32xbf16>
    %cst_37 = arith.constant dense<0.000000e+00> : vector<16x32xf32>
    %142 = tpu.matmul %141, %140, %cst_37 {dimension_numbers = #tpu.dot_dimension_numbers<[1], [1], [0], [0], [0, 0, 1, 0], [], []>} : vector<16x32xbf16>, vector<32x32xbf16>, vector<16x32xf32> -> vector<16x32xf32>
    %143 = vector.extract_strided_slice %137 {offsets = [0, 0], sizes = [1, 32], strides = [1, 1]} : vector<1x96xf32> to vector<1x32xf32>
    %144 = vector.broadcast %143 : vector<1x32xf32> to vector<16x32xf32>
    %145 = arith.addf %142, %144 : vector<16x32xf32>
    %146 = vector.extract_strided_slice %139 {offsets = [32, 0], sizes = [32, 32], strides = [1, 1]} : vector<96x32xbf16> to vector<32x32xbf16>
    %147 = arith.truncf %1 : vector<16x32xf32> to vector<16x32xbf16>
    %cst_38 = arith.constant dense<0.000000e+00> : vector<16x32xf32>
    %148 = tpu.matmul %147, %146, %cst_38 {dimension_numbers = #tpu.dot_dimension_numbers<[1], [1], [0], [0], [0, 0, 1, 0], [], []>} : vector<16x32xbf16>, vector<32x32xbf16>, vector<16x32xf32> -> vector<16x32xf32>
    %149 = vector.extract_strided_slice %137 {offsets = [0, 32], sizes = [1, 32], strides = [1, 1]} : vector<1x96xf32> to vector<1x32xf32>
    %150 = vector.broadcast %149 : vector<1x32xf32> to vector<16x32xf32>
    %151 = arith.addf %148, %150 : vector<16x32xf32>
    %152 = vector.extract_strided_slice %139 {offsets = [64, 0], sizes = [32, 32], strides = [1, 1]} : vector<96x32xbf16> to vector<32x32xbf16>
    %153 = arith.truncf %1 : vector<16x32xf32> to vector<16x32xbf16>
    %cst_39 = arith.constant dense<0.000000e+00> : vector<16x32xf32>
    %154 = tpu.matmul %153, %152, %cst_39 {dimension_numbers = #tpu.dot_dimension_numbers<[1], [1], [0], [0], [0, 0, 1, 0], [], []>} : vector<16x32xbf16>, vector<32x32xbf16>, vector<16x32xf32> -> vector<16x32xf32>
    %155 = vector.extract_strided_slice %137 {offsets = [0, 64], sizes = [1, 32], strides = [1, 1]} : vector<1x96xf32> to vector<1x32xf32>
    %156 = vector.broadcast %155 : vector<1x32xf32> to vector<16x32xf32>
    %157 = arith.addf %154, %156 : vector<16x32xf32>
    %158 = vector.shape_cast %145 : vector<16x32xf32> to vector<2x8x32xf32>
    %159 = vector.shape_cast %151 : vector<16x32xf32> to vector<2x8x32xf32>
    %160 = vector.shape_cast %157 : vector<16x32xf32> to vector<2x8x32xf32>
    %cst_40 = arith.constant 0.000000e+00 : f32
    %161 = vector.broadcast %cst_40 : f32 to vector<2x8x8xf32>
    %162 = vector.extract_strided_slice %158 {offsets = [0, 0, 0], sizes = [2, 8, 8], strides = [1, 1, 1]} : vector<2x8x32xf32> to vector<2x8x8xf32>
    %163 = arith.truncf %162 : vector<2x8x8xf32> to vector<2x8x8xbf16>
    %164 = vector.extract_strided_slice %159 {offsets = [0, 0, 0], sizes = [2, 8, 8], strides = [1, 1, 1]} : vector<2x8x32xf32> to vector<2x8x8xf32>
    %165 = arith.truncf %164 : vector<2x8x8xf32> to vector<2x8x8xbf16>
    "tpu.trace_start"() <{level = 10 : i32, message = "bqc,bkc->bqk"}> : () -> ()
    %cst_41 = arith.constant dense<0.000000e+00> : vector<2x8x8xf32>
    %166 = tpu.matmul %163, %165, %cst_41 {dimension_numbers = #tpu.dot_dimension_numbers<[2], [2], [1], [1], [0, 0, 0, 1, 1, 1], [0], [0]>} : vector<2x8x8xbf16>, vector<2x8x8xbf16>, vector<2x8x8xf32> -> vector<2x8x8xf32>
    "tpu.trace_stop"() : () -> ()
    %cst_42 = arith.constant dense<0xFF800000> : vector<2x8xf32>
    %167 = vector.multi_reduction <maximumf>, %166, %cst_42 [2] : vector<2x8x8xf32> to vector<2x8xf32>
    %168 = vector.shape_cast %167 : vector<2x8xf32> to vector<2x8x1xf32>
    %169 = vector.broadcast %168 : vector<2x8x1xf32> to vector<2x8x8xf32>
    %170 = arith.subf %166, %169 : vector<2x8x8xf32>
    %171 = math.exp %170 : vector<2x8x8xf32>
    %cst_43 = arith.constant dense<0.000000e+00> : vector<2x8xf32>
    %172 = vector.multi_reduction <add>, %171, %cst_43 [2] : vector<2x8x8xf32> to vector<2x8xf32>
    %173 = vector.shape_cast %172 : vector<2x8xf32> to vector<2x8x1xf32>
    %174 = tpu.reciprocal %173 {approx = true} : vector<2x8x1xf32> -> vector<2x8x1xf32>
    %175 = vector.broadcast %174 : vector<2x8x1xf32> to vector<2x8x8xf32>
    %176 = arith.mulf %171, %175 : vector<2x8x8xf32>
    %177 = arith.addf %161, %176 : vector<2x8x8xf32>
    %178 = arith.truncf %176 : vector<2x8x8xf32> to vector<2x8x8xbf16>
    %179 = vector.extract_strided_slice %160 {offsets = [0, 0, 0], sizes = [2, 8, 8], strides = [1, 1, 1]} : vector<2x8x32xf32> to vector<2x8x8xf32>
    %180 = arith.truncf %179 : vector<2x8x8xf32> to vector<2x8x8xbf16>
    "tpu.trace_start"() <{level = 10 : i32, message = "bqk,bkc->bqc"}> : () -> ()
    %cst_44 = arith.constant dense<0.000000e+00> : vector<2x8x8xf32>
    %181 = tpu.matmul %178, %180, %cst_44 {dimension_numbers = #tpu.dot_dimension_numbers<[2], [1], [1], [2], [0, 0, 0, 1, 1, 2], [0], [0]>} : vector<2x8x8xbf16>, vector<2x8x8xbf16>, vector<2x8x8xf32> -> vector<2x8x8xf32>
    "tpu.trace_stop"() : () -> ()
    %182 = vector.shape_cast %181 : vector<2x8x8xf32> to vector<16x8xf32>
    %183 = vector.extract_strided_slice %158 {offsets = [0, 0, 8], sizes = [2, 8, 8], strides = [1, 1, 1]} : vector<2x8x32xf32> to vector<2x8x8xf32>
    %184 = arith.truncf %183 : vector<2x8x8xf32> to vector<2x8x8xbf16>
    %185 = vector.extract_strided_slice %159 {offsets = [0, 0, 8], sizes = [2, 8, 8], strides = [1, 1, 1]} : vector<2x8x32xf32> to vector<2x8x8xf32>
    %186 = arith.truncf %185 : vector<2x8x8xf32> to vector<2x8x8xbf16>
    "tpu.trace_start"() <{level = 10 : i32, message = "bqc,bkc->bqk"}> : () -> ()
    %cst_45 = arith.constant dense<0.000000e+00> : vector<2x8x8xf32>
    %187 = tpu.matmul %184, %186, %cst_45 {dimension_numbers = #tpu.dot_dimension_numbers<[2], [2], [1], [1], [0, 0, 0, 1, 1, 1], [0], [0]>} : vector<2x8x8xbf16>, vector<2x8x8xbf16>, vector<2x8x8xf32> -> vector<2x8x8xf32>
    "tpu.trace_stop"() : () -> ()
    %cst_46 = arith.constant dense<0xFF800000> : vector<2x8xf32>
    %188 = vector.multi_reduction <maximumf>, %187, %cst_46 [2] : vector<2x8x8xf32> to vector<2x8xf32>
    %189 = vector.shape_cast %188 : vector<2x8xf32> to vector<2x8x1xf32>
    %190 = vector.broadcast %189 : vector<2x8x1xf32> to vector<2x8x8xf32>
    %191 = arith.subf %187, %190 : vector<2x8x8xf32>
    %192 = math.exp %191 : vector<2x8x8xf32>
    %cst_47 = arith.constant dense<0.000000e+00> : vector<2x8xf32>
    %193 = vector.multi_reduction <add>, %192, %cst_47 [2] : vector<2x8x8xf32> to vector<2x8xf32>
    %194 = vector.shape_cast %193 : vector<2x8xf32> to vector<2x8x1xf32>
    %195 = tpu.reciprocal %194 {approx = true} : vector<2x8x1xf32> -> vector<2x8x1xf32>
    %196 = vector.broadcast %195 : vector<2x8x1xf32> to vector<2x8x8xf32>
    %197 = arith.mulf %192, %196 : vector<2x8x8xf32>
    %198 = arith.addf %177, %197 : vector<2x8x8xf32>
    %199 = arith.truncf %197 : vector<2x8x8xf32> to vector<2x8x8xbf16>
    %200 = vector.extract_strided_slice %160 {offsets = [0, 0, 8], sizes = [2, 8, 8], strides = [1, 1, 1]} : vector<2x8x32xf32> to vector<2x8x8xf32>
    %201 = arith.truncf %200 : vector<2x8x8xf32> to vector<2x8x8xbf16>
    "tpu.trace_start"() <{level = 10 : i32, message = "bqk,bkc->bqc"}> : () -> ()
    %cst_48 = arith.constant dense<0.000000e+00> : vector<2x8x8xf32>
    %202 = tpu.matmul %199, %201, %cst_48 {dimension_numbers = #tpu.dot_dimension_numbers<[2], [1], [1], [2], [0, 0, 0, 1, 1, 2], [0], [0]>} : vector<2x8x8xbf16>, vector<2x8x8xbf16>, vector<2x8x8xf32> -> vector<2x8x8xf32>
    "tpu.trace_stop"() : () -> ()
    %203 = vector.shape_cast %202 : vector<2x8x8xf32> to vector<16x8xf32>
    %204 = vector.extract_strided_slice %158 {offsets = [0, 0, 16], sizes = [2, 8, 8], strides = [1, 1, 1]} : vector<2x8x32xf32> to vector<2x8x8xf32>
    %205 = arith.truncf %204 : vector<2x8x8xf32> to vector<2x8x8xbf16>
    %206 = vector.extract_strided_slice %159 {offsets = [0, 0, 16], sizes = [2, 8, 8], strides = [1, 1, 1]} : vector<2x8x32xf32> to vector<2x8x8xf32>
    %207 = arith.truncf %206 : vector<2x8x8xf32> to vector<2x8x8xbf16>
    "tpu.trace_start"() <{level = 10 : i32, message = "bqc,bkc->bqk"}> : () -> ()
    %cst_49 = arith.constant dense<0.000000e+00> : vector<2x8x8xf32>
    %208 = tpu.matmul %205, %207, %cst_49 {dimension_numbers = #tpu.dot_dimension_numbers<[2], [2], [1], [1], [0, 0, 0, 1, 1, 1], [0], [0]>} : vector<2x8x8xbf16>, vector<2x8x8xbf16>, vector<2x8x8xf32> -> vector<2x8x8xf32>
    "tpu.trace_stop"() : () -> ()
    %cst_50 = arith.constant dense<0xFF800000> : vector<2x8xf32>
    %209 = vector.multi_reduction <maximumf>, %208, %cst_50 [2] : vector<2x8x8xf32> to vector<2x8xf32>
    %210 = vector.shape_cast %209 : vector<2x8xf32> to vector<2x8x1xf32>
    %211 = vector.broadcast %210 : vector<2x8x1xf32> to vector<2x8x8xf32>
    %212 = arith.subf %208, %211 : vector<2x8x8xf32>
    %213 = math.exp %212 : vector<2x8x8xf32>
    %cst_51 = arith.constant dense<0.000000e+00> : vector<2x8xf32>
    %214 = vector.multi_reduction <add>, %213, %cst_51 [2] : vector<2x8x8xf32> to vector<2x8xf32>
    %215 = vector.shape_cast %214 : vector<2x8xf32> to vector<2x8x1xf32>
    %216 = tpu.reciprocal %215 {approx = true} : vector<2x8x1xf32> -> vector<2x8x1xf32>
    %217 = vector.broadcast %216 : vector<2x8x1xf32> to vector<2x8x8xf32>
    %218 = arith.mulf %213, %217 : vector<2x8x8xf32>
    %219 = arith.addf %198, %218 : vector<2x8x8xf32>
    %220 = arith.truncf %218 : vector<2x8x8xf32> to vector<2x8x8xbf16>
    %221 = vector.extract_strided_slice %160 {offsets = [0, 0, 16], sizes = [2, 8, 8], strides = [1, 1, 1]} : vector<2x8x32xf32> to vector<2x8x8xf32>
    %222 = arith.truncf %221 : vector<2x8x8xf32> to vector<2x8x8xbf16>
    "tpu.trace_start"() <{level = 10 : i32, message = "bqk,bkc->bqc"}> : () -> ()
    %cst_52 = arith.constant dense<0.000000e+00> : vector<2x8x8xf32>
    %223 = tpu.matmul %220, %222, %cst_52 {dimension_numbers = #tpu.dot_dimension_numbers<[2], [1], [1], [2], [0, 0, 0, 1, 1, 2], [0], [0]>} : vector<2x8x8xbf16>, vector<2x8x8xbf16>, vector<2x8x8xf32> -> vector<2x8x8xf32>
    "tpu.trace_stop"() : () -> ()
    %224 = vector.shape_cast %223 : vector<2x8x8xf32> to vector<16x8xf32>
    %225 = vector.extract_strided_slice %158 {offsets = [0, 0, 24], sizes = [2, 8, 8], strides = [1, 1, 1]} : vector<2x8x32xf32> to vector<2x8x8xf32>
    %226 = arith.truncf %225 : vector<2x8x8xf32> to vector<2x8x8xbf16>
    %227 = vector.extract_strided_slice %159 {offsets = [0, 0, 24], sizes = [2, 8, 8], strides = [1, 1, 1]} : vector<2x8x32xf32> to vector<2x8x8xf32>
    %228 = arith.truncf %227 : vector<2x8x8xf32> to vector<2x8x8xbf16>
    "tpu.trace_start"() <{level = 10 : i32, message = "bqc,bkc->bqk"}> : () -> ()
    %cst_53 = arith.constant dense<0.000000e+00> : vector<2x8x8xf32>
    %229 = tpu.matmul %226, %228, %cst_53 {dimension_numbers = #tpu.dot_dimension_numbers<[2], [2], [1], [1], [0, 0, 0, 1, 1, 1], [0], [0]>} : vector<2x8x8xbf16>, vector<2x8x8xbf16>, vector<2x8x8xf32> -> vector<2x8x8xf32>
    "tpu.trace_stop"() : () -> ()
    %cst_54 = arith.constant dense<0xFF800000> : vector<2x8xf32>
    %230 = vector.multi_reduction <maximumf>, %229, %cst_54 [2] : vector<2x8x8xf32> to vector<2x8xf32>
    %231 = vector.shape_cast %230 : vector<2x8xf32> to vector<2x8x1xf32>
    %232 = vector.broadcast %231 : vector<2x8x1xf32> to vector<2x8x8xf32>
    %233 = arith.subf %229, %232 : vector<2x8x8xf32>
    %234 = math.exp %233 : vector<2x8x8xf32>
    %cst_55 = arith.constant dense<0.000000e+00> : vector<2x8xf32>
    %235 = vector.multi_reduction <add>, %234, %cst_55 [2] : vector<2x8x8xf32> to vector<2x8xf32>
    %236 = vector.shape_cast %235 : vector<2x8xf32> to vector<2x8x1xf32>
    %237 = tpu.reciprocal %236 {approx = true} : vector<2x8x1xf32> -> vector<2x8x1xf32>
    %238 = vector.broadcast %237 : vector<2x8x1xf32> to vector<2x8x8xf32>
    %239 = arith.mulf %234, %238 : vector<2x8x8xf32>
    %240 = arith.addf %219, %239 : vector<2x8x8xf32>
    %241 = arith.truncf %239 : vector<2x8x8xf32> to vector<2x8x8xbf16>
    %242 = vector.extract_strided_slice %160 {offsets = [0, 0, 24], sizes = [2, 8, 8], strides = [1, 1, 1]} : vector<2x8x32xf32> to vector<2x8x8xf32>
    %243 = arith.truncf %242 : vector<2x8x8xf32> to vector<2x8x8xbf16>
    "tpu.trace_start"() <{level = 10 : i32, message = "bqk,bkc->bqc"}> : () -> ()
    %cst_56 = arith.constant dense<0.000000e+00> : vector<2x8x8xf32>
    %244 = tpu.matmul %241, %243, %cst_56 {dimension_numbers = #tpu.dot_dimension_numbers<[2], [1], [1], [2], [0, 0, 0, 1, 1, 2], [0], [0]>} : vector<2x8x8xbf16>, vector<2x8x8xbf16>, vector<2x8x8xf32> -> vector<2x8x8xf32>
    "tpu.trace_stop"() : () -> ()
    %245 = vector.shape_cast %244 : vector<2x8x8xf32> to vector<16x8xf32>
    %246 = tpu.concatenate %182, %203, %224, %245 in 1 : vector<16x8xf32>, vector<16x8xf32>, vector<16x8xf32>, vector<16x8xf32> -> vector<16x32xf32>
    %c0_57 = arith.constant 0 : index
    %c0_58 = arith.constant 0 : index
    %247 = vector.load %arg6[%c0_57, %c0_58] : memref<32x32xbf16, #tpu.memory_space<vmem>>, vector<32x32xbf16>
    %248 = arith.truncf %246 : vector<16x32xf32> to vector<16x32xbf16>
    %cst_59 = arith.constant dense<0.000000e+00> : vector<16x32xf32>
    %249 = tpu.matmul %248, %247, %cst_59 {dimension_numbers = #tpu.dot_dimension_numbers<[1], [1], [0], [0], [0, 0, 1, 0], [], []>} : vector<16x32xbf16>, vector<32x32xbf16>, vector<16x32xf32> -> vector<16x32xf32>
    %250 = vector.broadcast %138 : vector<1x32xf32> to vector<16x32xf32>
    %251 = arith.addf %249, %250 : vector<16x32xf32>
    %cst_60 = arith.constant 2.500000e-01 : f32
    %252 = vector.broadcast %cst_60 : f32 to vector<2x8x8xf32>
    %253 = arith.mulf %240, %252 : vector<2x8x8xf32>
    %254 = arith.addf %251, %136 : vector<16x32xf32>
    %255 = vector.extract_strided_slice %2 {offsets = [4, 0], sizes = [1, 32], strides = [1, 1]} : vector<11x32xf32> to vector<1x32xf32>
    %256 = vector.extract_strided_slice %2 {offsets = [5, 0], sizes = [1, 32], strides = [1, 1]} : vector<11x32xf32> to vector<1x32xf32>
    %cst_61 = arith.constant dense<0.000000e+00> : vector<16xf32>
    %257 = vector.multi_reduction <add>, %254, %cst_61 [1] : vector<16x32xf32> to vector<16xf32>
    %258 = vector.shape_cast %257 : vector<16xf32> to vector<16x1xf32>
    %cst_62 = arith.constant 3.200000e+01 : f32
    %259 = vector.broadcast %cst_62 : f32 to vector<16x1xf32>
    %260 = arith.divf %258, %259 : vector<16x1xf32>
    %261 = vector.broadcast %260 : vector<16x1xf32> to vector<16x32xf32>
    %262 = arith.subf %254, %261 : vector<16x32xf32>
    %263 = arith.mulf %262, %262 : vector<16x32xf32>
    %cst_63 = arith.constant dense<0.000000e+00> : vector<16xf32>
    %264 = vector.multi_reduction <add>, %263, %cst_63 [1] : vector<16x32xf32> to vector<16xf32>
    %265 = vector.shape_cast %264 : vector<16xf32> to vector<16x1xf32>
    %cst_64 = arith.constant 3.200000e+01 : f32
    %266 = vector.broadcast %cst_64 : f32 to vector<16x1xf32>
    %267 = arith.divf %265, %266 : vector<16x1xf32>
    %cst_65 = arith.constant 9.99999974E-6 : f32
    %268 = vector.broadcast %cst_65 : f32 to vector<16x1xf32>
    %269 = arith.addf %267, %268 : vector<16x1xf32>
    %270 = math.rsqrt %269 : vector<16x1xf32>
    %271 = vector.broadcast %270 : vector<16x1xf32> to vector<16x32xf32>
    %272 = arith.mulf %262, %271 : vector<16x32xf32>
    %273 = vector.broadcast %255 : vector<1x32xf32> to vector<16x32xf32>
    %274 = arith.mulf %272, %273 : vector<16x32xf32>
    %275 = vector.broadcast %256 : vector<1x32xf32> to vector<16x32xf32>
    %276 = arith.addf %274, %275 : vector<16x32xf32>
    %c0_66 = arith.constant 0 : index
    %c0_67 = arith.constant 0 : index
    %277 = vector.load %arg7[%c0_66, %c0_67] : memref<64x32xbf16, #tpu.memory_space<vmem>>, vector<64x32xbf16>
    %278 = arith.truncf %276 : vector<16x32xf32> to vector<16x32xbf16>
    %cst_68 = arith.constant dense<0.000000e+00> : vector<16x64xf32>
    %279 = tpu.matmul %278, %277, %cst_68 {dimension_numbers = #tpu.dot_dimension_numbers<[1], [1], [0], [0], [0, 0, 1, 0], [], []>} : vector<16x32xbf16>, vector<64x32xbf16>, vector<16x64xf32> -> vector<16x64xf32>
    %c0_69 = arith.constant 0 : index
    %c0_70 = arith.constant 0 : index
    %280 = vector.load %arg11[%c0_69, %c0_70] : memref<1x64xf32, #tpu.memory_space<vmem>>, vector<1x64xf32>
    %281 = vector.broadcast %280 : vector<1x64xf32> to vector<16x64xf32>
    %282 = arith.addf %279, %281 : vector<16x64xf32>
    %cst_71 = arith.constant 0.000000e+00 : f32
    %283 = vector.broadcast %cst_71 : f32 to vector<16x64xf32>
    %284 = arith.maximumf %282, %283 : vector<16x64xf32>
    %c0_72 = arith.constant 0 : index
    %c0_73 = arith.constant 0 : index
    %285 = vector.load %arg8[%c0_72, %c0_73] : memref<32x64xbf16, #tpu.memory_space<vmem>>, vector<32x64xbf16>
    %286 = arith.truncf %284 : vector<16x64xf32> to vector<16x64xbf16>
    %cst_74 = arith.constant dense<0.000000e+00> : vector<16x32xf32>
    %287 = tpu.matmul %286, %285, %cst_74 {dimension_numbers = #tpu.dot_dimension_numbers<[1], [1], [0], [0], [0, 0, 1, 0], [], []>} : vector<16x64xbf16>, vector<32x64xbf16>, vector<16x32xf32> -> vector<16x32xf32>
    %288 = vector.extract_strided_slice %2 {offsets = [6, 0], sizes = [1, 32], strides = [1, 1]} : vector<11x32xf32> to vector<1x32xf32>
    %289 = vector.broadcast %288 : vector<1x32xf32> to vector<16x32xf32>
    %290 = arith.addf %287, %289 : vector<16x32xf32>
    %291 = arith.addf %290, %276 : vector<16x32xf32>
    %292 = vector.extract_strided_slice %2 {offsets = [7, 0], sizes = [1, 32], strides = [1, 1]} : vector<11x32xf32> to vector<1x32xf32>
    %293 = vector.extract_strided_slice %2 {offsets = [8, 0], sizes = [1, 32], strides = [1, 1]} : vector<11x32xf32> to vector<1x32xf32>
    %cst_75 = arith.constant dense<0.000000e+00> : vector<16xf32>
    %294 = vector.multi_reduction <add>, %291, %cst_75 [1] : vector<16x32xf32> to vector<16xf32>
    %295 = vector.shape_cast %294 : vector<16xf32> to vector<16x1xf32>
    %cst_76 = arith.constant 3.200000e+01 : f32
    %296 = vector.broadcast %cst_76 : f32 to vector<16x1xf32>
    %297 = arith.divf %295, %296 : vector<16x1xf32>
    %298 = vector.broadcast %297 : vector<16x1xf32> to vector<16x32xf32>
    %299 = arith.subf %291, %298 : vector<16x32xf32>
    %300 = arith.mulf %299, %299 : vector<16x32xf32>
    %cst_77 = arith.constant dense<0.000000e+00> : vector<16xf32>
    %301 = vector.multi_reduction <add>, %300, %cst_77 [1] : vector<16x32xf32> to vector<16xf32>
    %302 = vector.shape_cast %301 : vector<16xf32> to vector<16x1xf32>
    %cst_78 = arith.constant 3.200000e+01 : f32
    %303 = vector.broadcast %cst_78 : f32 to vector<16x1xf32>
    %304 = arith.divf %302, %303 : vector<16x1xf32>
    %cst_79 = arith.constant 9.99999974E-6 : f32
    %305 = vector.broadcast %cst_79 : f32 to vector<16x1xf32>
    %306 = arith.addf %304, %305 : vector<16x1xf32>
    %307 = math.rsqrt %306 : vector<16x1xf32>
    %308 = vector.broadcast %307 : vector<16x1xf32> to vector<16x32xf32>
    %309 = arith.mulf %299, %308 : vector<16x32xf32>
    %310 = vector.broadcast %292 : vector<1x32xf32> to vector<16x32xf32>
    %311 = arith.mulf %309, %310 : vector<16x32xf32>
    %312 = vector.broadcast %293 : vector<1x32xf32> to vector<16x32xf32>
    %313 = arith.addf %311, %312 : vector<16x32xf32>
    %314 = vector.shape_cast %313 : vector<16x32xf32> to vector<2x8x32xf32>
    %315 = vector.shape_cast %136 : vector<16x32xf32> to vector<2x8x32xf32>
    %316 = arith.mulf %314, %315 : vector<2x8x32xf32>
    %cst_80 = arith.constant dense<0.000000e+00> : vector<2x8xf32>
    %317 = vector.multi_reduction <add>, %316, %cst_80 [2] : vector<2x8x32xf32> to vector<2x8xf32>
    %318 = vector.shape_cast %317 : vector<2x8xf32> to vector<2x8x1xf32>
    %cst_81 = arith.constant dense<0xFF800000> : vector<2x1xf32>
    %319 = vector.multi_reduction <maximumf>, %318, %cst_81 [1] : vector<2x8x1xf32> to vector<2x1xf32>
    %320 = vector.shape_cast %319 : vector<2x1xf32> to vector<2x1x1xf32>
    %321 = vector.broadcast %320 : vector<2x1x1xf32> to vector<2x8x1xf32>
    %322 = arith.subf %318, %321 : vector<2x8x1xf32>
    %323 = math.exp %322 : vector<2x8x1xf32>
    %cst_82 = arith.constant dense<0.000000e+00> : vector<2x1xf32>
    %324 = vector.multi_reduction <add>, %323, %cst_82 [1] : vector<2x8x1xf32> to vector<2x1xf32>
    %325 = vector.shape_cast %324 : vector<2x1xf32> to vector<2x1x1xf32>
    %326 = tpu.reciprocal %325 {approx = true} : vector<2x1x1xf32> -> vector<2x1x1xf32>
    %327 = vector.broadcast %326 : vector<2x1x1xf32> to vector<2x8x1xf32>
    %328 = arith.mulf %323, %327 : vector<2x8x1xf32>
    %329 = vector.broadcast %328 : vector<2x8x1xf32> to vector<2x8x32xf32>
    %330 = arith.mulf %314, %329 : vector<2x8x32xf32>
    %331 = vector.shape_cast %330 : vector<2x8x32xf32> to vector<16x32xf32>
    %332 = arith.addf %331, %313 : vector<16x32xf32>
    %333 = vector.extract_strided_slice %2 {offsets = [9, 0], sizes = [1, 32], strides = [1, 1]} : vector<11x32xf32> to vector<1x32xf32>
    %334 = vector.extract_strided_slice %2 {offsets = [10, 0], sizes = [1, 32], strides = [1, 1]} : vector<11x32xf32> to vector<1x32xf32>
    %cst_83 = arith.constant dense<0.000000e+00> : vector<16xf32>
    %335 = vector.multi_reduction <add>, %332, %cst_83 [1] : vector<16x32xf32> to vector<16xf32>
    %336 = vector.shape_cast %335 : vector<16xf32> to vector<16x1xf32>
    %cst_84 = arith.constant 3.200000e+01 : f32
    %337 = vector.broadcast %cst_84 : f32 to vector<16x1xf32>
    %338 = arith.divf %336, %337 : vector<16x1xf32>
    %339 = vector.broadcast %338 : vector<16x1xf32> to vector<16x32xf32>
    %340 = arith.subf %332, %339 : vector<16x32xf32>
    %341 = arith.mulf %340, %340 : vector<16x32xf32>
    %cst_85 = arith.constant dense<0.000000e+00> : vector<16xf32>
    %342 = vector.multi_reduction <add>, %341, %cst_85 [1] : vector<16x32xf32> to vector<16xf32>
    %343 = vector.shape_cast %342 : vector<16xf32> to vector<16x1xf32>
    %cst_86 = arith.constant 3.200000e+01 : f32
    %344 = vector.broadcast %cst_86 : f32 to vector<16x1xf32>
    %345 = arith.divf %343, %344 : vector<16x1xf32>
    %cst_87 = arith.constant 9.99999974E-6 : f32
    %346 = vector.broadcast %cst_87 : f32 to vector<16x1xf32>
    %347 = arith.addf %345, %346 : vector<16x1xf32>
    %348 = math.rsqrt %347 : vector<16x1xf32>
    %349 = vector.broadcast %348 : vector<16x1xf32> to vector<16x32xf32>
    %350 = arith.mulf %340, %349 : vector<16x32xf32>
    %351 = vector.broadcast %333 : vector<1x32xf32> to vector<16x32xf32>
    %352 = arith.mulf %350, %351 : vector<16x32xf32>
    %353 = vector.broadcast %334 : vector<1x32xf32> to vector<16x32xf32>
    %354 = arith.addf %352, %353 : vector<16x32xf32>
    %c0_88 = arith.constant 0 : index
    %c0_89 = arith.constant 0 : index
    %355 = vector.load %arg12[%c0_88, %c0_89] : memref<16x32xf32, #tpu.memory_space<vmem>>, vector<16x32xf32>
    tpu.vector_store %arg12[%c0_88, %c0_89], %354 {strides = array<i32>} : memref<16x32xf32, #tpu.memory_space<vmem>>, vector<16x32xf32>,
    %356 = vector.shape_cast %253 : vector<2x8x8xf32> to vector<16x8xf32>
    %c0_90 = arith.constant 0 : index
    %c0_91 = arith.constant 0 : index
    %357 = vector.load %arg13[%c0_90, %c0_91] : memref<16x8xf32, #tpu.memory_space<vmem>>, vector<16x8xf32>
    tpu.vector_store %arg13[%c0_90, %c0_91], %356 {strides = array<i32>} : memref<16x8xf32, #tpu.memory_space<vmem>>, vector<16x8xf32>,
    return
  }
  func.func @transform_0(%arg0: i32) -> (i32, i32) {
    %c0_i32 = arith.constant 0 : i32
    %c0_i32_0 = arith.constant 0 : i32
    return %arg0, %c0_i32 : i32, i32
  }
  func.func @transform_1(%arg0: i32) -> (i32, i32) {
    %c0_i32 = arith.constant 0 : i32
    %c0_i32_0 = arith.constant 0 : i32
    return %arg0, %c0_i32 : i32, i32
  }
  func.func @transform_2(%arg0: i32) -> (i32, i32) {
    %c0_i32 = arith.constant 0 : i32
    %c0_i32_0 = arith.constant 0 : i32
    %c0_i32_1 = arith.constant 0 : i32
    return %c0_i32, %c0_i32_0 : i32, i32
  }
  func.func @transform_3(%arg0: i32) -> (i32, i32) {
    %c0_i32 = arith.constant 0 : i32
    %c0_i32_0 = arith.constant 0 : i32
    %c0_i32_1 = arith.constant 0 : i32
    return %c0_i32, %c0_i32_0 : i32, i32
  }
  func.func @transform_4(%arg0: i32) -> (i32, i32) {
    %c0_i32 = arith.constant 0 : i32
    %c0_i32_0 = arith.constant 0 : i32
    %c0_i32_1 = arith.constant 0 : i32
    return %c0_i32, %c0_i32_0 : i32, i32
  }
  func.func @transform_5(%arg0: i32) -> (i32, i32) {
    %c0_i32 = arith.constant 0 : i32
    %c0_i32_0 = arith.constant 0 : i32
    %c0_i32_1 = arith.constant 0 : i32
    return %c0_i32, %c0_i32_0 : i32, i32
  }
  func.func @transform_6(%arg0: i32) -> (i32, i32) {
    %c0_i32 = arith.constant 0 : i32
    %c0_i32_0 = arith.constant 0 : i32
    %c0_i32_1 = arith.constant 0 : i32
    return %c0_i32, %c0_i32_0 : i32, i32
  }
  func.func @transform_7(%arg0: i32) -> (i32, i32) {
    %c0_i32 = arith.constant 0 : i32
    %c0_i32_0 = arith.constant 0 : i32
    %c0_i32_1 = arith.constant 0 : i32
    return %c0_i32, %c0_i32_0 : i32, i32
  }
  func.func @transform_8(%arg0: i32) -> (i32, i32) {
    %c0_i32 = arith.constant 0 : i32
    %c0_i32_0 = arith.constant 0 : i32
    %c0_i32_1 = arith.constant 0 : i32
    return %c0_i32, %c0_i32_0 : i32, i32
  }
  func.func @transform_9(%arg0: i32) -> (i32, i32) {
    %c0_i32 = arith.constant 0 : i32
    %c0_i32_0 = arith.constant 0 : i32
    %c0_i32_1 = arith.constant 0 : i32
    return %c0_i32, %c0_i32_0 : i32, i32
  }
  func.func @transform_10(%arg0: i32) -> (i32, i32) {
    %c0_i32 = arith.constant 0 : i32
    %c0_i32_0 = arith.constant 0 : i32
    %c0_i32_1 = arith.constant 0 : i32
    return %c0_i32, %c0_i32_0 : i32, i32
  }
  func.func @transform_11(%arg0: i32) -> (i32, i32) {
    %c0_i32 = arith.constant 0 : i32
    %c0_i32_0 = arith.constant 0 : i32
    return %arg0, %c0_i32 : i32, i32
  }
  func.func @transform_12(%arg0: i32) -> (i32, i32) {
    %c0_i32 = arith.constant 0 : i32
    %c0_i32_0 = arith.constant 0 : i32
    return %arg0, %c0_i32 : i32, i32
  }
}

</mosaic_0001>

<llo_original>
// kernel: tpu_custom_call.1
$region0: #{tpu_custom_call.1}
  #allocation0 [shape = 'u32[]', space=smem, size = 0x4, offset = 0x4, fixed_abs, tag = 'smem constant byte address 0x4 - core index']
  #allocation1 [shape = 'u32[72,128]{1,0:T(1,128)}', space=vmem, size = 0x9000, scoped, tag = 'internal scratch']
  %s0 = inlined_call_operand.vmem [shape: f32[32,32], index: 0, kind: input, shape index: {}]
  %s1 = inlined_call_operand.vmem [shape: f32[32,32], index: 1, kind: input, shape index: {}]
  %s2 = inlined_call_operand.vmem [shape: bf16[96,32], index: 2, kind: input, shape index: {}]
  %s3 = inlined_call_operand.vmem [shape: bf16[32,32], index: 3, kind: input, shape index: {}]
  %s4 = inlined_call_operand.vmem [shape: bf16[96,32], index: 4, kind: input, shape index: {}]
  %s5 = inlined_call_operand.vmem [shape: bf16[32,32], index: 5, kind: input, shape index: {}]
  %s6 = inlined_call_operand.vmem [shape: bf16[64,32], index: 6, kind: input, shape index: {}]
  %s7 = inlined_call_operand.vmem [shape: bf16[32,64], index: 7, kind: input, shape index: {}]
  %s8 = inlined_call_operand.vmem [shape: f32[2,96], index: 8, kind: input, shape index: {}]
  %s9 = inlined_call_operand.vmem [shape: f32[11,32], index: 9, kind: input, shape index: {}]
  %s10 = inlined_call_operand.vmem [shape: f32[1,64], index: 10, kind: input, shape index: {}]
  %s11 = inlined_call_operand.hbm [shape: f32[32,32], index: 11, kind: output, shape index: {0}]
  %s12 = inlined_call_operand.vmem [shape: f32[32,8], index: 12, kind: output, shape index: {1}]
  %13 = xla_tuple %s11, %s12
  %s14 = sld [smem:[#allocation0]]
  $region85: #{tpu_custom_call.1} parent=0
    _
  %s16 = ssub.s32 1, %s14
  %s17 = scalar_select 0, %s16, %s14
  $region1: #{tpu_custom_call.1} parent=0
    #allocation2 [shape = 'u8[16384]{0}', space=vmem, size = 0x4000, scoped, tag = 'output window, operand 0']
    #allocation3 [shape = 's32[2]{0}', space=sflag, size = 0x8, scoped, tag = 'scoped memory for tpu_custom_call.1']
    %18 = vsyncpa [#allocation3], 0
    %s19 = scalar_lea.sflag [#allocation3], 1
    %20 = vsyncpa %s19, 0
    loop: start=0, step=1, limit=4
    $region2: #{tpu_custom_call.1} parent=1 // loop_pre_header
      _
    $region3: #{tpu_custom_call.1} parent=1 // loop_header
      %s22 = sphi 0, %s26
      %p23 = scmp.ge.s32.totalorder %s22, 4
      %s32 = sphi 0, %s34
      %s35 = sphi 0, %s32
      %s36 = sphi 0, %s35
      %s52 = sphi 0, %s36
      %s58 = sphi 0, %s60
      %s61 = sphi 0, %s58
      %s62 = sphi 0, %s61
      %s78 = sphi 0, %s62
      %s82 = sphi 0, %s82
      %s84 = sphi 0, %s82
      %s85 = sphi 0, %s84
      %s99 = sphi 0, %s85
      %s103 = sphi 0, %s103
      %s105 = sphi 0, %s103
      %s106 = sphi 0, %s105
      %s120 = sphi 0, %s106
      %s124 = sphi 0, %s124
      %s126 = sphi 0, %s124
      %s127 = sphi 0, %s126
      %s141 = sphi 0, %s127
      %s145 = sphi 0, %s145
      %s147 = sphi 0, %s145
      %s148 = sphi 0, %s147
      %s162 = sphi 0, %s148
      %s166 = sphi 0, %s166
      %s168 = sphi 0, %s166
      %s169 = sphi 0, %s168
      %s183 = sphi 0, %s169
      %s187 = sphi 0, %s187
      %s189 = sphi 0, %s187
      %s190 = sphi 0, %s189
      %s204 = sphi 0, %s190
      %s208 = sphi 0, %s208
      %s210 = sphi 0, %s208
      %s211 = sphi 0, %s210
      %s225 = sphi 0, %s211
      %s229 = sphi 0, %s229
      %s231 = sphi 0, %s229
      %s232 = sphi 0, %s231
      %s246 = sphi 0, %s232
      %s250 = sphi 0, %s250
      %s252 = sphi 0, %s250
      %s253 = sphi 0, %s252
      %s267 = sphi 0, %s253
      %s273 = sphi 0, %s275
      %s276 = sphi 0, %s273
      %s277 = sphi 0, %s276
      %s293 = sphi 0, %s277
      %s299 = sphi 0, %s301
      %s302 = sphi 0, %s299
      %s303 = sphi 0, %s302
      %s319 = sphi 0, %s303
    $region4: #{tpu_custom_call.1} parent=1 // loop_header_branch
      %25 = sbr.rel (%p23) target = $region8
    $region5: #{tpu_custom_call.1} parent=1 // loop_body
      %s27 = ssub.s32 %s22, 1
      %s28 = ssub.s32 %s22, 2
      %s29 = sadd.s32 %s22, 1
      %s30 = ssub.s32 %s22, %s29
      %p31 = scmp.eq.s32.totalorder %s30, 0
      %s33 = sadd.s32 %s32, 1
      %s34 = scalar_select %p31, %s32, %s33
      %p37 = pneg %p31
      %p38 = scmp.eq.s32.totalorder %s22, 1
      %p39 = por %p37, %p38
      %p40 = scmp.ne.s32.totalorder %s32, %s35
      %p41 = scmp.eq.s32.totalorder %s22, 0
      %p42 = por %p40, %p41
      %p43 = scmp.ne.s32.totalorder %s32, %s35
      %p44 = scmp.eq.s32.totalorder %s27, 1
      %p45 = por %p43, %p44
      %p46 = scmp.ne.s32.totalorder %s35, %s36
      %p47 = scmp.eq.s32.totalorder %s27, 0
      %p48 = por %p46, %p47
      %p49 = scmp.ne.s32.totalorder %s35, %s36
      %p50 = scmp.eq.s32.totalorder %s28, 1
      %p51 = por %p49, %p50
      %p53 = scmp.ne.s32.totalorder %s36, %s52
      %p54 = scmp.eq.s32.totalorder %s28, 0
      %p55 = por %p53, %p54
      %s56 = ssub.s32 %s22, %s29
      %p57 = scmp.eq.s32.totalorder %s56, 0
      %s59 = sadd.s32 %s58, 1
      %s60 = scalar_select %p57, %s58, %s59
      %p63 = pneg %p57
      %p64 = scmp.eq.s32.totalorder %s22, 1
      %p65 = por %p63, %p64
      %p66 = scmp.ne.s32.totalorder %s58, %s61
      %p67 = scmp.eq.s32.totalorder %s22, 0
      %p68 = por %p66, %p67
      %p69 = scmp.ne.s32.totalorder %s58, %s61
      %p70 = scmp.eq.s32.totalorder %s27, 1
      %p71 = por %p69, %p70
      %p72 = scmp.ne.s32.totalorder %s61, %s62
      %p73 = scmp.eq.s32.totalorder %s27, 0
      %p74 = por %p72, %p73
      %p75 = scmp.ne.s32.totalorder %s61, %s62
      %p76 = scmp.eq.s32.totalorder %s28, 1
      %p77 = por %p75, %p76
      %p79 = scmp.ne.s32.totalorder %s62, %s78
      %p80 = scmp.eq.s32.totalorder %s28, 0
      %p81 = por %p79, %p80
      %s83 = sadd.s32 %s82, 1
      %p86 = scmp.eq.s32.totalorder %s22, 1
      %p87 = scmp.ne.s32.totalorder %s82, %s84
      %p88 = scmp.eq.s32.totalorder %s22, 0
      %p89 = por %p87, %p88
      %p90 = scmp.ne.s32.totalorder %s82, %s84
      %p91 = scmp.eq.s32.totalorder %s27, 1
      %p92 = por %p90, %p91
      %p93 = scmp.ne.s32.totalorder %s84, %s85
      %p94 = scmp.eq.s32.totalorder %s27, 0
      %p95 = por %p93, %p94
      %p96 = scmp.ne.s32.totalorder %s84, %s85
      %p97 = scmp.eq.s32.totalorder %s28, 1
      %p98 = por %p96, %p97
      %p100 = scmp.ne.s32.totalorder %s85, %s99
      %p101 = scmp.eq.s32.totalorder %s28, 0
      %p102 = por %p100, %p101
      %s104 = sadd.s32 %s103, 1
      %p107 = scmp.eq.s32.totalorder %s22, 1
      %p108 = scmp.ne.s32.totalorder %s103, %s105
      %p109 = scmp.eq.s32.totalorder %s22, 0
      %p110 = por %p108, %p109
      %p111 = scmp.ne.s32.totalorder %s103, %s105
      %p112 = scmp.eq.s32.totalorder %s27, 1
      %p113 = por %p111, %p112
      %p114 = scmp.ne.s32.totalorder %s105, %s106
      %p115 = scmp.eq.s32.totalorder %s27, 0
      %p116 = por %p114, %p115
      %p117 = scmp.ne.s32.totalorder %s105, %s106
      %p118 = scmp.eq.s32.totalorder %s28, 1
      %p119 = por %p117, %p118
      %p121 = scmp.ne.s32.totalorder %s106, %s120
      %p122 = scmp.eq.s32.totalorder %s28, 0
      %p123 = por %p121, %p122
      %s125 = sadd.s32 %s124, 1
      %p128 = scmp.eq.s32.totalorder %s22, 1
      %p129 = scmp.ne.s32.totalorder %s124, %s126
      %p130 = scmp.eq.s32.totalorder %s22, 0
      %p131 = por %p129, %p130
      %p132 = scmp.ne.s32.totalorder %s124, %s126
      %p133 = scmp.eq.s32.totalorder %s27, 1
      %p134 = por %p132, %p133
      %p135 = scmp.ne.s32.totalorder %s126, %s127
      %p136 = scmp.eq.s32.totalorder %s27, 0
      %p137 = por %p135, %p136
      %p138 = scmp.ne.s32.totalorder %s126, %s127
      %p139 = scmp.eq.s32.totalorder %s28, 1
      %p140 = por %p138, %p139
      %p142 = scmp.ne.s32.totalorder %s127, %s141
      %p143 = scmp.eq.s32.totalorder %s28, 0
      %p144 = por %p142, %p143
      %s146 = sadd.s32 %s145, 1
      %p149 = scmp.eq.s32.totalorder %s22, 1
      %p150 = scmp.ne.s32.totalorder %s145, %s147
      %p151 = scmp.eq.s32.totalorder %s22, 0
      %p152 = por %p150, %p151
      %p153 = scmp.ne.s32.totalorder %s145, %s147
      %p154 = scmp.eq.s32.totalorder %s27, 1
      %p155 = por %p153, %p154
      %p156 = scmp.ne.s32.totalorder %s147, %s148
      %p157 = scmp.eq.s32.totalorder %s27, 0
      %p158 = por %p156, %p157
      %p159 = scmp.ne.s32.totalorder %s147, %s148
      %p160 = scmp.eq.s32.totalorder %s28, 1
      %p161 = por %p159, %p160
      %p163 = scmp.ne.s32.totalorder %s148, %s162
      %p164 = scmp.eq.s32.totalorder %s28, 0
      %p165 = por %p163, %p164
      %s167 = sadd.s32 %s166, 1
      %p170 = scmp.eq.s32.totalorder %s22, 1
      %p171 = scmp.ne.s32.totalorder %s166, %s168
      %p172 = scmp.eq.s32.totalorder %s22, 0
      %p173 = por %p171, %p172
      %p174 = scmp.ne.s32.totalorder %s166, %s168
      %p175 = scmp.eq.s32.totalorder %s27, 1
      %p176 = por %p174, %p175
      %p177 = scmp.ne.s32.totalorder %s168, %s169
      %p178 = scmp.eq.s32.totalorder %s27, 0
      %p179 = por %p177, %p178
      %p180 = scmp.ne.s32.totalorder %s168, %s169
      %p181 = scmp.eq.s32.totalorder %s28, 1
      %p182 = por %p180, %p181
      %p184 = scmp.ne.s32.totalorder %s169, %s183
      %p185 = scmp.eq.s32.totalorder %s28, 0
      %p186 = por %p184, %p185
      %s188 = sadd.s32 %s187, 1
      %p191 = scmp.eq.s32.totalorder %s22, 1
      %p192 = scmp.ne.s32.totalorder %s187, %s189
      %p193 = scmp.eq.s32.totalorder %s22, 0
      %p194 = por %p192, %p193
      %p195 = scmp.ne.s32.totalorder %s187, %s189
      %p196 = scmp.eq.s32.totalorder %s27, 1
      %p197 = por %p195, %p196
      %p198 = scmp.ne.s32.totalorder %s189, %s190
      %p199 = scmp.eq.s32.totalorder %s27, 0
      %p200 = por %p198, %p199
      %p201 = scmp.ne.s32.totalorder %s189, %s190
      %p202 = scmp.eq.s32.totalorder %s28, 1
      %p203 = por %p201, %p202
      %p205 = scmp.ne.s32.totalorder %s190, %s204
      %p206 = scmp.eq.s32.totalorder %s28, 0
      %p207 = por %p205, %p206
      %s209 = sadd.s32 %s208, 1
      %p212 = scmp.eq.s32.totalorder %s22, 1
      %p213 = scmp.ne.s32.totalorder %s208, %s210
      %p214 = scmp.eq.s32.totalorder %s22, 0
      %p215 = por %p213, %p214
      %p216 = scmp.ne.s32.totalorder %s208, %s210
      %p217 = scmp.eq.s32.totalorder %s27, 1
      %p218 = por %p216, %p217
      %p219 = scmp.ne.s32.totalorder %s210, %s211
      %p220 = scmp.eq.s32.totalorder %s27, 0
      %p221 = por %p219, %p220
      %p222 = scmp.ne.s32.totalorder %s210, %s211
      %p223 = scmp.eq.s32.totalorder %s28, 1
      %p224 = por %p222, %p223
      %p226 = scmp.ne.s32.totalorder %s211, %s225
      %p227 = scmp.eq.s32.totalorder %s28, 0
      %p228 = por %p226, %p227
      %s230 = sadd.s32 %s229, 1
      %p233 = scmp.eq.s32.totalorder %s22, 1
      %p234 = scmp.ne.s32.totalorder %s229, %s231
      %p235 = scmp.eq.s32.totalorder %s22, 0
      %p236 = por %p234, %p235
      %p237 = scmp.ne.s32.totalorder %s229, %s231
      %p238 = scmp.eq.s32.totalorder %s27, 1
      %p239 = por %p237, %p238
      %p240 = scmp.ne.s32.totalorder %s231, %s232
      %p241 = scmp.eq.s32.totalorder %s27, 0
      %p242 = por %p240, %p241
      %p243 = scmp.ne.s32.totalorder %s231, %s232
      %p244 = scmp.eq.s32.totalorder %s28, 1
      %p245 = por %p243, %p244
      %p247 = scmp.ne.s32.totalorder %s232, %s246
      %p248 = scmp.eq.s32.totalorder %s28, 0
      %p249 = por %p247, %p248
      %s251 = sadd.s32 %s250, 1
      %p254 = scmp.eq.s32.totalorder %s22, 1
      %p255 = scmp.ne.s32.totalorder %s250, %s252
      %p256 = scmp.eq.s32.totalorder %s22, 0
      %p257 = por %p255, %p256
      %p258 = scmp.ne.s32.totalorder %s250, %s252
      %p259 = scmp.eq.s32.totalorder %s27, 1
      %p260 = por %p258, %p259
      %p261 = scmp.ne.s32.totalorder %s252, %s253
      %p262 = scmp.eq.s32.totalorder %s27, 0
      %p263 = por %p261, %p262
      %p264 = scmp.ne.s32.totalorder %s252, %s253
      %p265 = scmp.eq.s32.totalorder %s28, 1
      %p266 = por %p264, %p265
      %p268 = scmp.ne.s32.totalorder %s253, %s267
      %p269 = scmp.eq.s32.totalorder %s28, 0
      %p270 = por %p268, %p269
      %s271 = ssub.s32 %s22, %s29
      %p272 = scmp.eq.s32.totalorder %s271, 0
      %s274 = sadd.s32 %s273, 1
      %s275 = scalar_select %p272, %s273, %s274
      %p278 = pneg %p272
      %p279 = scmp.eq.s32.totalorder %s22, 1
      %p280 = por %p278, %p279
      %p281 = scmp.ne.s32.totalorder %s273, %s276
      %p282 = scmp.eq.s32.totalorder %s22, 0
      %p283 = por %p281, %p282
      %p284 = scmp.ne.s32.totalorder %s273, %s276
      %p285 = scmp.eq.s32.totalorder %s27, 1
      %p286 = por %p284, %p285
      %p287 = scmp.ne.s32.totalorder %s276, %s277
      %p288 = scmp.eq.s32.totalorder %s27, 0
      %p289 = por %p287, %p288
      %p290 = scmp.ne.s32.totalorder %s276, %s277
      %p291 = scmp.eq.s32.totalorder %s28, 1
      %p292 = por %p290, %p291
      %p294 = scmp.ne.s32.totalorder %s277, %s293
      %p295 = scmp.eq.s32.totalorder %s28, 0
      %p296 = por %p294, %p295
      %s297 = ssub.s32 %s22, %s29
      %p298 = scmp.eq.s32.totalorder %s297, 0
      %s300 = sadd.s32 %s299, 1
      %s301 = scalar_select %p298, %s299, %s300
      %p304 = pneg %p298
      %p305 = scmp.eq.s32.totalorder %s22, 1
      %p306 = por %p304, %p305
      %p307 = scmp.ne.s32.totalorder %s299, %s302
      %p308 = scmp.eq.s32.totalorder %s22, 0
      %p309 = por %p307, %p308
      %p310 = scmp.ne.s32.totalorder %s299, %s302
      %p311 = scmp.eq.s32.totalorder %s27, 1
      %p312 = por %p310, %p311
      %p313 = scmp.ne.s32.totalorder %s302, %s303
      %p314 = scmp.eq.s32.totalorder %s27, 0
      %p315 = por %p313, %p314
      %p316 = scmp.ne.s32.totalorder %s302, %s303
      %p317 = scmp.eq.s32.totalorder %s28, 1
      %p318 = por %p316, %p317
      %p320 = scmp.ne.s32.totalorder %s303, %s319
      %p321 = scmp.eq.s32.totalorder %s28, 0
      %p322 = por %p320, %p321
      %p323 = scmp.le.s32.totalorder 1, %s22
      %p324 = scmp.lt.s32.totalorder %s22, 3
      %p325 = pnand %p323, %p324
      %p326 = pneg %p325
      // Predicated region
      $region9: #{tpu_custom_call.1} parent=5 // pred_check
        _
      $region10: #{tpu_custom_call.1} parent=5 // pred_check_branch
        %328 = sbr.rel (%p325) target = $region12
      $region11: #{tpu_custom_call.1} parent=5 // pred_region
        %s329 = ssub.s32 %s22, 1
        // Predicated region
        $region13: #{tpu_custom_call.1} parent=11 // pred_check
          %p330 = pneg %p95
        $region14: #{tpu_custom_call.1} parent=11 // pred_check_branch
          %332 = sbr.rel (%p330) target = $region16
        $region15: #{tpu_custom_call.1} parent=11 // pred_region
          _
        $region16: #{tpu_custom_call.1} parent=11 // pred_fallthru
          _
        // Predicated region
        $region17: #{tpu_custom_call.1} parent=11 // pred_check
          %p333 = pneg %p116
        $region18: #{tpu_custom_call.1} parent=11 // pred_check_branch
          %335 = sbr.rel (%p333) target = $region20
        $region19: #{tpu_custom_call.1} parent=11 // pred_region
          _
        $region20: #{tpu_custom_call.1} parent=11 // pred_fallthru
          _
        // Predicated region
        $region21: #{tpu_custom_call.1} parent=11 // pred_check
          %p336 = pneg %p137
        $region22: #{tpu_custom_call.1} parent=11 // pred_check_branch
          %338 = sbr.rel (%p336) target = $region24
        $region23: #{tpu_custom_call.1} parent=11 // pred_region
          _
        $region24: #{tpu_custom_call.1} parent=11 // pred_fallthru
          _
        // Predicated region
        $region25: #{tpu_custom_call.1} parent=11 // pred_check
          %p339 = pneg %p158
        $region26: #{tpu_custom_call.1} parent=11 // pred_check_branch
          %341 = sbr.rel (%p339) target = $region28
        $region27: #{tpu_custom_call.1} parent=11 // pred_region
          _
        $region28: #{tpu_custom_call.1} parent=11 // pred_fallthru
          _
        // Predicated region
        $region29: #{tpu_custom_call.1} parent=11 // pred_check
          %p342 = pneg %p179
        $region30: #{tpu_custom_call.1} parent=11 // pred_check_branch
          %344 = sbr.rel (%p342) target = $region32
        $region31: #{tpu_custom_call.1} parent=11 // pred_region
          _
        $region32: #{tpu_custom_call.1} parent=11 // pred_fallthru
          _
        // Predicated region
        $region33: #{tpu_custom_call.1} parent=11 // pred_check
          %p345 = pneg %p200
        $region34: #{tpu_custom_call.1} parent=11 // pred_check_branch
          %347 = sbr.rel (%p345) target = $region36
        $region35: #{tpu_custom_call.1} parent=11 // pred_region
          _
        $region36: #{tpu_custom_call.1} parent=11 // pred_fallthru
          _
        // Predicated region
        $region37: #{tpu_custom_call.1} parent=11 // pred_check
          %p348 = pneg %p221
        $region38: #{tpu_custom_call.1} parent=11 // pred_check_branch
          %350 = sbr.rel (%p348) target = $region40
        $region39: #{tpu_custom_call.1} parent=11 // pred_region
          _
        $region40: #{tpu_custom_call.1} parent=11 // pred_fallthru
          _
        // Predicated region
        $region41: #{tpu_custom_call.1} parent=11 // pred_check
          %p351 = pneg %p242
        $region42: #{tpu_custom_call.1} parent=11 // pred_check_branch
          %353 = sbr.rel (%p351) target = $region44
        $region43: #{tpu_custom_call.1} parent=11 // pred_region
          _
        $region44: #{tpu_custom_call.1} parent=11 // pred_fallthru
          _
        // Predicated region
        $region45: #{tpu_custom_call.1} parent=11 // pred_check
          %p354 = pneg %p263
        $region46: #{tpu_custom_call.1} parent=11 // pred_check_branch
          %356 = sbr.rel (%p354) target = $region48
        $region47: #{tpu_custom_call.1} parent=11 // pred_region
          _
        $region48: #{tpu_custom_call.1} parent=11 // pred_fallthru
          _
      $region12: #{tpu_custom_call.1} parent=5 // pred_fallthru
        _
      %p357 = scmp.lt.s32.totalorder %s22, 2
      // Predicated region
      $region49: #{tpu_custom_call.1} parent=5 // pred_check
        %p358 = pneg %p357
      $region50: #{tpu_custom_call.1} parent=5 // pred_check_branch
        %360 = sbr.rel (%p358) target = $region52
      $region51: #{tpu_custom_call.1} parent=5 // pred_region
        // Predicated region
        $region53: #{tpu_custom_call.1} parent=51 // pred_check
          %p361 = pneg %p42
        $region54: #{tpu_custom_call.1} parent=51 // pred_check_branch
          %363 = sbr.rel (%p361) target = $region56
        $region55: #{tpu_custom_call.1} parent=51 // pred_region
          %s364 = smul.u32 2, %s22
          %p365 = scmp.lt.s32.totalorder %s364, 3
          %s366 = scalar_select %p365, %s364, 3
          %s367 = smul.addr %s366, 8
          %s368 = scalar_lea.vmem %s0, %s367
          %s369 = smul.u32 2, %s22
        $region56: #{tpu_custom_call.1} parent=51 // pred_fallthru
          _
        // Predicated region
        $region57: #{tpu_custom_call.1} parent=51 // pred_check
          %p370 = pneg %p68
        $region58: #{tpu_custom_call.1} parent=51 // pred_check_branch
          %372 = sbr.rel (%p370) target = $region60
        $region59: #{tpu_custom_call.1} parent=51 // pred_region
          %s373 = smul.u32 2, %s22
          %p374 = scmp.lt.s32.totalorder %s373, 3
          %s375 = scalar_select %p374, %s373, 3
          %s376 = smul.addr %s375, 8
          %s377 = scalar_lea.vmem %s1, %s376
          %s378 = smul.u32 2, %s22
        $region60: #{tpu_custom_call.1} parent=51 // pred_fallthru
          _
      $region52: #{tpu_custom_call.1} parent=5 // pred_fallthru
        _
      %p379 = scmp.le.s32.totalorder 1, %s22
      %p380 = scmp.lt.s32.totalorder %s22, 3
      %p381 = pnand %p379, %p380
      %p382 = pneg %p381
      // Predicated region
      $region61: #{tpu_custom_call.1} parent=5 // pred_check
        _
      $region62: #{tpu_custom_call.1} parent=5 // pred_check_branch
        %384 = sbr.rel (%p381) target = $region64
      $region63: #{tpu_custom_call.1} parent=5 // pred_region
        %s385 = ssub.s32 %s22, 1
        %s386 = smul.u32 2, %s27
        %p387 = scmp.lt.s32.totalorder %s386, 3
        %s388 = scalar_select %p387, %s386, 3
        %s389 = smul.addr %s388, 8
        %s390 = scalar_lea.vmem %s0, %s389
        %p391 = pneg %p48
        %p392 = pneg %p45
        %s393 = smul.u32 2, %s27
        %p394 = scmp.lt.s32.totalorder %s393, 3
        %s395 = scalar_select %p394, %s393, 3
        %s396 = smul.addr %s395, 8
        %s397 = scalar_lea.vmem %s1, %s396
        %p398 = pneg %p74
        %p399 = pneg %p71
        %p400 = pneg %p95
        %p401 = pneg %p92
        %p402 = pneg %p116
        %p403 = pneg %p113
        %p404 = pneg %p137
        %p405 = pneg %p134
        %p406 = pneg %p158
        %p407 = pneg %p155
        %p408 = pneg %p179
        %p409 = pneg %p176
        %p410 = pneg %p200
        %p411 = pneg %p197
        %p412 = pneg %p221
        %p413 = pneg %p218
        %p414 = pneg %p242
        %p415 = pneg %p239
        %p416 = pneg %p263
        %p417 = pneg %p260
        %p418 = pneg %p289
        %p419 = pneg %p286
        %s420 = sand.u32 %s276, 1
        %s421 = scalar_lea.sflag [#allocation3], %s420
        %s422 = sand.u32 %s276, 1
        %s423 = smul.addr %s422, 16
        %s424 = scalar_lea.vmem [#allocation2], %s423
        %p425 = pneg %p315
        %p426 = pneg %p312
        %s427 = smul.u32 2, %s27
        %p428 = scmp.lt.s32.totalorder %s427, 3
        %s429 = scalar_select %p428, %s427, 3
        %s430 = smul.addr %s429, 8
        %s431 = scalar_lea.vmem %s12, %s430
        %s432 = smul.u32 2, %s27
        %p433 = scmp.lt.s32.totalorder %s432, 3
        %s434 = scalar_select %p433, %s432, 3
        %s435 = smul.addr %s434, 8
        %s436 = scalar_lea.vmem %s0, %s435
        %s437 = smul.u32 2, %s27
        %s438 = smul.u32 2, %s27
        %p439 = scmp.lt.s32.totalorder %s438, 3
        %s440 = scalar_select %p439, %s438, 3
        %s441 = smul.addr %s440, 8
        %s442 = scalar_lea.vmem %s1, %s441
        %s443 = smul.u32 2, %s27
        %s444 = smul.u32 2, %s27
        %s445 = smul.u32 2, %s27
        %p446 = scmp.lt.s32.totalorder %s445, 3
        %s447 = scalar_select %p446, %s445, 3
        %s448 = smul.addr %s447, 8
        %s449 = scalar_lea.vmem %s12, %s448
        %s450 = smul.u32 2, %s27
        %v452 = vld [vmem:[%s442] sm:$0xff]
        %v453 = vld [vmem:[%s442 + $0x8] sm:$0xff]
        %v454 = vld [vmem:[%s436] sm:$0xff]
        %v455 = vld [vmem:[%s436 + $0x8] sm:$0xff]
        %v456 = vld [vmem:[%s9] sm:$0xff]
        %v457 = vld [vmem:[%s9 + $0x8] sm:$0x7]
        %v458 = vld [vmem:[%s8] sm:$0x3]
        %v459 = vld [vmem:[%s2] sm:$0xf]
        %v460 = vld [vmem:[%s2 + $0x4] sm:$0xf]
        %v461 = vld [vmem:[%s2 + $0x8] sm:$0xf]
        %v462 = vld [vmem:[%s2 + $0xc] sm:$0xf]
        %v463 = vld [vmem:[%s2 + $0x10] sm:$0xf]
        %v464 = vld [vmem:[%s2 + $0x14] sm:$0xf]
        %v465 = vld [vmem:[%s2 + $0x18] sm:$0xf]
        %v466 = vld [vmem:[%s2 + $0x1c] sm:$0xf]
        %v467 = vld [vmem:[%s2 + $0x20] sm:$0xf]
        %v468 = vld [vmem:[%s2 + $0x24] sm:$0xf]
        %v469 = vld [vmem:[%s2 + $0x28] sm:$0xf]
        %v470 = vld [vmem:[%s2 + $0x2c] sm:$0xf]
        %v471 = vpack.c.bf16 %v453, %v452
        %v472 = vperm.slane %v458, 0
        %v477 = vunpack.c.l.b16 %v459
        %v478 = vunpack.c.l.b16 %v460
        %v479 = vunpack.c.l.b16 %v461
        %v480 = vunpack.c.l.b16 %v462
        %v481 = vpack.c.b16 %v478, %v477
        %v482 = vpack.c.b16 %v480, %v479
        %vm483 = vcmask 261120
        %v485 = vsel %vm483, %v471, 0
        %v488 = vsel %vm483, %v481, 0
        %v491 = vsel %vm483, %v482, 0
        %493 = vmatpush.bf16.xpose.msra.mxu0 0
        %494 = vmatpush.bf16.xpose.msra.mxu0 0
        %495 = vmatpush.bf16.xpose.msra.mxu0 0
        %496 = vmatpush.bf16.xpose.msra.mxu0 0
        %497 = vmatpush.bf16.xpose.msra.mxu0 0
        %498 = vmatpush.bf16.xpose.msra.mxu0 0
        %499 = vmatpush.bf16.xpose.msra.mxu0 %v491
        %500 = vmatpush.bf16.xpose.msra.mxu0 %v488
        %501 = vmatmul.bf16.gmra.mxu0 %v485
        %v502 = vpop.f32.mrf.mxu0
        %v503 = vadd.f32 %v472, %v502
        %v504 = vpop.f32.mrf.mxu0
        %v505 = vadd.f32 %v472, %v504
        %506 = vdwg.mxu0
        %v511 = vunpack.c.l.b16 %v463
        %v512 = vunpack.c.l.b16 %v464
        %v513 = vunpack.c.l.b16 %v465
        %v514 = vunpack.c.l.b16 %v466
        %v515 = vpack.c.b16 %v512, %v511
        %v516 = vpack.c.b16 %v514, %v513
        %518 = vrot.lane.b32.xlu0 %v472, 96
        %v519 = vpop.permute.xlu0 %518
        %v522 = vsel %vm483, %v515, 0
        %v525 = vsel %vm483, %v516, 0
        %527 = vmatpush.bf16.xpose.msra.mxu0 0
        %528 = vmatpush.bf16.xpose.msra.mxu0 0
        %529 = vmatpush.bf16.xpose.msra.mxu0 0
        %530 = vmatpush.bf16.xpose.msra.mxu0 0
        %531 = vmatpush.bf16.xpose.msra.mxu0 0
        %532 = vmatpush.bf16.xpose.msra.mxu0 0
        %533 = vmatpush.bf16.xpose.msra.mxu0 %v525
        %534 = vmatpush.bf16.xpose.msra.mxu0 %v522
        %535 = vmatmul.bf16.gmra.mxu0 %v485
        %v536 = vpop.f32.mrf.mxu0
        %v537 = vadd.f32 %v519, %v536
        %v538 = vpop.f32.mrf.mxu0
        %v539 = vadd.f32 %v519, %v538
        %540 = vdwg.mxu0
        %v545 = vunpack.c.l.b16 %v467
        %v546 = vunpack.c.l.b16 %v468
        %v547 = vunpack.c.l.b16 %v469
        %v548 = vunpack.c.l.b16 %v470
        %v549 = vpack.c.b16 %v546, %v545
        %v550 = vpack.c.b16 %v548, %v547
        %551 = vrot.lane.b32.xlu0 %v472, 64
        %v552 = vpop.permute.xlu0 %551
        %v555 = vsel %vm483, %v549, 0
        %v558 = vsel %vm483, %v550, 0
        %560 = vmatpush.bf16.xpose.msra.mxu0 0
        %561 = vmatpush.bf16.xpose.msra.mxu0 0
        %562 = vmatpush.bf16.xpose.msra.mxu0 0
        %563 = vmatpush.bf16.xpose.msra.mxu0 0
        %564 = vmatpush.bf16.xpose.msra.mxu0 0
        %565 = vmatpush.bf16.xpose.msra.mxu0 0
        %566 = vmatpush.bf16.xpose.msra.mxu0 %v558
        %567 = vmatpush.bf16.xpose.msra.mxu0 %v555
        %568 = vmatmul.bf16.gmra.mxu0 %v485
        %v569 = vpop.f32.mrf.mxu0
        %v570 = vadd.f32 %v552, %v569
        %v571 = vpop.f32.mrf.mxu0
        %v572 = vadd.f32 %v552, %v571
        %573 = vdwg.mxu0
        %v574 = vpack.c.bf16 %v503, %v503
        %v575 = vpack.c.bf16 %v505, %v505
        %v576 = vpack.c.bf16 %v537, %v537
        %v577 = vpack.c.bf16 %v539, %v539
        %vm578 = vcmask 64512
        %v580 = vsel %vm578, %v574, 0
        %v583 = vsel %vm578, %v576, 0
        %585 = vmatpush.bf16.xpose.msra.mxu0 0
        %586 = vmatpush.bf16.xpose.msra.mxu0 0
        %587 = vmatpush.bf16.xpose.msra.mxu0 0
        %588 = vmatpush.bf16.xpose.msra.mxu0 0
        %589 = vmatpush.bf16.xpose.msra.mxu0 0
        %590 = vmatpush.bf16.xpose.msra.mxu0 0
        %591 = vmatpush.bf16.xpose.msra.mxu0 0
        %592 = vmatpush.bf16.xpose.msra.mxu0 %v583
        %593 = vmatmul.bf16.gmra.mxu0 %v580
        %v594 = vpop.f32.mrf.mxu0
        %v595 = vadd.f32 0.0, %v594
        %v596 = vpop.f32.mrf.mxu0
        %597 = vdwg.mxu0
        %v599 = vsel %vm578, %v575, 0
        %v602 = vsel %vm578, %v577, 0
        %604 = vmatpush.bf16.xpose.msra.mxu0 0
        %605 = vmatpush.bf16.xpose.msra.mxu0 0
        %606 = vmatpush.bf16.xpose.msra.mxu0 0
        %607 = vmatpush.bf16.xpose.msra.mxu0 0
        %608 = vmatpush.bf16.xpose.msra.mxu0 0
        %609 = vmatpush.bf16.xpose.msra.mxu0 0
        %610 = vmatpush.bf16.xpose.msra.mxu0 0
        %611 = vmatpush.bf16.xpose.msra.mxu0 %v602
        %612 = vmatmul.bf16.gmra.mxu0 %v599
        %v613 = vpop.f32.mrf.mxu0
        %v614 = vadd.f32 0.0, %v613
        %v615 = vpop.f32.mrf.mxu0
        %616 = vdwg.mxu0
        %v617 = vsel %vm578, %v595, -inf
        %618 = vmax.xlane.f32.xlu0 %v617
        %v619 = vpop.xlane.xlu0 %618
        %v620 = vsel %vm578, %v614, -inf
        %621 = vmax.xlane.f32.xlu0 %v620
        %v622 = vpop.xlane.xlu0 %621
        %v623 = vsub.f32 %v595, %v619
        %v624 = vsub.f32 %v614, %v622
        %v625 = vmul.f32 %v623, 1.442695
        %v626 = vpow.pop %v625
        %v627 = vmul.f32 %v624, 1.442695
        %v628 = vpow.pop %v627
        %v629 = vsel %vm578, %v626, 0.0
        %630 = vadd.xlane.f32.xlu0 %v629
        %v631 = vpop.xlane.xlu0 %630
        %v632 = vsel %vm578, %v628, 0.0
        %633 = vadd.xlane.f32.xlu0 %v632
        %v634 = vpop.xlane.xlu0 %633
        %v635 = vrcp.pop %v631
        %v636 = vrcp.pop %v634
        %v637 = vmul.f32 %v626, %v635
        %v638 = vmul.f32 %v628, %v636
        %v639 = vpack.c.bf16 %v637, %v637
        %v640 = vpack.c.bf16 %v638, %v638
        %v641 = vpack.c.bf16 %v570, %v570
        %v642 = vpack.c.bf16 %v572, %v572
        %v644 = vsel %vm578, %v639, 0
        %vm646 = vcmask 1043456
        %v648 = vsel %vm646, %v641, 0
        %650 = vmatpush.bf16.msra.mxu0 0
        %651 = vmatpush.bf16.msra.mxu0 0
        %652 = vmatpush.bf16.msra.mxu0 0
        %653 = vmatpush.bf16.msra.mxu0 0
        %654 = vmatpush.bf16.msra.mxu0 0
        %655 = vmatpush.bf16.msra.mxu0 0
        %656 = vmatpush.bf16.msra.mxu0 0
        %657 = vmatpush.bf16.msra.mxu0 %v648
        %658 = vmatmul.bf16.gmra.mxu0 %v644
        %v659 = vpop.f32.mrf.mxu0
        %v660 = vadd.f32 0.0, %v659
        %v661 = vpop.f32.mrf.mxu0
        %662 = vdwg.mxu0
        %v664 = vsel %vm578, %v640, 0
        %v667 = vsel %vm646, %v642, 0
        %669 = vmatpush.bf16.msra.mxu0 0
        %670 = vmatpush.bf16.msra.mxu0 0
        %671 = vmatpush.bf16.msra.mxu0 0
        %672 = vmatpush.bf16.msra.mxu0 0
        %673 = vmatpush.bf16.msra.mxu0 0
        %674 = vmatpush.bf16.msra.mxu0 0
        %675 = vmatpush.bf16.msra.mxu0 0
        %676 = vmatpush.bf16.msra.mxu0 %v667
        %677 = vmatmul.bf16.gmra.mxu0 %v664
        %v678 = vpop.f32.mrf.mxu0
        %v679 = vadd.f32 0.0, %v678
        %v680 = vpop.f32.mrf.mxu0
        %681 = vdwg.mxu0
        %v683 = vunpack.c.l.b16 %v574
        %v684 = vpack.c.b16 %v683, %v683
        %685 = vrot.lane.b32.xlu0 %v684, 120
        %v686 = vpop.permute.xlu0 %685
        %v688 = vunpack.c.l.b16 %v576
        %v689 = vpack.c.b16 %v688, %v688
        %690 = vrot.lane.b32.xlu0 %v689, 120
        %v691 = vpop.permute.xlu0 %690
        %v693 = vsel %vm578, %v686, 0
        %v696 = vsel %vm578, %v691, 0
        %698 = vmatpush.bf16.xpose.msra.mxu0 0
        %699 = vmatpush.bf16.xpose.msra.mxu0 0
        %700 = vmatpush.bf16.xpose.msra.mxu0 0
        %701 = vmatpush.bf16.xpose.msra.mxu0 0
        %702 = vmatpush.bf16.xpose.msra.mxu0 0
        %703 = vmatpush.bf16.xpose.msra.mxu0 0
        %704 = vmatpush.bf16.xpose.msra.mxu0 0
        %705 = vmatpush.bf16.xpose.msra.mxu0 %v696
        %706 = vmatmul.bf16.gmra.mxu0 %v693
        %v707 = vpop.f32.mrf.mxu0
        %v708 = vadd.f32 0.0, %v707
        %v709 = vpop.f32.mrf.mxu0
        %710 = vdwg.mxu0
        %v712 = vunpack.c.l.b16 %v575
        %v713 = vpack.c.b16 %v712, %v712
        %714 = vrot.lane.b32.xlu0 %v713, 120
        %v715 = vpop.permute.xlu0 %714
        %v717 = vunpack.c.l.b16 %v577
        %v718 = vpack.c.b16 %v717, %v717
        %719 = vrot.lane.b32.xlu0 %v718, 120
        %v720 = vpop.permute.xlu0 %719
        %v722 = vsel %vm578, %v715, 0
        %v725 = vsel %vm578, %v720, 0
        %727 = vmatpush.bf16.xpose.msra.mxu0 0
        %728 = vmatpush.bf16.xpose.msra.mxu0 0
        %729 = vmatpush.bf16.xpose.msra.mxu0 0
        %730 = vmatpush.bf16.xpose.msra.mxu0 0
        %731 = vmatpush.bf16.xpose.msra.mxu0 0
        %732 = vmatpush.bf16.xpose.msra.mxu0 0
        %733 = vmatpush.bf16.xpose.msra.mxu0 0
        %734 = vmatpush.bf16.xpose.msra.mxu0 %v725
        %735 = vmatmul.bf16.gmra.mxu0 %v722
        %v736 = vpop.f32.mrf.mxu0
        %v737 = vadd.f32 0.0, %v736
        %v738 = vpop.f32.mrf.mxu0
        %739 = vdwg.mxu0
        %v740 = vsel %vm578, %v708, -inf
        %741 = vmax.xlane.f32.xlu0 %v740
        %v742 = vpop.xlane.xlu0 %741
        %v743 = vsel %vm578, %v737, -inf
        %744 = vmax.xlane.f32.xlu0 %v743
        %v745 = vpop.xlane.xlu0 %744
        %v746 = vsub.f32 %v708, %v742
        %v747 = vsub.f32 %v737, %v745
        %v748 = vmul.f32 %v746, 1.442695
        %v749 = vpow.pop %v748
        %v750 = vmul.f32 %v747, 1.442695
        %v751 = vpow.pop %v750
        %v752 = vsel %vm578, %v749, 0.0
        %753 = vadd.xlane.f32.xlu0 %v752
        %v754 = vpop.xlane.xlu0 %753
        %v755 = vsel %vm578, %v751, 0.0
        %756 = vadd.xlane.f32.xlu0 %v755
        %v757 = vpop.xlane.xlu0 %756
        %v758 = vrcp.pop %v754
        %v759 = vrcp.pop %v757
        %v760 = vmul.f32 %v749, %v758
        %v761 = vmul.f32 %v751, %v759
        %v762 = vpack.c.bf16 %v760, %v760
        %v763 = vpack.c.bf16 %v761, %v761
        %v765 = vunpack.c.l.b16 %v641
        %v766 = vpack.c.b16 %v765, %v765
        %767 = vrot.lane.b32.xlu0 %v766, 120
        %v768 = vpop.permute.xlu0 %767
        %v770 = vsel %vm578, %v762, 0
        %v773 = vsel %vm646, %v768, 0
        %775 = vmatpush.bf16.msra.mxu0 0
        %776 = vmatpush.bf16.msra.mxu0 0
        %777 = vmatpush.bf16.msra.mxu0 0
        %778 = vmatpush.bf16.msra.mxu0 0
        %779 = vmatpush.bf16.msra.mxu0 0
        %780 = vmatpush.bf16.msra.mxu0 0
        %781 = vmatpush.bf16.msra.mxu0 0
        %782 = vmatpush.bf16.msra.mxu0 %v773
        %783 = vmatmul.bf16.gmra.mxu0 %v770
        %v784 = vpop.f32.mrf.mxu0
        %v785 = vadd.f32 0.0, %v784
        %v786 = vpop.f32.mrf.mxu0
        %787 = vdwg.mxu0
        %v789 = vunpack.c.l.b16 %v642
        %v790 = vpack.c.b16 %v789, %v789
        %791 = vrot.lane.b32.xlu0 %v790, 120
        %v792 = vpop.permute.xlu0 %791
        %v794 = vsel %vm578, %v763, 0
        %v797 = vsel %vm646, %v792, 0
        %799 = vmatpush.bf16.msra.mxu0 0
        %800 = vmatpush.bf16.msra.mxu0 0
        %801 = vmatpush.bf16.msra.mxu0 0
        %802 = vmatpush.bf16.msra.mxu0 0
        %803 = vmatpush.bf16.msra.mxu0 0
        %804 = vmatpush.bf16.msra.mxu0 0
        %805 = vmatpush.bf16.msra.mxu0 0
        %806 = vmatpush.bf16.msra.mxu0 %v797
        %807 = vmatmul.bf16.gmra.mxu0 %v794
        %v808 = vpop.f32.mrf.mxu0
        %v809 = vadd.f32 0.0, %v808
        %v810 = vpop.f32.mrf.mxu0
        %811 = vdwg.mxu0
        %812 = vrot.lane.b32.xlu0 %v684, 112
        %v813 = vpop.permute.xlu0 %812
        %814 = vrot.lane.b32.xlu0 %v689, 112
        %v815 = vpop.permute.xlu0 %814
        %v817 = vsel %vm578, %v813, 0
        %v820 = vsel %vm578, %v815, 0
        %822 = vmatpush.bf16.xpose.msra.mxu0 0
        %823 = vmatpush.bf16.xpose.msra.mxu0 0
        %824 = vmatpush.bf16.xpose.msra.mxu0 0
        %825 = vmatpush.bf16.xpose.msra.mxu0 0
        %826 = vmatpush.bf16.xpose.msra.mxu0 0
        %827 = vmatpush.bf16.xpose.msra.mxu0 0
        %828 = vmatpush.bf16.xpose.msra.mxu0 0
        %829 = vmatpush.bf16.xpose.msra.mxu0 %v820
        %830 = vmatmul.bf16.gmra.mxu0 %v817
        %v831 = vpop.f32.mrf.mxu0
        %v832 = vadd.f32 0.0, %v831
        %v833 = vpop.f32.mrf.mxu0
        %834 = vdwg.mxu0
        %835 = vrot.lane.b32.xlu0 %v713, 112
        %v836 = vpop.permute.xlu0 %835
        %837 = vrot.lane.b32.xlu0 %v718, 112
        %v838 = vpop.permute.xlu0 %837
        %v840 = vsel %vm578, %v836, 0
        %v843 = vsel %vm578, %v838, 0
        %845 = vmatpush.bf16.xpose.msra.mxu0 0
        %846 = vmatpush.bf16.xpose.msra.mxu0 0
        %847 = vmatpush.bf16.xpose.msra.mxu0 0
        %848 = vmatpush.bf16.xpose.msra.mxu0 0
        %849 = vmatpush.bf16.xpose.msra.mxu0 0
        %850 = vmatpush.bf16.xpose.msra.mxu0 0
        %851 = vmatpush.bf16.xpose.msra.mxu0 0
        %852 = vmatpush.bf16.xpose.msra.mxu0 %v843
        %853 = vmatmul.bf16.gmra.mxu0 %v840
        %v854 = vpop.f32.mrf.mxu0
        %v855 = vadd.f32 0.0, %v854
        %v856 = vpop.f32.mrf.mxu0
        %857 = vdwg.mxu0
        %v858 = vsel %vm578, %v832, -inf
        %859 = vmax.xlane.f32.xlu0 %v858
        %v860 = vpop.xlane.xlu0 %859
        %v861 = vsel %vm578, %v855, -inf
        %862 = vmax.xlane.f32.xlu0 %v861
        %v863 = vpop.xlane.xlu0 %862
        %v864 = vsub.f32 %v832, %v860
        %v865 = vsub.f32 %v855, %v863
        %v866 = vmul.f32 %v864, 1.442695
        %v867 = vpow.pop %v866
        %v868 = vmul.f32 %v865, 1.442695
        %v869 = vpow.pop %v868
        %v870 = vsel %vm578, %v867, 0.0
        %871 = vadd.xlane.f32.xlu0 %v870
        %v872 = vpop.xlane.xlu0 %871
        %v873 = vsel %vm578, %v869, 0.0
        %874 = vadd.xlane.f32.xlu0 %v873
        %v875 = vpop.xlane.xlu0 %874
        %v876 = vrcp.pop %v872
        %v877 = vrcp.pop %v875
        %v878 = vmul.f32 %v867, %v876
        %v879 = vmul.f32 %v869, %v877
        %v880 = vpack.c.bf16 %v878, %v878
        %v881 = vpack.c.bf16 %v879, %v879
        %882 = vrot.lane.b32.xlu0 %v766, 112
        %v883 = vpop.permute.xlu0 %882
        %v885 = vsel %vm578, %v880, 0
        %v888 = vsel %vm646, %v883, 0
        %890 = vmatpush.bf16.msra.mxu0 0
        %891 = vmatpush.bf16.msra.mxu0 0
        %892 = vmatpush.bf16.msra.mxu0 0
        %893 = vmatpush.bf16.msra.mxu0 0
        %894 = vmatpush.bf16.msra.mxu0 0
        %895 = vmatpush.bf16.msra.mxu0 0
        %896 = vmatpush.bf16.msra.mxu0 0
        %897 = vmatpush.bf16.msra.mxu0 %v888
        %898 = vmatmul.bf16.gmra.mxu0 %v885
        %v899 = vpop.f32.mrf.mxu0
        %v900 = vadd.f32 0.0, %v899
        %v901 = vpop.f32.mrf.mxu0
        %902 = vdwg.mxu0
        %903 = vrot.lane.b32.xlu0 %v790, 112
        %v904 = vpop.permute.xlu0 %903
        %v906 = vsel %vm578, %v881, 0
        %v909 = vsel %vm646, %v904, 0
        %911 = vmatpush.bf16.msra.mxu0 0
        %912 = vmatpush.bf16.msra.mxu0 0
        %913 = vmatpush.bf16.msra.mxu0 0
        %914 = vmatpush.bf16.msra.mxu0 0
        %915 = vmatpush.bf16.msra.mxu0 0
        %916 = vmatpush.bf16.msra.mxu0 0
        %917 = vmatpush.bf16.msra.mxu0 0
        %918 = vmatpush.bf16.msra.mxu0 %v909
        %919 = vmatmul.bf16.gmra.mxu0 %v906
        %v920 = vpop.f32.mrf.mxu0
        %v921 = vadd.f32 0.0, %v920
        %v922 = vpop.f32.mrf.mxu0
        %923 = vdwg.mxu0
        %924 = vrot.lane.b32.xlu0 %v684, 104
        %v925 = vpop.permute.xlu0 %924
        %926 = vrot.lane.b32.xlu0 %v689, 104
        %v927 = vpop.permute.xlu0 %926
        %v929 = vsel %vm578, %v925, 0
        %v932 = vsel %vm578, %v927, 0
        %934 = vmatpush.bf16.xpose.msra.mxu0 0
        %935 = vmatpush.bf16.xpose.msra.mxu0 0
        %936 = vmatpush.bf16.xpose.msra.mxu0 0
        %937 = vmatpush.bf16.xpose.msra.mxu0 0
        %938 = vmatpush.bf16.xpose.msra.mxu0 0
        %939 = vmatpush.bf16.xpose.msra.mxu0 0
        %940 = vmatpush.bf16.xpose.msra.mxu0 0
        %941 = vmatpush.bf16.xpose.msra.mxu0 %v932
        %942 = vmatmul.bf16.gmra.mxu0 %v929
        %v943 = vpop.f32.mrf.mxu0
        %v944 = vadd.f32 0.0, %v943
        %v945 = vpop.f32.mrf.mxu0
        %946 = vdwg.mxu0
        %947 = vrot.lane.b32.xlu0 %v713, 104
        %v948 = vpop.permute.xlu0 %947
        %949 = vrot.lane.b32.xlu0 %v718, 104
        %v950 = vpop.permute.xlu0 %949
        %v952 = vsel %vm578, %v948, 0
        %v955 = vsel %vm578, %v950, 0
        %957 = vmatpush.bf16.xpose.msra.mxu0 0
        %958 = vmatpush.bf16.xpose.msra.mxu0 0
        %959 = vmatpush.bf16.xpose.msra.mxu0 0
        %960 = vmatpush.bf16.xpose.msra.mxu0 0
        %961 = vmatpush.bf16.xpose.msra.mxu0 0
        %962 = vmatpush.bf16.xpose.msra.mxu0 0
        %963 = vmatpush.bf16.xpose.msra.mxu0 0
        %964 = vmatpush.bf16.xpose.msra.mxu0 %v955
        %965 = vmatmul.bf16.gmra.mxu0 %v952
        %v966 = vpop.f32.mrf.mxu0
        %v967 = vadd.f32 0.0, %v966
        %v968 = vpop.f32.mrf.mxu0
        %969 = vdwg.mxu0
        %v970 = vsel %vm578, %v944, -inf
        %971 = vmax.xlane.f32.xlu0 %v970
        %v972 = vpop.xlane.xlu0 %971
        %v973 = vsel %vm578, %v967, -inf
        %974 = vmax.xlane.f32.xlu0 %v973
        %v975 = vpop.xlane.xlu0 %974
        %v976 = vsub.f32 %v944, %v972
        %v977 = vsub.f32 %v967, %v975
        %v978 = vmul.f32 %v976, 1.442695
        %v979 = vpow.pop %v978
        %v980 = vmul.f32 %v977, 1.442695
        %v981 = vpow.pop %v980
        %v982 = vsel %vm578, %v979, 0.0
        %983 = vadd.xlane.f32.xlu0 %v982
        %v984 = vpop.xlane.xlu0 %983
        %v985 = vsel %vm578, %v981, 0.0
        %986 = vadd.xlane.f32.xlu0 %v985
        %v987 = vpop.xlane.xlu0 %986
        %v988 = vrcp.pop %v984
        %v989 = vrcp.pop %v987
        %v990 = vmul.f32 %v979, %v988
        %v991 = vmul.f32 %v981, %v989
        %v992 = vpack.c.bf16 %v990, %v990
        %v993 = vpack.c.bf16 %v991, %v991
        %994 = vrot.lane.b32.xlu0 %v766, 104
        %v995 = vpop.permute.xlu0 %994
        %v997 = vsel %vm578, %v992, 0
        %v1000 = vsel %vm646, %v995, 0
        %1002 = vmatpush.bf16.msra.mxu0 0
        %1003 = vmatpush.bf16.msra.mxu0 0
        %1004 = vmatpush.bf16.msra.mxu0 0
        %1005 = vmatpush.bf16.msra.mxu0 0
        %1006 = vmatpush.bf16.msra.mxu0 0
        %1007 = vmatpush.bf16.msra.mxu0 0
        %1008 = vmatpush.bf16.msra.mxu0 0
        %1009 = vmatpush.bf16.msra.mxu0 %v1000
        %1010 = vmatmul.bf16.gmra.mxu0 %v997
        %v1011 = vpop.f32.mrf.mxu0
        %v1012 = vadd.f32 0.0, %v1011
        %v1013 = vpop.f32.mrf.mxu0
        %1014 = vdwg.mxu0
        %1015 = vrot.lane.b32.xlu0 %v790, 104
        %v1016 = vpop.permute.xlu0 %1015
        %v1018 = vsel %vm578, %v993, 0
        %v1021 = vsel %vm646, %v1016, 0
        %1023 = vmatpush.bf16.msra.mxu0 0
        %1024 = vmatpush.bf16.msra.mxu0 0
        %1025 = vmatpush.bf16.msra.mxu0 0
        %1026 = vmatpush.bf16.msra.mxu0 0
        %1027 = vmatpush.bf16.msra.mxu0 0
        %1028 = vmatpush.bf16.msra.mxu0 0
        %1029 = vmatpush.bf16.msra.mxu0 0
        %1030 = vmatpush.bf16.msra.mxu0 %v1021
        %1031 = vmatmul.bf16.gmra.mxu0 %v1018
        %v1032 = vpop.f32.mrf.mxu0
        %v1033 = vadd.f32 0.0, %v1032
        %v1034 = vpop.f32.mrf.mxu0
        %1035 = vdwg.mxu0
        %1038 = vrot.lane.b32.xlu0 %v785, 8
        %v1039 = vpop.permute.xlu0 %1038
        %1040 = vrot.lane.b32.xlu0 %v809, 8
        %v1041 = vpop.permute.xlu0 %1040
        %1046 = vrot.lane.b32.xlu0 %v900, 16
        %v1047 = vpop.permute.xlu0 %1046
        %1048 = vrot.lane.b32.xlu0 %v921, 16
        %v1049 = vpop.permute.xlu0 %1048
        %1054 = vrot.lane.b32.xlu0 %v1012, 24
        %v1055 = vpop.permute.xlu0 %1054
        %1056 = vrot.lane.b32.xlu0 %v1033, 24
        %v1057 = vpop.permute.xlu0 %1056
        %v1060 = vsel %vm578, %v660, %v1039
        %v1061 = vsel %vm578, %v679, %v1041
        %vm1062 = vcmask 130048
        %v1063 = vsel %vm1062, %v1060, %v1047
        %v1064 = vsel %vm1062, %v1061, %v1049
        %vm1065 = vcmask 195584
        %v1066 = vsel %vm1065, %v1063, %v1055
        %v1067 = vsel %vm1065, %v1064, %v1057
        %v1068 = vld [vmem:[%s3] sm:$0xf]
        %v1069 = vld [vmem:[%s3 + $0x4] sm:$0xf]
        %v1070 = vld [vmem:[%s3 + $0x8] sm:$0xf]
        %v1071 = vld [vmem:[%s3 + $0xc] sm:$0xf]
        %v1072 = vpack.c.bf16 %v1067, %v1066
        %v1073 = vperm.slane %v456, 0
        %v1078 = vunpack.c.l.b16 %v1068
        %v1079 = vunpack.c.l.b16 %v1069
        %v1080 = vunpack.c.l.b16 %v1070
        %v1081 = vunpack.c.l.b16 %v1071
        %v1082 = vpack.c.b16 %v1079, %v1078
        %v1083 = vpack.c.b16 %v1081, %v1080
        %v1085 = vsel %vm483, %v1072, 0
        %v1088 = vsel %vm483, %v1082, 0
        %v1091 = vsel %vm483, %v1083, 0
        %1093 = vmatpush.bf16.xpose.msra.mxu0 0
        %1094 = vmatpush.bf16.xpose.msra.mxu0 0
        %1095 = vmatpush.bf16.xpose.msra.mxu0 0
        %1096 = vmatpush.bf16.xpose.msra.mxu0 0
        %1097 = vmatpush.bf16.xpose.msra.mxu0 0
        %1098 = vmatpush.bf16.xpose.msra.mxu0 0
        %1099 = vmatpush.bf16.xpose.msra.mxu0 %v1091
        %1100 = vmatpush.bf16.xpose.msra.mxu0 %v1088
        %1101 = vmatmul.bf16.gmra.mxu0 %v1085
        %v1102 = vpop.f32.mrf.mxu0
        %v1103 = vadd.f32 %v1073, %v1102
        %v1104 = vpop.f32.mrf.mxu0
        %v1105 = vadd.f32 %v1073, %v1104
        %1106 = vdwg.mxu0
        %v1107 = vadd.f32 %v1103, %v452
        %v1108 = vadd.f32 %v1105, %v453
        %v1109 = vsel %vm483, %v1107, 0.0
        %1110 = vadd.xlane.f32.xlu0 %v1109
        %v1111 = vpop.xlane.xlu0 %1110
        %v1112 = vsel %vm483, %v1108, 0.0
        %1113 = vadd.xlane.f32.xlu0 %v1112
        %v1114 = vpop.xlane.xlu0 %1113
        %v1115 = vrcp.pop 32.0
        %v1116 = vmul.f32 32.0, %v1115
        %v1117 = vsub.f32 1.0, %v1116
        %v1118 = vmul.f32 %v1115, %v1117
        %v1119 = vadd.f32 %v1115, %v1118
        %vm1120 = vweird.f32 %v1115
        %v1121 = vsel %vm1120, %v1115, %v1119
        %v1122 = vmul.f32 %v1111, %v1121
        %v1123 = vmul.f32 %v1114, %v1121
        %v1124 = vsub.f32 %v1107, %v1122
        %v1125 = vsub.f32 %v1108, %v1123
        %v1126 = vmul.f32 %v1124, %v1124
        %v1127 = vmul.f32 %v1125, %v1125
        %v1128 = vsel %vm483, %v1126, 0.0
        %1129 = vadd.xlane.f32.xlu0 %v1128
        %v1130 = vpop.xlane.xlu0 %1129
        %v1131 = vsel %vm483, %v1127, 0.0
        %1132 = vadd.xlane.f32.xlu0 %v1131
        %v1133 = vpop.xlane.xlu0 %1132
        %v1134 = vmul.f32 %v1130, %v1121
        %v1135 = vmul.f32 %v1133, %v1121
        %v1136 = vadd.f32 %v1134, 1e-05
        %v1137 = vadd.f32 %v1135, 1e-05
        %v1138 = vrsqrt.pop %v1136
        %v1139 = vmul.f32 %v1138, %v1136
        %v1140 = vmul.f32 %v1139, %v1138
        %v1141 = vmul.f32 0.5, %v1140
        %v1142 = vsub.f32 1.5, %v1141
        %v1143 = vmul.f32 %v1138, %v1142
        %vm1144 = vweird.f32 %v1136
        %vm1145 = vweird.f32 %v1138
        %vm1146 = vmor %vm1144, %vm1145
        %v1147 = vsel %vm1146, %v1138, %v1143
        %v1148 = vrsqrt.pop %v1137
        %v1149 = vmul.f32 %v1148, %v1137
        %v1150 = vmul.f32 %v1149, %v1148
        %v1151 = vmul.f32 0.5, %v1150
        %v1152 = vsub.f32 1.5, %v1151
        %v1153 = vmul.f32 %v1148, %v1152
        %vm1154 = vweird.f32 %v1137
        %vm1155 = vweird.f32 %v1148
        %vm1156 = vmor %vm1154, %vm1155
        %v1157 = vsel %vm1156, %v1148, %v1153
        %v1158 = vmul.f32 %v1124, %v1147
        %v1159 = vmul.f32 %v1125, %v1157
        %v1160 = vperm.slane %v456, 1
        %v1161 = vmul.f32 %v1158, %v1160
        %v1162 = vmul.f32 %v1159, %v1160
        %v1163 = vperm.slane %v456, 2
        %v1164 = vadd.f32 %v1161, %v1163
        %v1165 = vadd.f32 %v1162, %v1163
        %v1166 = vld [vmem:[%s4] sm:$0xf]
        %v1167 = vld [vmem:[%s4 + $0x4] sm:$0xf]
        %v1168 = vld [vmem:[%s4 + $0x8] sm:$0xf]
        %v1169 = vld [vmem:[%s4 + $0xc] sm:$0xf]
        %v1170 = vld [vmem:[%s4 + $0x10] sm:$0xf]
        %v1171 = vld [vmem:[%s4 + $0x14] sm:$0xf]
        %v1172 = vld [vmem:[%s4 + $0x18] sm:$0xf]
        %v1173 = vld [vmem:[%s4 + $0x1c] sm:$0xf]
        %v1174 = vld [vmem:[%s4 + $0x20] sm:$0xf]
        %v1175 = vld [vmem:[%s4 + $0x24] sm:$0xf]
        %v1176 = vld [vmem:[%s4 + $0x28] sm:$0xf]
        %v1177 = vld [vmem:[%s4 + $0x2c] sm:$0xf]
        %v1178 = vpack.c.bf16 %v1165, %v1164
        %v1179 = vperm.slane %v458, 1
        %v1184 = vunpack.c.l.b16 %v1166
        %v1185 = vunpack.c.l.b16 %v1167
        %v1186 = vunpack.c.l.b16 %v1168
        %v1187 = vunpack.c.l.b16 %v1169
        %v1188 = vpack.c.b16 %v1185, %v1184
        %v1189 = vpack.c.b16 %v1187, %v1186
        %v1191 = vsel %vm483, %v1178, 0
        %v1194 = vsel %vm483, %v1188, 0
        %v1197 = vsel %vm483, %v1189, 0
        %1199 = vmatpush.bf16.xpose.msra.mxu0 0
        %1200 = vmatpush.bf16.xpose.msra.mxu0 0
        %1201 = vmatpush.bf16.xpose.msra.mxu0 0
        %1202 = vmatpush.bf16.xpose.msra.mxu0 0
        %1203 = vmatpush.bf16.xpose.msra.mxu0 0
        %1204 = vmatpush.bf16.xpose.msra.mxu0 0
        %1205 = vmatpush.bf16.xpose.msra.mxu0 %v1197
        %1206 = vmatpush.bf16.xpose.msra.mxu0 %v1194
        %1207 = vmatmul.bf16.gmra.mxu0 %v1191
        %v1208 = vpop.f32.mrf.mxu0
        %v1209 = vadd.f32 %v1179, %v1208
        %v1210 = vpop.f32.mrf.mxu0
        %v1211 = vadd.f32 %v1179, %v1210
        %1212 = vdwg.mxu0
        %v1213 = vpack.c.bf16 %v455, %v454
        %v1218 = vunpack.c.l.b16 %v1170
        %v1219 = vunpack.c.l.b16 %v1171
        %v1220 = vunpack.c.l.b16 %v1172
        %v1221 = vunpack.c.l.b16 %v1173
        %v1222 = vpack.c.b16 %v1219, %v1218
        %v1223 = vpack.c.b16 %v1221, %v1220
        %1225 = vrot.lane.b32.xlu0 %v1179, 96
        %v1226 = vpop.permute.xlu0 %1225
        %v1229 = vsel %vm483, %v1213, 0
        %v1232 = vsel %vm483, %v1222, 0
        %v1235 = vsel %vm483, %v1223, 0
        %1237 = vmatpush.bf16.xpose.msra.mxu0 0
        %1238 = vmatpush.bf16.xpose.msra.mxu0 0
        %1239 = vmatpush.bf16.xpose.msra.mxu0 0
        %1240 = vmatpush.bf16.xpose.msra.mxu0 0
        %1241 = vmatpush.bf16.xpose.msra.mxu0 0
        %1242 = vmatpush.bf16.xpose.msra.mxu0 0
        %1243 = vmatpush.bf16.xpose.msra.mxu0 %v1235
        %1244 = vmatpush.bf16.xpose.msra.mxu0 %v1232
        %1245 = vmatmul.bf16.gmra.mxu0 %v1229
        %v1246 = vpop.f32.mrf.mxu0
        %v1247 = vadd.f32 %v1226, %v1246
        %v1248 = vpop.f32.mrf.mxu0
        %v1249 = vadd.f32 %v1226, %v1248
        %1250 = vdwg.mxu0
        %v1255 = vunpack.c.l.b16 %v1174
        %v1256 = vunpack.c.l.b16 %v1175
        %v1257 = vunpack.c.l.b16 %v1176
        %v1258 = vunpack.c.l.b16 %v1177
        %v1259 = vpack.c.b16 %v1256, %v1255
        %v1260 = vpack.c.b16 %v1258, %v1257
        %1261 = vrot.lane.b32.xlu0 %v1179, 64
        %v1262 = vpop.permute.xlu0 %1261
        %v1265 = vsel %vm483, %v1259, 0
        %v1268 = vsel %vm483, %v1260, 0
        %1270 = vmatpush.bf16.xpose.msra.mxu0 0
        %1271 = vmatpush.bf16.xpose.msra.mxu0 0
        %1272 = vmatpush.bf16.xpose.msra.mxu0 0
        %1273 = vmatpush.bf16.xpose.msra.mxu0 0
        %1274 = vmatpush.bf16.xpose.msra.mxu0 0
        %1275 = vmatpush.bf16.xpose.msra.mxu0 0
        %1276 = vmatpush.bf16.xpose.msra.mxu0 %v1268
        %1277 = vmatpush.bf16.xpose.msra.mxu0 %v1265
        %1278 = vmatmul.bf16.gmra.mxu0 %v1229
        %v1279 = vpop.f32.mrf.mxu0
        %v1280 = vadd.f32 %v1262, %v1279
        %v1281 = vpop.f32.mrf.mxu0
        %v1282 = vadd.f32 %v1262, %v1281
        %1283 = vdwg.mxu0
        %v1284 = vpack.c.bf16 %v1209, %v1209
        %v1285 = vpack.c.bf16 %v1211, %v1211
        %v1286 = vpack.c.bf16 %v1247, %v1247
        %v1287 = vpack.c.bf16 %v1249, %v1249
        %v1289 = vsel %vm578, %v1284, 0
        %v1292 = vsel %vm578, %v1286, 0
        %1294 = vmatpush.bf16.xpose.msra.mxu0 0
        %1295 = vmatpush.bf16.xpose.msra.mxu0 0
        %1296 = vmatpush.bf16.xpose.msra.mxu0 0
        %1297 = vmatpush.bf16.xpose.msra.mxu0 0
        %1298 = vmatpush.bf16.xpose.msra.mxu0 0
        %1299 = vmatpush.bf16.xpose.msra.mxu0 0
        %1300 = vmatpush.bf16.xpose.msra.mxu0 0
        %1301 = vmatpush.bf16.xpose.msra.mxu0 %v1292
        %1302 = vmatmul.bf16.gmra.mxu0 %v1289
        %v1303 = vpop.f32.mrf.mxu0
        %v1304 = vadd.f32 0.0, %v1303
        %v1305 = vpop.f32.mrf.mxu0
        %1306 = vdwg.mxu0
        %v1308 = vsel %vm578, %v1285, 0
        %v1311 = vsel %vm578, %v1287, 0
        %1313 = vmatpush.bf16.xpose.msra.mxu0 0
        %1314 = vmatpush.bf16.xpose.msra.mxu0 0
        %1315 = vmatpush.bf16.xpose.msra.mxu0 0
        %1316 = vmatpush.bf16.xpose.msra.mxu0 0
        %1317 = vmatpush.bf16.xpose.msra.mxu0 0
        %1318 = vmatpush.bf16.xpose.msra.mxu0 0
        %1319 = vmatpush.bf16.xpose.msra.mxu0 0
        %1320 = vmatpush.bf16.xpose.msra.mxu0 %v1311
        %1321 = vmatmul.bf16.gmra.mxu0 %v1308
        %v1322 = vpop.f32.mrf.mxu0
        %v1323 = vadd.f32 0.0, %v1322
        %v1324 = vpop.f32.mrf.mxu0
        %1325 = vdwg.mxu0
        %v1326 = vsel %vm578, %v1304, -inf
        %1327 = vmax.xlane.f32.xlu0 %v1326
        %v1328 = vpop.xlane.xlu0 %1327
        %v1329 = vsel %vm578, %v1323, -inf
        %1330 = vmax.xlane.f32.xlu0 %v1329
        %v1331 = vpop.xlane.xlu0 %1330
        %v1332 = vsub.f32 %v1304, %v1328
        %v1333 = vsub.f32 %v1323, %v1331
        %v1334 = vmul.f32 %v1332, 1.442695
        %v1335 = vpow.pop %v1334
        %v1336 = vmul.f32 %v1333, 1.442695
        %v1337 = vpow.pop %v1336
        %v1338 = vsel %vm578, %v1335, 0.0
        %1339 = vadd.xlane.f32.xlu0 %v1338
        %v1340 = vpop.xlane.xlu0 %1339
        %v1341 = vsel %vm578, %v1337, 0.0
        %1342 = vadd.xlane.f32.xlu0 %v1341
        %v1343 = vpop.xlane.xlu0 %1342
        %v1344 = vrcp.pop %v1340
        %v1345 = vrcp.pop %v1343
        %v1346 = vmul.f32 %v1335, %v1344
        %v1347 = vmul.f32 %v1337, %v1345
        %v1348 = vadd.f32 %v1346, 0.0
        %v1349 = vadd.f32 %v1347, 0.0
        %v1350 = vpack.c.bf16 %v1346, %v1346
        %v1351 = vpack.c.bf16 %v1347, %v1347
        %v1352 = vpack.c.bf16 %v1280, %v1280
        %v1353 = vpack.c.bf16 %v1282, %v1282
        %v1355 = vsel %vm578, %v1350, 0
        %v1358 = vsel %vm646, %v1352, 0
        %1360 = vmatpush.bf16.msra.mxu0 0
        %1361 = vmatpush.bf16.msra.mxu0 0
        %1362 = vmatpush.bf16.msra.mxu0 0
        %1363 = vmatpush.bf16.msra.mxu0 0
        %1364 = vmatpush.bf16.msra.mxu0 0
        %1365 = vmatpush.bf16.msra.mxu0 0
        %1366 = vmatpush.bf16.msra.mxu0 0
        %1367 = vmatpush.bf16.msra.mxu0 %v1358
        %1368 = vmatmul.bf16.gmra.mxu0 %v1355
        %v1369 = vpop.f32.mrf.mxu0
        %v1370 = vadd.f32 0.0, %v1369
        %v1371 = vpop.f32.mrf.mxu0
        %1372 = vdwg.mxu0
        %v1374 = vsel %vm578, %v1351, 0
        %v1377 = vsel %vm646, %v1353, 0
        %1379 = vmatpush.bf16.msra.mxu0 0
        %1380 = vmatpush.bf16.msra.mxu0 0
        %1381 = vmatpush.bf16.msra.mxu0 0
        %1382 = vmatpush.bf16.msra.mxu0 0
        %1383 = vmatpush.bf16.msra.mxu0 0
        %1384 = vmatpush.bf16.msra.mxu0 0
        %1385 = vmatpush.bf16.msra.mxu0 0
        %1386 = vmatpush.bf16.msra.mxu0 %v1377
        %1387 = vmatmul.bf16.gmra.mxu0 %v1374
        %v1388 = vpop.f32.mrf.mxu0
        %v1389 = vadd.f32 0.0, %v1388
        %v1390 = vpop.f32.mrf.mxu0
        %1391 = vdwg.mxu0
        %v1393 = vunpack.c.l.b16 %v1284
        %v1394 = vpack.c.b16 %v1393, %v1393
        %1395 = vrot.lane.b32.xlu0 %v1394, 120
        %v1396 = vpop.permute.xlu0 %1395
        %v1398 = vunpack.c.l.b16 %v1286
        %v1399 = vpack.c.b16 %v1398, %v1398
        %1400 = vrot.lane.b32.xlu0 %v1399, 120
        %v1401 = vpop.permute.xlu0 %1400
        %v1403 = vsel %vm578, %v1396, 0
        %v1406 = vsel %vm578, %v1401, 0
        %1408 = vmatpush.bf16.xpose.msra.mxu0 0
        %1409 = vmatpush.bf16.xpose.msra.mxu0 0
        %1410 = vmatpush.bf16.xpose.msra.mxu0 0
        %1411 = vmatpush.bf16.xpose.msra.mxu0 0
        %1412 = vmatpush.bf16.xpose.msra.mxu0 0
        %1413 = vmatpush.bf16.xpose.msra.mxu0 0
        %1414 = vmatpush.bf16.xpose.msra.mxu0 0
        %1415 = vmatpush.bf16.xpose.msra.mxu0 %v1406
        %1416 = vmatmul.bf16.gmra.mxu0 %v1403
        %v1417 = vpop.f32.mrf.mxu0
        %v1418 = vadd.f32 0.0, %v1417
        %v1419 = vpop.f32.mrf.mxu0
        %1420 = vdwg.mxu0
        %v1422 = vunpack.c.l.b16 %v1285
        %v1423 = vpack.c.b16 %v1422, %v1422
        %1424 = vrot.lane.b32.xlu0 %v1423, 120
        %v1425 = vpop.permute.xlu0 %1424
        %v1427 = vunpack.c.l.b16 %v1287
        %v1428 = vpack.c.b16 %v1427, %v1427
        %1429 = vrot.lane.b32.xlu0 %v1428, 120
        %v1430 = vpop.permute.xlu0 %1429
        %v1432 = vsel %vm578, %v1425, 0
        %v1435 = vsel %vm578, %v1430, 0
        %1437 = vmatpush.bf16.xpose.msra.mxu0 0
        %1438 = vmatpush.bf16.xpose.msra.mxu0 0
        %1439 = vmatpush.bf16.xpose.msra.mxu0 0
        %1440 = vmatpush.bf16.xpose.msra.mxu0 0
        %1441 = vmatpush.bf16.xpose.msra.mxu0 0
        %1442 = vmatpush.bf16.xpose.msra.mxu0 0
        %1443 = vmatpush.bf16.xpose.msra.mxu0 0
        %1444 = vmatpush.bf16.xpose.msra.mxu0 %v1435
        %1445 = vmatmul.bf16.gmra.mxu0 %v1432
        %v1446 = vpop.f32.mrf.mxu0
        %v1447 = vadd.f32 0.0, %v1446
        %v1448 = vpop.f32.mrf.mxu0
        %1449 = vdwg.mxu0
        %v1450 = vsel %vm578, %v1418, -inf
        %1451 = vmax.xlane.f32.xlu0 %v1450
        %v1452 = vpop.xlane.xlu0 %1451
        %v1453 = vsel %vm578, %v1447, -inf
        %1454 = vmax.xlane.f32.xlu0 %v1453
        %v1455 = vpop.xlane.xlu0 %1454
        %v1456 = vsub.f32 %v1418, %v1452
        %v1457 = vsub.f32 %v1447, %v1455
        %v1458 = vmul.f32 %v1456, 1.442695
        %v1459 = vpow.pop %v1458
        %v1460 = vmul.f32 %v1457, 1.442695
        %v1461 = vpow.pop %v1460
        %v1462 = vsel %vm578, %v1459, 0.0
        %1463 = vadd.xlane.f32.xlu0 %v1462
        %v1464 = vpop.xlane.xlu0 %1463
        %v1465 = vsel %vm578, %v1461, 0.0
        %1466 = vadd.xlane.f32.xlu0 %v1465
        %v1467 = vpop.xlane.xlu0 %1466
        %v1468 = vrcp.pop %v1464
        %v1469 = vrcp.pop %v1467
        %v1470 = vmul.f32 %v1459, %v1468
        %v1471 = vmul.f32 %v1461, %v1469
        %v1472 = vadd.f32 %v1348, %v1470
        %v1473 = vadd.f32 %v1349, %v1471
        %v1474 = vpack.c.bf16 %v1470, %v1470
        %v1475 = vpack.c.bf16 %v1471, %v1471
        %v1477 = vunpack.c.l.b16 %v1352
        %v1478 = vpack.c.b16 %v1477, %v1477
        %1479 = vrot.lane.b32.xlu0 %v1478, 120
        %v1480 = vpop.permute.xlu0 %1479
        %v1482 = vsel %vm578, %v1474, 0
        %v1485 = vsel %vm646, %v1480, 0
        %1487 = vmatpush.bf16.msra.mxu0 0
        %1488 = vmatpush.bf16.msra.mxu0 0
        %1489 = vmatpush.bf16.msra.mxu0 0
        %1490 = vmatpush.bf16.msra.mxu0 0
        %1491 = vmatpush.bf16.msra.mxu0 0
        %1492 = vmatpush.bf16.msra.mxu0 0
        %1493 = vmatpush.bf16.msra.mxu0 0
        %1494 = vmatpush.bf16.msra.mxu0 %v1485
        %1495 = vmatmul.bf16.gmra.mxu0 %v1482
        %v1496 = vpop.f32.mrf.mxu0
        %v1497 = vadd.f32 0.0, %v1496
        %v1498 = vpop.f32.mrf.mxu0
        %1499 = vdwg.mxu0
        %v1501 = vunpack.c.l.b16 %v1353
        %v1502 = vpack.c.b16 %v1501, %v1501
        %1503 = vrot.lane.b32.xlu0 %v1502, 120
        %v1504 = vpop.permute.xlu0 %1503
        %v1506 = vsel %vm578, %v1475, 0
        %v1509 = vsel %vm646, %v1504, 0
        %1511 = vmatpush.bf16.msra.mxu0 0
        %1512 = vmatpush.bf16.msra.mxu0 0
        %1513 = vmatpush.bf16.msra.mxu0 0
        %1514 = vmatpush.bf16.msra.mxu0 0
        %1515 = vmatpush.bf16.msra.mxu0 0
        %1516 = vmatpush.bf16.msra.mxu0 0
        %1517 = vmatpush.bf16.msra.mxu0 0
        %1518 = vmatpush.bf16.msra.mxu0 %v1509
        %1519 = vmatmul.bf16.gmra.mxu0 %v1506
        %v1520 = vpop.f32.mrf.mxu0
        %v1521 = vadd.f32 0.0, %v1520
        %v1522 = vpop.f32.mrf.mxu0
        %1523 = vdwg.mxu0
        %1524 = vrot.lane.b32.xlu0 %v1394, 112
        %v1525 = vpop.permute.xlu0 %1524
        %1526 = vrot.lane.b32.xlu0 %v1399, 112
        %v1527 = vpop.permute.xlu0 %1526
        %v1529 = vsel %vm578, %v1525, 0
        %v1532 = vsel %vm578, %v1527, 0
        %1534 = vmatpush.bf16.xpose.msra.mxu0 0
        %1535 = vmatpush.bf16.xpose.msra.mxu0 0
        %1536 = vmatpush.bf16.xpose.msra.mxu0 0
        %1537 = vmatpush.bf16.xpose.msra.mxu0 0
        %1538 = vmatpush.bf16.xpose.msra.mxu0 0
        %1539 = vmatpush.bf16.xpose.msra.mxu0 0
        %1540 = vmatpush.bf16.xpose.msra.mxu0 0
        %1541 = vmatpush.bf16.xpose.msra.mxu0 %v1532
        %1542 = vmatmul.bf16.gmra.mxu0 %v1529
        %v1543 = vpop.f32.mrf.mxu0
        %v1544 = vadd.f32 0.0, %v1543
        %v1545 = vpop.f32.mrf.mxu0
        %1546 = vdwg.mxu0
        %1547 = vrot.lane.b32.xlu0 %v1423, 112
        %v1548 = vpop.permute.xlu0 %1547
        %1549 = vrot.lane.b32.xlu0 %v1428, 112
        %v1550 = vpop.permute.xlu0 %1549
        %v1552 = vsel %vm578, %v1548, 0
        %v1555 = vsel %vm578, %v1550, 0
        %1557 = vmatpush.bf16.xpose.msra.mxu0 0
        %1558 = vmatpush.bf16.xpose.msra.mxu0 0
        %1559 = vmatpush.bf16.xpose.msra.mxu0 0
        %1560 = vmatpush.bf16.xpose.msra.mxu0 0
        %1561 = vmatpush.bf16.xpose.msra.mxu0 0
        %1562 = vmatpush.bf16.xpose.msra.mxu0 0
        %1563 = vmatpush.bf16.xpose.msra.mxu0 0
        %1564 = vmatpush.bf16.xpose.msra.mxu0 %v1555
        %1565 = vmatmul.bf16.gmra.mxu0 %v1552
        %v1566 = vpop.f32.mrf.mxu0
        %v1567 = vadd.f32 0.0, %v1566
        %v1568 = vpop.f32.mrf.mxu0
        %1569 = vdwg.mxu0
        %v1570 = vsel %vm578, %v1544, -inf
        %1571 = vmax.xlane.f32.xlu0 %v1570
        %v1572 = vpop.xlane.xlu0 %1571
        %v1573 = vsel %vm578, %v1567, -inf
        %1574 = vmax.xlane.f32.xlu0 %v1573
        %v1575 = vpop.xlane.xlu0 %1574
        %v1576 = vsub.f32 %v1544, %v1572
        %v1577 = vsub.f32 %v1567, %v1575
        %v1578 = vmul.f32 %v1576, 1.442695
        %v1579 = vpow.pop %v1578
        %v1580 = vmul.f32 %v1577, 1.442695
        %v1581 = vpow.pop %v1580
        %v1582 = vsel %vm578, %v1579, 0.0
        %1583 = vadd.xlane.f32.xlu0 %v1582
        %v1584 = vpop.xlane.xlu0 %1583
        %v1585 = vsel %vm578, %v1581, 0.0
        %1586 = vadd.xlane.f32.xlu0 %v1585
        %v1587 = vpop.xlane.xlu0 %1586
        %v1588 = vrcp.pop %v1584
        %v1589 = vrcp.pop %v1587
        %v1590 = vmul.f32 %v1579, %v1588
        %v1591 = vmul.f32 %v1581, %v1589
        %v1592 = vadd.f32 %v1472, %v1590
        %v1593 = vadd.f32 %v1473, %v1591
        %v1594 = vpack.c.bf16 %v1590, %v1590
        %v1595 = vpack.c.bf16 %v1591, %v1591
        %1596 = vrot.lane.b32.xlu0 %v1478, 112
        %v1597 = vpop.permute.xlu0 %1596
        %v1599 = vsel %vm578, %v1594, 0
        %v1602 = vsel %vm646, %v1597, 0
        %1604 = vmatpush.bf16.msra.mxu0 0
        %1605 = vmatpush.bf16.msra.mxu0 0
        %1606 = vmatpush.bf16.msra.mxu0 0
        %1607 = vmatpush.bf16.msra.mxu0 0
        %1608 = vmatpush.bf16.msra.mxu0 0
        %1609 = vmatpush.bf16.msra.mxu0 0
        %1610 = vmatpush.bf16.msra.mxu0 0
        %1611 = vmatpush.bf16.msra.mxu0 %v1602
        %1612 = vmatmul.bf16.gmra.mxu0 %v1599
        %v1613 = vpop.f32.mrf.mxu0
        %v1614 = vadd.f32 0.0, %v1613
        %v1615 = vpop.f32.mrf.mxu0
        %1616 = vdwg.mxu0
        %1617 = vrot.lane.b32.xlu0 %v1502, 112
        %v1618 = vpop.permute.xlu0 %1617
        %v1620 = vsel %vm578, %v1595, 0
        %v1623 = vsel %vm646, %v1618, 0
        %1625 = vmatpush.bf16.msra.mxu0 0
        %1626 = vmatpush.bf16.msra.mxu0 0
        %1627 = vmatpush.bf16.msra.mxu0 0
        %1628 = vmatpush.bf16.msra.mxu0 0
        %1629 = vmatpush.bf16.msra.mxu0 0
        %1630 = vmatpush.bf16.msra.mxu0 0
        %1631 = vmatpush.bf16.msra.mxu0 0
        %1632 = vmatpush.bf16.msra.mxu0 %v1623
        %1633 = vmatmul.bf16.gmra.mxu0 %v1620
        %v1634 = vpop.f32.mrf.mxu0
        %v1635 = vadd.f32 0.0, %v1634
        %v1636 = vpop.f32.mrf.mxu0
        %1637 = vdwg.mxu0
        %1638 = vrot.lane.b32.xlu0 %v1394, 104
        %v1639 = vpop.permute.xlu0 %1638
        %1640 = vrot.lane.b32.xlu0 %v1399, 104
        %v1641 = vpop.permute.xlu0 %1640
        %v1643 = vsel %vm578, %v1639, 0
        %v1646 = vsel %vm578, %v1641, 0
        %1648 = vmatpush.bf16.xpose.msra.mxu0 0
        %1649 = vmatpush.bf16.xpose.msra.mxu0 0
        %1650 = vmatpush.bf16.xpose.msra.mxu0 0
        %1651 = vmatpush.bf16.xpose.msra.mxu0 0
        %1652 = vmatpush.bf16.xpose.msra.mxu0 0
        %1653 = vmatpush.bf16.xpose.msra.mxu0 0
        %1654 = vmatpush.bf16.xpose.msra.mxu0 0
        %1655 = vmatpush.bf16.xpose.msra.mxu0 %v1646
        %1656 = vmatmul.bf16.gmra.mxu0 %v1643
        %v1657 = vpop.f32.mrf.mxu0
        %v1658 = vadd.f32 0.0, %v1657
        %v1659 = vpop.f32.mrf.mxu0
        %1660 = vdwg.mxu0
        %1661 = vrot.lane.b32.xlu0 %v1423, 104
        %v1662 = vpop.permute.xlu0 %1661
        %1663 = vrot.lane.b32.xlu0 %v1428, 104
        %v1664 = vpop.permute.xlu0 %1663
        %v1666 = vsel %vm578, %v1662, 0
        %v1669 = vsel %vm578, %v1664, 0
        %1671 = vmatpush.bf16.xpose.msra.mxu0 0
        %1672 = vmatpush.bf16.xpose.msra.mxu0 0
        %1673 = vmatpush.bf16.xpose.msra.mxu0 0
        %1674 = vmatpush.bf16.xpose.msra.mxu0 0
        %1675 = vmatpush.bf16.xpose.msra.mxu0 0
        %1676 = vmatpush.bf16.xpose.msra.mxu0 0
        %1677 = vmatpush.bf16.xpose.msra.mxu0 0
        %1678 = vmatpush.bf16.xpose.msra.mxu0 %v1669
        %1679 = vmatmul.bf16.gmra.mxu0 %v1666
        %v1680 = vpop.f32.mrf.mxu0
        %v1681 = vadd.f32 0.0, %v1680
        %v1682 = vpop.f32.mrf.mxu0
        %1683 = vdwg.mxu0
        %v1684 = vsel %vm578, %v1658, -inf
        %1685 = vmax.xlane.f32.xlu0 %v1684
        %v1686 = vpop.xlane.xlu0 %1685
        %v1687 = vsel %vm578, %v1681, -inf
        %1688 = vmax.xlane.f32.xlu0 %v1687
        %v1689 = vpop.xlane.xlu0 %1688
        %v1690 = vsub.f32 %v1658, %v1686
        %v1691 = vsub.f32 %v1681, %v1689
        %v1692 = vmul.f32 %v1690, 1.442695
        %v1693 = vpow.pop %v1692
        %v1694 = vmul.f32 %v1691, 1.442695
        %v1695 = vpow.pop %v1694
        %v1696 = vsel %vm578, %v1693, 0.0
        %1697 = vadd.xlane.f32.xlu0 %v1696
        %v1698 = vpop.xlane.xlu0 %1697
        %v1699 = vsel %vm578, %v1695, 0.0
        %1700 = vadd.xlane.f32.xlu0 %v1699
        %v1701 = vpop.xlane.xlu0 %1700
        %v1702 = vrcp.pop %v1698
        %v1703 = vrcp.pop %v1701
        %v1704 = vmul.f32 %v1693, %v1702
        %v1705 = vmul.f32 %v1695, %v1703
        %v1706 = vadd.f32 %v1592, %v1704
        %v1707 = vadd.f32 %v1593, %v1705
        %v1708 = vpack.c.bf16 %v1704, %v1704
        %v1709 = vpack.c.bf16 %v1705, %v1705
        %1710 = vrot.lane.b32.xlu0 %v1478, 104
        %v1711 = vpop.permute.xlu0 %1710
        %v1713 = vsel %vm578, %v1708, 0
        %v1716 = vsel %vm646, %v1711, 0
        %1718 = vmatpush.bf16.msra.mxu0 0
        %1719 = vmatpush.bf16.msra.mxu0 0
        %1720 = vmatpush.bf16.msra.mxu0 0
        %1721 = vmatpush.bf16.msra.mxu0 0
        %1722 = vmatpush.bf16.msra.mxu0 0
        %1723 = vmatpush.bf16.msra.mxu0 0
        %1724 = vmatpush.bf16.msra.mxu0 0
        %1725 = vmatpush.bf16.msra.mxu0 %v1716
        %1726 = vmatmul.bf16.gmra.mxu0 %v1713
        %v1727 = vpop.f32.mrf.mxu0
        %v1728 = vadd.f32 0.0, %v1727
        %v1729 = vpop.f32.mrf.mxu0
        %1730 = vdwg.mxu0
        %1731 = vrot.lane.b32.xlu0 %v1502, 104
        %v1732 = vpop.permute.xlu0 %1731
        %v1734 = vsel %vm578, %v1709, 0
        %v1737 = vsel %vm646, %v1732, 0
        %1739 = vmatpush.bf16.msra.mxu0 0
        %1740 = vmatpush.bf16.msra.mxu0 0
        %1741 = vmatpush.bf16.msra.mxu0 0
        %1742 = vmatpush.bf16.msra.mxu0 0
        %1743 = vmatpush.bf16.msra.mxu0 0
        %1744 = vmatpush.bf16.msra.mxu0 0
        %1745 = vmatpush.bf16.msra.mxu0 0
        %1746 = vmatpush.bf16.msra.mxu0 %v1737
        %1747 = vmatmul.bf16.gmra.mxu0 %v1734
        %v1748 = vpop.f32.mrf.mxu0
        %v1749 = vadd.f32 0.0, %v1748
        %v1750 = vpop.f32.mrf.mxu0
        %1751 = vdwg.mxu0
        %1754 = vrot.lane.b32.xlu0 %v1497, 8
        %v1755 = vpop.permute.xlu0 %1754
        %1756 = vrot.lane.b32.xlu0 %v1521, 8
        %v1757 = vpop.permute.xlu0 %1756
        %1762 = vrot.lane.b32.xlu0 %v1614, 16
        %v1763 = vpop.permute.xlu0 %1762
        %1764 = vrot.lane.b32.xlu0 %v1635, 16
        %v1765 = vpop.permute.xlu0 %1764
        %1770 = vrot.lane.b32.xlu0 %v1728, 24
        %v1771 = vpop.permute.xlu0 %1770
        %1772 = vrot.lane.b32.xlu0 %v1749, 24
        %v1773 = vpop.permute.xlu0 %1772
        %v1776 = vsel %vm578, %v1370, %v1755
        %v1777 = vsel %vm578, %v1389, %v1757
        %v1778 = vsel %vm1062, %v1776, %v1763
        %v1779 = vsel %vm1062, %v1777, %v1765
        %v1780 = vsel %vm1065, %v1778, %v1771
        %v1781 = vsel %vm1065, %v1779, %v1773
        %v1782 = vld [vmem:[%s5] sm:$0xf]
        %v1783 = vld [vmem:[%s5 + $0x4] sm:$0xf]
        %v1784 = vld [vmem:[%s5 + $0x8] sm:$0xf]
        %v1785 = vld [vmem:[%s5 + $0xc] sm:$0xf]
        %v1786 = vpack.c.bf16 %v1781, %v1780
        %v1787 = vperm.slane %v456, 3
        %v1792 = vunpack.c.l.b16 %v1782
        %v1793 = vunpack.c.l.b16 %v1783
        %v1794 = vunpack.c.l.b16 %v1784
        %v1795 = vunpack.c.l.b16 %v1785
        %v1796 = vpack.c.b16 %v1793, %v1792
        %v1797 = vpack.c.b16 %v1795, %v1794
        %v1799 = vsel %vm483, %v1786, 0
        %v1802 = vsel %vm483, %v1796, 0
        %v1805 = vsel %vm483, %v1797, 0
        %1807 = vmatpush.bf16.xpose.msra.mxu0 0
        %1808 = vmatpush.bf16.xpose.msra.mxu0 0
        %1809 = vmatpush.bf16.xpose.msra.mxu0 0
        %1810 = vmatpush.bf16.xpose.msra.mxu0 0
        %1811 = vmatpush.bf16.xpose.msra.mxu0 0
        %1812 = vmatpush.bf16.xpose.msra.mxu0 0
        %1813 = vmatpush.bf16.xpose.msra.mxu0 %v1805
        %1814 = vmatpush.bf16.xpose.msra.mxu0 %v1802
        %1815 = vmatmul.bf16.gmra.mxu0 %v1799
        %v1816 = vpop.f32.mrf.mxu0
        %v1817 = vadd.f32 %v1787, %v1816
        %v1818 = vpop.f32.mrf.mxu0
        %v1819 = vadd.f32 %v1787, %v1818
        %1820 = vdwg.mxu0
        %v1821 = vmul.f32 %v1706, 0.25
        %v1822 = vmul.f32 %v1707, 0.25
        %v1823 = vadd.f32 %v1817, %v1164
        %v1824 = vadd.f32 %v1819, %v1165
        %v1825 = vsel %vm483, %v1823, 0.0
        %1826 = vadd.xlane.f32.xlu0 %v1825
        %v1827 = vpop.xlane.xlu0 %1826
        %v1828 = vsel %vm483, %v1824, 0.0
        %1829 = vadd.xlane.f32.xlu0 %v1828
        %v1830 = vpop.xlane.xlu0 %1829
        %v1831 = vmul.f32 %v1827, %v1121
        %v1832 = vmul.f32 %v1830, %v1121
        %v1833 = vsub.f32 %v1823, %v1831
        %v1834 = vsub.f32 %v1824, %v1832
        %v1835 = vmul.f32 %v1833, %v1833
        %v1836 = vmul.f32 %v1834, %v1834
        %v1837 = vsel %vm483, %v1835, 0.0
        %1838 = vadd.xlane.f32.xlu0 %v1837
        %v1839 = vpop.xlane.xlu0 %1838
        %v1840 = vsel %vm483, %v1836, 0.0
        %1841 = vadd.xlane.f32.xlu0 %v1840
        %v1842 = vpop.xlane.xlu0 %1841
        %v1843 = vmul.f32 %v1839, %v1121
        %v1844 = vmul.f32 %v1842, %v1121
        %v1845 = vadd.f32 %v1843, 1e-05
        %v1846 = vadd.f32 %v1844, 1e-05
        %v1847 = vrsqrt.pop %v1845
        %v1848 = vmul.f32 %v1847, %v1845
        %v1849 = vmul.f32 %v1848, %v1847
        %v1850 = vmul.f32 0.5, %v1849
        %v1851 = vsub.f32 1.5, %v1850
        %v1852 = vmul.f32 %v1847, %v1851
        %vm1853 = vweird.f32 %v1845
        %vm1854 = vweird.f32 %v1847
        %vm1855 = vmor %vm1853, %vm1854
        %v1856 = vsel %vm1855, %v1847, %v1852
        %v1857 = vrsqrt.pop %v1846
        %v1858 = vmul.f32 %v1857, %v1846
        %v1859 = vmul.f32 %v1858, %v1857
        %v1860 = vmul.f32 0.5, %v1859
        %v1861 = vsub.f32 1.5, %v1860
        %v1862 = vmul.f32 %v1857, %v1861
        %vm1863 = vweird.f32 %v1846
        %vm1864 = vweird.f32 %v1857
        %vm1865 = vmor %vm1863, %vm1864
        %v1866 = vsel %vm1865, %v1857, %v1862
        %v1867 = vmul.f32 %v1833, %v1856
        %v1868 = vmul.f32 %v1834, %v1866
        %v1869 = vperm.slane %v456, 4
        %v1870 = vmul.f32 %v1867, %v1869
        %v1871 = vmul.f32 %v1868, %v1869
        %v1872 = vperm.slane %v456, 5
        %v1873 = vadd.f32 %v1870, %v1872
        %v1874 = vadd.f32 %v1871, %v1872
        %v1875 = vld [vmem:[%s6] sm:$0xf]
        %v1876 = vld [vmem:[%s6 + $0x4] sm:$0xf]
        %v1877 = vld [vmem:[%s6 + $0x8] sm:$0xf]
        %v1878 = vld [vmem:[%s6 + $0xc] sm:$0xf]
        %v1879 = vld [vmem:[%s6 + $0x10] sm:$0xf]
        %v1880 = vld [vmem:[%s6 + $0x14] sm:$0xf]
        %v1881 = vld [vmem:[%s6 + $0x18] sm:$0xf]
        %v1882 = vld [vmem:[%s6 + $0x1c] sm:$0xf]
        %v1883 = vpack.c.bf16 %v1874, %v1873
        %v1884 = vld [vmem:[%s10] sm:$0x1]
        %v1886 = vperm.slane %v1884, 0
        %v1896 = vunpack.c.l.b16 %v1875
        %v1897 = vunpack.c.l.b16 %v1876
        %v1898 = vunpack.c.l.b16 %v1877
        %v1899 = vunpack.c.l.b16 %v1878
        %v1900 = vunpack.c.l.b16 %v1879
        %v1901 = vunpack.c.l.b16 %v1880
        %v1902 = vunpack.c.l.b16 %v1881
        %v1903 = vunpack.c.l.b16 %v1882
        %v1904 = vpack.c.b16 %v1897, %v1896
        %v1905 = vpack.c.b16 %v1899, %v1898
        %v1906 = vpack.c.b16 %v1901, %v1900
        %v1907 = vpack.c.b16 %v1903, %v1902
        %v1909 = vsel %vm483, %v1883, 0
        %v1912 = vsel %vm483, %v1904, 0
        %v1915 = vsel %vm483, %v1905, 0
        %v1918 = vsel %vm483, %v1906, 0
        %v1921 = vsel %vm483, %v1907, 0
        %1923 = vmatpush.bf16.xpose.msra.mxu0 0
        %1924 = vmatpush.bf16.xpose.msra.mxu0 0
        %1925 = vmatpush.bf16.xpose.msra.mxu0 0
        %1926 = vmatpush.bf16.xpose.msra.mxu0 0
        %1927 = vmatpush.bf16.xpose.msra.mxu0 %v1921
        %1928 = vmatpush.bf16.xpose.msra.mxu0 %v1918
        %1929 = vmatpush.bf16.xpose.msra.mxu0 %v1915
        %1930 = vmatpush.bf16.xpose.msra.mxu0 %v1912
        %1931 = vmatmul.bf16.gmra.mxu0 %v1909
        %v1932 = vpop.f32.mrf.mxu0
        %v1933 = vadd.f32 %v1886, %v1932
        %v1934 = vpop.f32.mrf.mxu0
        %v1935 = vadd.f32 %v1886, %v1934
        %1936 = vdwg.mxu0
        %v1937 = vmax.f32 %v1933, 0.0
        %v1938 = vmax.f32 %v1935, 0.0
        %v1939 = vld [vmem:[%s7] sm:$0xf]
        %v1940 = vld [vmem:[%s7 + $0x4] sm:$0xf]
        %v1941 = vld [vmem:[%s7 + $0x8] sm:$0xf]
        %v1942 = vld [vmem:[%s7 + $0xc] sm:$0xf]
        %v1943 = vpack.c.bf16 %v1938, %v1937
        %v1944 = vperm.slane %v456, 6
        %v1949 = vunpack.c.l.b16 %v1939
        %v1950 = vunpack.c.l.b16 %v1940
        %v1951 = vunpack.c.l.b16 %v1941
        %v1952 = vunpack.c.l.b16 %v1942
        %v1953 = vpack.c.b16 %v1950, %v1949
        %v1954 = vpack.c.b16 %v1952, %v1951
        %vm1955 = vcmask 523264
        %v1957 = vsel %vm1955, %v1943, 0
        %v1960 = vsel %vm1955, %v1953, 0
        %v1963 = vsel %vm1955, %v1954, 0
        %1965 = vmatpush.bf16.xpose.msra.mxu0 0
        %1966 = vmatpush.bf16.xpose.msra.mxu0 0
        %1967 = vmatpush.bf16.xpose.msra.mxu0 0
        %1968 = vmatpush.bf16.xpose.msra.mxu0 0
        %1969 = vmatpush.bf16.xpose.msra.mxu0 0
        %1970 = vmatpush.bf16.xpose.msra.mxu0 0
        %1971 = vmatpush.bf16.xpose.msra.mxu0 %v1963
        %1972 = vmatpush.bf16.xpose.msra.mxu0 %v1960
        %1973 = vmatmul.bf16.gmra.mxu0 %v1957
        %v1974 = vpop.f32.mrf.mxu0
        %v1975 = vadd.f32 %v1944, %v1974
        %v1976 = vpop.f32.mrf.mxu0
        %v1977 = vadd.f32 %v1944, %v1976
        %1978 = vdwg.mxu0
        %v1979 = vadd.f32 %v1975, %v1873
        %v1980 = vadd.f32 %v1977, %v1874
        %v1981 = vsel %vm483, %v1979, 0.0
        %1982 = vadd.xlane.f32.xlu0 %v1981
        %v1983 = vpop.xlane.xlu0 %1982
        %v1984 = vsel %vm483, %v1980, 0.0
        %1985 = vadd.xlane.f32.xlu0 %v1984
        %v1986 = vpop.xlane.xlu0 %1985
        %v1987 = vmul.f32 %v1983, %v1121
        %v1988 = vmul.f32 %v1986, %v1121
        %v1989 = vsub.f32 %v1979, %v1987
        %v1990 = vsub.f32 %v1980, %v1988
        %v1991 = vmul.f32 %v1989, %v1989
        %v1992 = vmul.f32 %v1990, %v1990
        %v1993 = vsel %vm483, %v1991, 0.0
        %1994 = vadd.xlane.f32.xlu0 %v1993
        %v1995 = vpop.xlane.xlu0 %1994
        %v1996 = vsel %vm483, %v1992, 0.0
        %1997 = vadd.xlane.f32.xlu0 %v1996
        %v1998 = vpop.xlane.xlu0 %1997
        %v1999 = vmul.f32 %v1995, %v1121
        %v2000 = vmul.f32 %v1998, %v1121
        %v2001 = vadd.f32 %v1999, 1e-05
        %v2002 = vadd.f32 %v2000, 1e-05
        %v2003 = vrsqrt.pop %v2001
        %v2004 = vmul.f32 %v2003, %v2001
        %v2005 = vmul.f32 %v2004, %v2003
        %v2006 = vmul.f32 0.5, %v2005
        %v2007 = vsub.f32 1.5, %v2006
        %v2008 = vmul.f32 %v2003, %v2007
        %vm2009 = vweird.f32 %v2001
        %vm2010 = vweird.f32 %v2003
        %vm2011 = vmor %vm2009, %vm2010
        %v2012 = vsel %vm2011, %v2003, %v2008
        %v2013 = vrsqrt.pop %v2002
        %v2014 = vmul.f32 %v2013, %v2002
        %v2015 = vmul.f32 %v2014, %v2013
        %v2016 = vmul.f32 0.5, %v2015
        %v2017 = vsub.f32 1.5, %v2016
        %v2018 = vmul.f32 %v2013, %v2017
        %vm2019 = vweird.f32 %v2002
        %vm2020 = vweird.f32 %v2013
        %vm2021 = vmor %vm2019, %vm2020
        %v2022 = vsel %vm2021, %v2013, %v2018
        %v2023 = vmul.f32 %v1989, %v2012
        %v2024 = vmul.f32 %v1990, %v2022
        %v2025 = vperm.slane %v456, 7
        %v2026 = vmul.f32 %v2023, %v2025
        %v2027 = vmul.f32 %v2024, %v2025
        %v2028 = vperm.slane %v457, 0
        %v2029 = vadd.f32 %v2026, %v2028
        %v2030 = vadd.f32 %v2027, %v2028
        %v2031 = vmul.f32 %v2029, %v1164
        %v2032 = vmul.f32 %v2030, %v1165
        %v2033 = vsel %vm483, %v2031, 0.0
        %2034 = vadd.xlane.f32.xlu0 %v2033
        %v2035 = vpop.xlane.xlu0 %2034
        %v2036 = vsel %vm483, %v2032, 0.0
        %2037 = vadd.xlane.f32.xlu0 %v2036
        %v2038 = vpop.xlane.xlu0 %2037
        %v2039 = vrot.slane %v2035, 4
        %v2040 = vmax.f32 %v2035, %v2039
        %v2041 = vrot.slane %v2040, 2
        %v2042 = vmax.f32 %v2040, %v2041
        %v2043 = vrot.slane %v2042, 1
        %v2044 = vmax.f32 %v2042, %v2043
        %v2045 = vrot.slane %v2038, 4
        %v2046 = vmax.f32 %v2038, %v2045
        %v2047 = vrot.slane %v2046, 2
        %v2048 = vmax.f32 %v2046, %v2047
        %v2049 = vrot.slane %v2048, 1
        %v2050 = vmax.f32 %v2048, %v2049
        %v2051 = vsub.f32 %v2035, %v2044
        %v2052 = vsub.f32 %v2038, %v2050
        %v2053 = vmul.f32 %v2051, 1.442695
        %v2054 = vpow.pop %v2053
        %v2055 = vmul.f32 %v2052, 1.442695
        %v2056 = vpow.pop %v2055
        %v2057 = vrot.slane %v2054, 4
        %v2058 = vadd.f32 %v2054, %v2057
        %v2059 = vrot.slane %v2058, 2
        %v2060 = vadd.f32 %v2058, %v2059
        %v2061 = vrot.slane %v2060, 1
        %v2062 = vadd.f32 %v2060, %v2061
        %v2063 = vrot.slane %v2056, 4
        %v2064 = vadd.f32 %v2056, %v2063
        %v2065 = vrot.slane %v2064, 2
        %v2066 = vadd.f32 %v2064, %v2065
        %v2067 = vrot.slane %v2066, 1
        %v2068 = vadd.f32 %v2066, %v2067
        %v2069 = vrcp.pop %v2062
        %v2070 = vrcp.pop %v2068
        %v2071 = vmul.f32 %v2054, %v2069
        %v2072 = vmul.f32 %v2056, %v2070
        %v2073 = vmul.f32 %v2029, %v2071
        %v2074 = vmul.f32 %v2030, %v2072
        %v2075 = vadd.f32 %v2073, %v2029
        %v2076 = vadd.f32 %v2074, %v2030
        %v2077 = vsel %vm483, %v2075, 0.0
        %2078 = vadd.xlane.f32.xlu0 %v2077
        %v2079 = vpop.xlane.xlu0 %2078
        %v2080 = vsel %vm483, %v2076, 0.0
        %2081 = vadd.xlane.f32.xlu0 %v2080
        %v2082 = vpop.xlane.xlu0 %2081
        %v2083 = vmul.f32 %v2079, %v1121
        %v2084 = vmul.f32 %v2082, %v1121
        %v2085 = vsub.f32 %v2075, %v2083
        %v2086 = vsub.f32 %v2076, %v2084
        %v2087 = vmul.f32 %v2085, %v2085
        %v2088 = vmul.f32 %v2086, %v2086
        %v2089 = vsel %vm483, %v2087, 0.0
        %2090 = vadd.xlane.f32.xlu0 %v2089
        %v2091 = vpop.xlane.xlu0 %2090
        %v2092 = vsel %vm483, %v2088, 0.0
        %2093 = vadd.xlane.f32.xlu0 %v2092
        %v2094 = vpop.xlane.xlu0 %2093
        %v2095 = vmul.f32 %v2091, %v1121
        %v2096 = vmul.f32 %v2094, %v1121
        %v2097 = vadd.f32 %v2095, 1e-05
        %v2098 = vadd.f32 %v2096, 1e-05
        %v2099 = vrsqrt.pop %v2097
        %v2100 = vmul.f32 %v2099, %v2097
        %v2101 = vmul.f32 %v2100, %v2099
        %v2102 = vmul.f32 0.5, %v2101
        %v2103 = vsub.f32 1.5, %v2102
        %v2104 = vmul.f32 %v2099, %v2103
        %vm2105 = vweird.f32 %v2097
        %vm2106 = vweird.f32 %v2099
        %vm2107 = vmor %vm2105, %vm2106
        %v2108 = vsel %vm2107, %v2099, %v2104
        %v2109 = vrsqrt.pop %v2098
        %v2110 = vmul.f32 %v2109, %v2098
        %v2111 = vmul.f32 %v2110, %v2109
        %v2112 = vmul.f32 0.5, %v2111
        %v2113 = vsub.f32 1.5, %v2112
        %v2114 = vmul.f32 %v2109, %v2113
        %vm2115 = vweird.f32 %v2098
        %vm2116 = vweird.f32 %v2109
        %vm2117 = vmor %vm2115, %vm2116
        %v2118 = vsel %vm2117, %v2109, %v2114
        %v2119 = vmul.f32 %v2085, %v2108
        %v2120 = vmul.f32 %v2086, %v2118
        %v2121 = vperm.slane %v457, 1
        %v2122 = vmul.f32 %v2119, %v2121
        %v2123 = vmul.f32 %v2120, %v2121
        %v2124 = vperm.slane %v457, 2
        %v2125 = vadd.f32 %v2122, %v2124
        %v2126 = vadd.f32 %v2123, %v2124
        %2127 = vst.msk [vmem:[%s424] sm:$0xff] %vm483, %v2125
        %2128 = vst.msk [vmem:[%s424 + $0x8] sm:$0xff] %vm483, %v2126
        %2129 = vst.msk [vmem:[%s449] sm:$0xff] %vm578, %v1821
        %2130 = vst.msk [vmem:[%s449 + $0x8] sm:$0xff] %vm578, %v1822
        %s2131 = sand.u32 %s276, 1
        %s2132 = scalar_lea.sflag [#allocation3], %s2131
        %s2133 = sand.u32 %s276, 1
        %s2134 = smul.addr %s2133, 16
        %s2135 = scalar_lea.vmem [#allocation2], %s2134
        %s2136 = smul.u32 2, %s27
        %p2137 = scmp.lt.s32.totalorder %s2136, 3
        %s2138 = scalar_select %p2137, %s2136, 3
        %s2139 = smul.addr %s2138, 8
        %s2140 = scalar_lea.vmem %s12, %s2139
        // Predicated region
        $region65: #{tpu_custom_call.1} parent=63 // pred_check
          %p2141 = pneg %p286
        $region66: #{tpu_custom_call.1} parent=63 // pred_check_branch
          %2143 = sbr.rel (%p2141) target = $region68
        $region67: #{tpu_custom_call.1} parent=63 // pred_region
          %s2144 = smul.u32 2, %s27
          %2146 = vsyncadd %s2132, 0
          %s2147 = smul.addr %s2144, 8
          %s2148 = scalar_lea.hbm %s11, %s2147
          %s2149 = sshll.u32 %s2135, 4
          %s2150 = int_to_ptr.vmem [resolvable:$true] %s2149
          %s2151 = sshll.u32 %s2148, 4
          %s2152 = int_to_ptr.hbm [resolvable:$true] %s2151
          %2157 = dma.vmem_to_hbm [thread:$0]  %s2150, 256, %s2152, %s2132, 128, 128, 8
        $region68: #{tpu_custom_call.1} parent=63 // pred_fallthru
          _
        // Predicated region
        $region69: #{tpu_custom_call.1} parent=63 // pred_check
          %p2158 = pneg %p312
        $region70: #{tpu_custom_call.1} parent=63 // pred_check_branch
          %2160 = sbr.rel (%p2158) target = $region72
        $region71: #{tpu_custom_call.1} parent=63 // pred_region
          %s2161 = smul.u32 2, %s27
        $region72: #{tpu_custom_call.1} parent=63 // pred_fallthru
          _
      $region64: #{tpu_custom_call.1} parent=5 // pred_fallthru
        _
      %p2162 = scmp.le.s32.totalorder 2, %s22
      // Predicated region
      $region73: #{tpu_custom_call.1} parent=5 // pred_check
        %p2163 = pneg %p2162
      $region74: #{tpu_custom_call.1} parent=5 // pred_check_branch
        %2165 = sbr.rel (%p2163) target = $region76
      $region75: #{tpu_custom_call.1} parent=5 // pred_region
        %s2166 = ssub.s32 %s22, 2
        // Predicated region
        $region77: #{tpu_custom_call.1} parent=75 // pred_check
          %p2167 = pneg %p292
        $region78: #{tpu_custom_call.1} parent=75 // pred_check_branch
          %2169 = sbr.rel (%p2167) target = $region80
        $region79: #{tpu_custom_call.1} parent=75 // pred_region
          %s2170 = sand.u32 %s277, 1
          %s2171 = scalar_lea.sflag [#allocation3], %s2170
          %s2172 = sand.u32 %s277, 1
          %s2173 = smul.addr %s2172, 16
          %s2174 = scalar_lea.vmem [#allocation2], %s2173
          %2176 = dma.done %s2171, 256
        $region80: #{tpu_custom_call.1} parent=75 // pred_fallthru
          _
        // Predicated region
        $region81: #{tpu_custom_call.1} parent=75 // pred_check
          %p2177 = pneg %p318
        $region82: #{tpu_custom_call.1} parent=75 // pred_check_branch
          %2179 = sbr.rel (%p2177) target = $region84
        $region83: #{tpu_custom_call.1} parent=75 // pred_region
          %s2180 = smul.u32 2, %s28
          %p2181 = scmp.lt.s32.totalorder %s2180, 3
          %s2182 = scalar_select %p2181, %s2180, 3
          %s2183 = smul.addr %s2182, 8
          %s2184 = scalar_lea.vmem %s12, %s2183
        $region84: #{tpu_custom_call.1} parent=75 // pred_fallthru
          _
      $region76: #{tpu_custom_call.1} parent=5 // pred_fallthru
        _
    $region6: #{tpu_custom_call.1} parent=1 // loop_footer
      %s26 = sadd.s32 1, %s22
    $region7: #{tpu_custom_call.1} parent=1 // loop_footer_branch
      %21 = sbr.rel target = $region3
    $region8: #{tpu_custom_call.1} parent=1 // loop_exit
      _
    %2185 = vsyncpa [#allocation3], 1
    %s2186 = scalar_lea.sflag [#allocation3], 1
    %2187 = vsyncpa %s2186, 1

// kernel: tpu_custom_call.1
$region0: #{tpu_custom_call.1}
  #allocation0 [shape = 'u32[]', space=smem, size = 0x4, offset = 0x4, fixed_abs, tag = 'smem constant byte address 0x4 - core index']
  #allocation1 [shape = 'u32[72,128]{1,0:T(1,128)}', space=vmem, size = 0x9000, scoped, tag = 'internal scratch']
  %s0 = inlined_call_operand.vmem [shape: f32[32,32], index: 0, kind: input, shape index: {}]
  %s1 = inlined_call_operand.vmem [shape: f32[32,32], index: 1, kind: input, shape index: {}]
  %s2 = inlined_call_operand.vmem [shape: bf16[96,32], index: 2, kind: input, shape index: {}]
  %s3 = inlined_call_operand.vmem [shape: bf16[32,32], index: 3, kind: input, shape index: {}]
  %s4 = inlined_call_operand.vmem [shape: bf16[96,32], index: 4, kind: input, shape index: {}]
  %s5 = inlined_call_operand.vmem [shape: bf16[32,32], index: 5, kind: input, shape index: {}]
  %s6 = inlined_call_operand.vmem [shape: bf16[64,32], index: 6, kind: input, shape index: {}]
  %s7 = inlined_call_operand.vmem [shape: bf16[32,64], index: 7, kind: input, shape index: {}]
  %s8 = inlined_call_operand.vmem [shape: f32[2,96], index: 8, kind: input, shape index: {}]
  %s9 = inlined_call_operand.vmem [shape: f32[11,32], index: 9, kind: input, shape index: {}]
  %s10 = inlined_call_operand.vmem [shape: f32[1,64], index: 10, kind: input, shape index: {}]
  %s11 = inlined_call_operand.hbm [shape: f32[32,32], index: 11, kind: output, shape index: {0}]
  %s12 = inlined_call_operand.vmem [shape: f32[32,8], index: 12, kind: output, shape index: {1}]
  %13 = xla_tuple %s11, %s12
  %s14 = sld [smem:[#allocation0]]
  $region85: #{tpu_custom_call.1} parent=0
    _
  %s16 = ssub.s32 1, %s14
  %s17 = scalar_select 0, %s16, %s14
  $region1: #{tpu_custom_call.1} parent=0
    #allocation2 [shape = 'u8[16384]{0}', space=vmem, size = 0x4000, scoped, tag = 'output window, operand 0']
    #allocation3 [shape = 's32[2]{0}', space=sflag, size = 0x8, scoped, tag = 'scoped memory for tpu_custom_call.1']
    %18 = vsyncpa [#allocation3], 0
    %s19 = scalar_lea.sflag [#allocation3], 1
    %20 = vsyncpa %s19, 0
    loop: start=0, step=1, limit=4
    $region2: #{tpu_custom_call.1} parent=1 // loop_pre_header
      _
    $region3: #{tpu_custom_call.1} parent=1 // loop_header
      %s22 = sphi 0, %s26
      %p23 = scmp.ge.s32.totalorder %s22, 4
      %s32 = sphi 0, %s34
      %s35 = sphi 0, %s32
      %s36 = sphi 0, %s35
      %s52 = sphi 0, %s36
      %s58 = sphi 0, %s60
      %s61 = sphi 0, %s58
      %s62 = sphi 0, %s61
      %s78 = sphi 0, %s62
      %s82 = sphi 0, %s82
      %s84 = sphi 0, %s82
      %s85 = sphi 0, %s84
      %s99 = sphi 0, %s85
      %s103 = sphi 0, %s103
      %s105 = sphi 0, %s103
      %s106 = sphi 0, %s105
      %s120 = sphi 0, %s106
      %s124 = sphi 0, %s124
      %s126 = sphi 0, %s124
      %s127 = sphi 0, %s126
      %s141 = sphi 0, %s127
      %s145 = sphi 0, %s145
      %s147 = sphi 0, %s145
      %s148 = sphi 0, %s147
      %s162 = sphi 0, %s148
      %s166 = sphi 0, %s166
      %s168 = sphi 0, %s166
      %s169 = sphi 0, %s168
      %s183 = sphi 0, %s169
      %s187 = sphi 0, %s187
      %s189 = sphi 0, %s187
      %s190 = sphi 0, %s189
      %s204 = sphi 0, %s190
      %s208 = sphi 0, %s208
      %s210 = sphi 0, %s208
      %s211 = sphi 0, %s210
      %s225 = sphi 0, %s211
      %s229 = sphi 0, %s229
      %s231 = sphi 0, %s229
      %s232 = sphi 0, %s231
      %s246 = sphi 0, %s232
      %s250 = sphi 0, %s250
      %s252 = sphi 0, %s250
      %s253 = sphi 0, %s252
      %s267 = sphi 0, %s253
      %s273 = sphi 0, %s275
      %s276 = sphi 0, %s273
      %s277 = sphi 0, %s276
      %s293 = sphi 0, %s277
      %s299 = sphi 0, %s301
      %s302 = sphi 0, %s299
      %s303 = sphi 0, %s302
      %s319 = sphi 0, %s303
    $region4: #{tpu_custom_call.1} parent=1 // loop_header_branch
      %25 = sbr.rel (%p23) target = $region8
    $region5: #{tpu_custom_call.1} parent=1 // loop_body
      %s27 = ssub.s32 %s22, 1
      %s28 = ssub.s32 %s22, 2
      %s29 = sadd.s32 %s22, 1
      %s30 = ssub.s32 %s22, %s29
      %p31 = scmp.eq.s32.totalorder %s30, 0
      %s33 = sadd.s32 %s32, 1
      %s34 = scalar_select %p31, %s32, %s33
      %p37 = pneg %p31
      %p38 = scmp.eq.s32.totalorder %s22, 1
      %p39 = por %p37, %p38
      %p40 = scmp.ne.s32.totalorder %s32, %s35
      %p41 = scmp.eq.s32.totalorder %s22, 0
      %p42 = por %p40, %p41
      %p43 = scmp.ne.s32.totalorder %s32, %s35
      %p44 = scmp.eq.s32.totalorder %s27, 1
      %p45 = por %p43, %p44
      %p46 = scmp.ne.s32.totalorder %s35, %s36
      %p47 = scmp.eq.s32.totalorder %s27, 0
      %p48 = por %p46, %p47
      %p49 = scmp.ne.s32.totalorder %s35, %s36
      %p50 = scmp.eq.s32.totalorder %s28, 1
      %p51 = por %p49, %p50
      %p53 = scmp.ne.s32.totalorder %s36, %s52
      %p54 = scmp.eq.s32.totalorder %s28, 0
      %p55 = por %p53, %p54
      %s56 = ssub.s32 %s22, %s29
      %p57 = scmp.eq.s32.totalorder %s56, 0
      %s59 = sadd.s32 %s58, 1
      %s60 = scalar_select %p57, %s58, %s59
      %p63 = pneg %p57
      %p64 = scmp.eq.s32.totalorder %s22, 1
      %p65 = por %p63, %p64
      %p66 = scmp.ne.s32.totalorder %s58, %s61
      %p67 = scmp.eq.s32.totalorder %s22, 0
      %p68 = por %p66, %p67
      %p69 = scmp.ne.s32.totalorder %s58, %s61
      %p70 = scmp.eq.s32.totalorder %s27, 1
      %p71 = por %p69, %p70
      %p72 = scmp.ne.s32.totalorder %s61, %s62
      %p73 = scmp.eq.s32.totalorder %s27, 0
      %p74 = por %p72, %p73
      %p75 = scmp.ne.s32.totalorder %s61, %s62
      %p76 = scmp.eq.s32.totalorder %s28, 1
      %p77 = por %p75, %p76
      %p79 = scmp.ne.s32.totalorder %s62, %s78
      %p80 = scmp.eq.s32.totalorder %s28, 0
      %p81 = por %p79, %p80
      %s83 = sadd.s32 %s82, 1
      %p86 = scmp.eq.s32.totalorder %s22, 1
      %p87 = scmp.ne.s32.totalorder %s82, %s84
      %p88 = scmp.eq.s32.totalorder %s22, 0
      %p89 = por %p87, %p88
      %p90 = scmp.ne.s32.totalorder %s82, %s84
      %p91 = scmp.eq.s32.totalorder %s27, 1
      %p92 = por %p90, %p91
      %p93 = scmp.ne.s32.totalorder %s84, %s85
      %p94 = scmp.eq.s32.totalorder %s27, 0
      %p95 = por %p93, %p94
      %p96 = scmp.ne.s32.totalorder %s84, %s85
      %p97 = scmp.eq.s32.totalorder %s28, 1
      %p98 = por %p96, %p97
      %p100 = scmp.ne.s32.totalorder %s85, %s99
      %p101 = scmp.eq.s32.totalorder %s28, 0
      %p102 = por %p100, %p101
      %s104 = sadd.s32 %s103, 1
      %p107 = scmp.eq.s32.totalorder %s22, 1
      %p108 = scmp.ne.s32.totalorder %s103, %s105
      %p109 = scmp.eq.s32.totalorder %s22, 0
      %p110 = por %p108, %p109
      %p111 = scmp.ne.s32.totalorder %s103, %s105
      %p112 = scmp.eq.s32.totalorder %s27, 1
      %p113 = por %p111, %p112
      %p114 = scmp.ne.s32.totalorder %s105, %s106
      %p115 = scmp.eq.s32.totalorder %s27, 0
      %p116 = por %p114, %p115
      %p117 = scmp.ne.s32.totalorder %s105, %s106
      %p118 = scmp.eq.s32.totalorder %s28, 1
      %p119 = por %p117, %p118
      %p121 = scmp.ne.s32.totalorder %s106, %s120
      %p122 = scmp.eq.s32.totalorder %s28, 0
      %p123 = por %p121, %p122
      %s125 = sadd.s32 %s124, 1
      %p128 = scmp.eq.s32.totalorder %s22, 1
      %p129 = scmp.ne.s32.totalorder %s124, %s126
      %p130 = scmp.eq.s32.totalorder %s22, 0
      %p131 = por %p129, %p130
      %p132 = scmp.ne.s32.totalorder %s124, %s126
      %p133 = scmp.eq.s32.totalorder %s27, 1
      %p134 = por %p132, %p133
      %p135 = scmp.ne.s32.totalorder %s126, %s127
      %p136 = scmp.eq.s32.totalorder %s27, 0
      %p137 = por %p135, %p136
      %p138 = scmp.ne.s32.totalorder %s126, %s127
      %p139 = scmp.eq.s32.totalorder %s28, 1
      %p140 = por %p138, %p139
      %p142 = scmp.ne.s32.totalorder %s127, %s141
      %p143 = scmp.eq.s32.totalorder %s28, 0
      %p144 = por %p142, %p143
      %s146 = sadd.s32 %s145, 1
      %p149 = scmp.eq.s32.totalorder %s22, 1
      %p150 = scmp.ne.s32.totalorder %s145, %s147
      %p151 = scmp.eq.s32.totalorder %s22, 0
      %p152 = por %p150, %p151
      %p153 = scmp.ne.s32.totalorder %s145, %s147
      %p154 = scmp.eq.s32.totalorder %s27, 1
      %p155 = por %p153, %p154
      %p156 = scmp.ne.s32.totalorder %s147, %s148
      %p157 = scmp.eq.s32.totalorder %s27, 0
      %p158 = por %p156, %p157
      %p159 = scmp.ne.s32.totalorder %s147, %s148
      %p160 = scmp.eq.s32.totalorder %s28, 1
      %p161 = por %p159, %p160
      %p163 = scmp.ne.s32.totalorder %s148, %s162
      %p164 = scmp.eq.s32.totalorder %s28, 0
      %p165 = por %p163, %p164
      %s167 = sadd.s32 %s166, 1
      %p170 = scmp.eq.s32.totalorder %s22, 1
      %p171 = scmp.ne.s32.totalorder %s166, %s168
      %p172 = scmp.eq.s32.totalorder %s22, 0
      %p173 = por %p171, %p172
      %p174 = scmp.ne.s32.totalorder %s166, %s168
      %p175 = scmp.eq.s32.totalorder %s27, 1
      %p176 = por %p174, %p175
      %p177 = scmp.ne.s32.totalorder %s168, %s169
      %p178 = scmp.eq.s32.totalorder %s27, 0
      %p179 = por %p177, %p178
      %p180 = scmp.ne.s32.totalorder %s168, %s169
      %p181 = scmp.eq.s32.totalorder %s28, 1
      %p182 = por %p180, %p181
      %p184 = scmp.ne.s32.totalorder %s169, %s183
      %p185 = scmp.eq.s32.totalorder %s28, 0
      %p186 = por %p184, %p185
      %s188 = sadd.s32 %s187, 1
      %p191 = scmp.eq.s32.totalorder %s22, 1
      %p192 = scmp.ne.s32.totalorder %s187, %s189
      %p193 = scmp.eq.s32.totalorder %s22, 0
      %p194 = por %p192, %p193
      %p195 = scmp.ne.s32.totalorder %s187, %s189
      %p196 = scmp.eq.s32.totalorder %s27, 1
      %p197 = por %p195, %p196
      %p198 = scmp.ne.s32.totalorder %s189, %s190
      %p199 = scmp.eq.s32.totalorder %s27, 0
      %p200 = por %p198, %p199
      %p201 = scmp.ne.s32.totalorder %s189, %s190
      %p202 = scmp.eq.s32.totalorder %s28, 1
      %p203 = por %p201, %p202
      %p205 = scmp.ne.s32.totalorder %s190, %s204
      %p206 = scmp.eq.s32.totalorder %s28, 0
      %p207 = por %p205, %p206
      %s209 = sadd.s32 %s208, 1
      %p212 = scmp.eq.s32.totalorder %s22, 1
      %p213 = scmp.ne.s32.totalorder %s208, %s210
      %p214 = scmp.eq.s32.totalorder %s22, 0
      %p215 = por %p213, %p214
      %p216 = scmp.ne.s32.totalorder %s208, %s210
      %p217 = scmp.eq.s32.totalorder %s27, 1
      %p218 = por %p216, %p217
      %p219 = scmp.ne.s32.totalorder %s210, %s211
      %p220 = scmp.eq.s32.totalorder %s27, 0
      %p221 = por %p219, %p220
      %p222 = scmp.ne.s32.totalorder %s210, %s211
      %p223 = scmp.eq.s32.totalorder %s28, 1
      %p224 = por %p222, %p223
      %p226 = scmp.ne.s32.totalorder %s211, %s225
      %p227 = scmp.eq.s32.totalorder %s28, 0
      %p228 = por %p226, %p227
      %s230 = sadd.s32 %s229, 1
      %p233 = scmp.eq.s32.totalorder %s22, 1
      %p234 = scmp.ne.s32.totalorder %s229, %s231
      %p235 = scmp.eq.s32.totalorder %s22, 0
      %p236 = por %p234, %p235
      %p237 = scmp.ne.s32.totalorder %s229, %s231
      %p238 = scmp.eq.s32.totalorder %s27, 1
      %p239 = por %p237, %p238
      %p240 = scmp.ne.s32.totalorder %s231, %s232
      %p241 = scmp.eq.s32.totalorder %s27, 0
      %p242 = por %p240, %p241
      %p243 = scmp.ne.s32.totalorder %s231, %s232
      %p244 = scmp.eq.s32.totalorder %s28, 1
      %p245 = por %p243, %p244
      %p247 = scmp.ne.s32.totalorder %s232, %s246
      %p248 = scmp.eq.s32.totalorder %s28, 0
      %p249 = por %p247, %p248
      %s251 = sadd.s32 %s250, 1
      %p254 = scmp.eq.s32.totalorder %s22, 1
      %p255 = scmp.ne.s32.totalorder %s250, %s252
      %p256 = scmp.eq.s32.totalorder %s22, 0
      %p257 = por %p255, %p256
      %p258 = scmp.ne.s32.totalorder %s250, %s252
      %p259 = scmp.eq.s32.totalorder %s27, 1
      %p260 = por %p258, %p259
      %p261 = scmp.ne.s32.totalorder %s252, %s253
      %p262 = scmp.eq.s32.totalorder %s27, 0
      %p263 = por %p261, %p262
      %p264 = scmp.ne.s32.totalorder %s252, %s253
      %p265 = scmp.eq.s32.totalorder %s28, 1
      %p266 = por %p264, %p265
      %p268 = scmp.ne.s32.totalorder %s253, %s267
      %p269 = scmp.eq.s32.totalorder %s28, 0
      %p270 = por %p268, %p269
      %s271 = ssub.s32 %s22, %s29
      %p272 = scmp.eq.s32.totalorder %s271, 0
      %s274 = sadd.s32 %s273, 1
      %s275 = scalar_select %p272, %s273, %s274
      %p278 = pneg %p272
      %p279 = scmp.eq.s32.totalorder %s22, 1
      %p280 = por %p278, %p279
      %p281 = scmp.ne.s32.totalorder %s273, %s276
      %p282 = scmp.eq.s32.totalorder %s22, 0
      %p283 = por %p281, %p282
      %p284 = scmp.ne.s32.totalorder %s273, %s276
      %p285 = scmp.eq.s32.totalorder %s27, 1
      %p286 = por %p284, %p285
      %p287 = scmp.ne.s32.totalorder %s276, %s277
      %p288 = scmp.eq.s32.totalorder %s27, 0
      %p289 = por %p287, %p288
      %p290 = scmp.ne.s32.totalorder %s276, %s277
      %p291 = scmp.eq.s32.totalorder %s28, 1
      %p292 = por %p290, %p291
      %p294 = scmp.ne.s32.totalorder %s277, %s293
      %p295 = scmp.eq.s32.totalorder %s28, 0
      %p296 = por %p294, %p295
      %s297 = ssub.s32 %s22, %s29
      %p298 = scmp.eq.s32.totalorder %s297, 0
      %s300 = sadd.s32 %s299, 1
      %s301 = scalar_select %p298, %s299, %s300
      %p304 = pneg %p298
      %p305 = scmp.eq.s32.totalorder %s22, 1
      %p306 = por %p304, %p305
      %p307 = scmp.ne.s32.totalorder %s299, %s302
      %p308 = scmp.eq.s32.totalorder %s22, 0
      %p309 = por %p307, %p308
      %p310 = scmp.ne.s32.totalorder %s299, %s302
      %p311 = scmp.eq.s32.totalorder %s27, 1
      %p312 = por %p310, %p311
      %p313 = scmp.ne.s32.totalorder %s302, %s303
      %p314 = scmp.eq.s32.totalorder %s27, 0
      %p315 = por %p313, %p314
      %p316 = scmp.ne.s32.totalorder %s302, %s303
      %p317 = scmp.eq.s32.totalorder %s28, 1
      %p318 = por %p316, %p317
      %p320 = scmp.ne.s32.totalorder %s303, %s319
      %p321 = scmp.eq.s32.totalorder %s28, 0
      %p322 = por %p320, %p321
      %p323 = scmp.le.s32.totalorder 1, %s22
      %p324 = scmp.lt.s32.totalorder %s22, 3
      %p325 = pnand %p323, %p324
      %p326 = pneg %p325
      // Predicated region
      $region9: #{tpu_custom_call.1} parent=5 // pred_check
        _
      $region10: #{tpu_custom_call.1} parent=5 // pred_check_branch
        %328 = sbr.rel (%p325) target = $region12
      $region11: #{tpu_custom_call.1} parent=5 // pred_region
        %s329 = ssub.s32 %s22, 1
        // Predicated region
        $region13: #{tpu_custom_call.1} parent=11 // pred_check
          %p330 = pneg %p95
        $region14: #{tpu_custom_call.1} parent=11 // pred_check_branch
          %332 = sbr.rel (%p330) target = $region16
        $region15: #{tpu_custom_call.1} parent=11 // pred_region
          _
        $region16: #{tpu_custom_call.1} parent=11 // pred_fallthru
          _
        // Predicated region
        $region17: #{tpu_custom_call.1} parent=11 // pred_check
          %p333 = pneg %p116
        $region18: #{tpu_custom_call.1} parent=11 // pred_check_branch
          %335 = sbr.rel (%p333) target = $region20
        $region19: #{tpu_custom_call.1} parent=11 // pred_region
          _
        $region20: #{tpu_custom_call.1} parent=11 // pred_fallthru
          _
        // Predicated region
        $region21: #{tpu_custom_call.1} parent=11 // pred_check
          %p336 = pneg %p137
        $region22: #{tpu_custom_call.1} parent=11 // pred_check_branch
          %338 = sbr.rel (%p336) target = $region24
        $region23: #{tpu_custom_call.1} parent=11 // pred_region
          _
        $region24: #{tpu_custom_call.1} parent=11 // pred_fallthru
          _
        // Predicated region
        $region25: #{tpu_custom_call.1} parent=11 // pred_check
          %p339 = pneg %p158
        $region26: #{tpu_custom_call.1} parent=11 // pred_check_branch
          %341 = sbr.rel (%p339) target = $region28
        $region27: #{tpu_custom_call.1} parent=11 // pred_region
          _
        $region28: #{tpu_custom_call.1} parent=11 // pred_fallthru
          _
        // Predicated region
        $region29: #{tpu_custom_call.1} parent=11 // pred_check
          %p342 = pneg %p179
        $region30: #{tpu_custom_call.1} parent=11 // pred_check_branch
          %344 = sbr.rel (%p342) target = $region32
        $region31: #{tpu_custom_call.1} parent=11 // pred_region
          _
        $region32: #{tpu_custom_call.1} parent=11 // pred_fallthru
          _
        // Predicated region
        $region33: #{tpu_custom_call.1} parent=11 // pred_check
          %p345 = pneg %p200
        $region34: #{tpu_custom_call.1} parent=11 // pred_check_branch
          %347 = sbr.rel (%p345) target = $region36
        $region35: #{tpu_custom_call.1} parent=11 // pred_region
          _
        $region36: #{tpu_custom_call.1} parent=11 // pred_fallthru
          _
        // Predicated region
        $region37: #{tpu_custom_call.1} parent=11 // pred_check
          %p348 = pneg %p221
        $region38: #{tpu_custom_call.1} parent=11 // pred_check_branch
          %350 = sbr.rel (%p348) target = $region40
        $region39: #{tpu_custom_call.1} parent=11 // pred_region
          _
        $region40: #{tpu_custom_call.1} parent=11 // pred_fallthru
          _
        // Predicated region
        $region41: #{tpu_custom_call.1} parent=11 // pred_check
          %p351 = pneg %p242
        $region42: #{tpu_custom_call.1} parent=11 // pred_check_branch
          %353 = sbr.rel (%p351) target = $region44
        $region43: #{tpu_custom_call.1} parent=11 // pred_region
          _
        $region44: #{tpu_custom_call.1} parent=11 // pred_fallthru
          _
        // Predicated region
        $region45: #{tpu_custom_call.1} parent=11 // pred_check
          %p354 = pneg %p263
        $region46: #{tpu_custom_call.1} parent=11 // pred_check_branch
          %356 = sbr.rel (%p354) target = $region48
        $region47: #{tpu_custom_call.1} parent=11 // pred_region
          _
        $region48: #{tpu_custom_call.1} parent=11 // pred_fallthru
          _
      $region12: #{tpu_custom_call.1} parent=5 // pred_fallthru
        _
      %p357 = scmp.lt.s32.totalorder %s22, 2
      // Predicated region
      $region49: #{tpu_custom_call.1} parent=5 // pred_check
        %p358 = pneg %p357
      $region50: #{tpu_custom_call.1} parent=5 // pred_check_branch
        %360 = sbr.rel (%p358) target = $region52
      $region51: #{tpu_custom_call.1} parent=5 // pred_region
        // Predicated region
        $region53: #{tpu_custom_call.1} parent=51 // pred_check
          %p361 = pneg %p42
        $region54: #{tpu_custom_call.1} parent=51 // pred_check_branch
          %363 = sbr.rel (%p361) target = $region56
        $region55: #{tpu_custom_call.1} parent=51 // pred_region
          %s364 = smul.u32 2, %s22
          %p365 = scmp.lt.s32.totalorder %s364, 3
          %s366 = scalar_select %p365, %s364, 3
          %s367 = smul.addr %s366, 8
          %s368 = scalar_lea.vmem %s0, %s367
          %s369 = smul.u32 2, %s22
        $region56: #{tpu_custom_call.1} parent=51 // pred_fallthru
          _
        // Predicated region
        $region57: #{tpu_custom_call.1} parent=51 // pred_check
          %p370 = pneg %p68
        $region58: #{tpu_custom_call.1} parent=51 // pred_check_branch
          %372 = sbr.rel (%p370) target = $region60
        $region59: #{tpu_custom_call.1} parent=51 // pred_region
          %s373 = smul.u32 2, %s22
          %p374 = scmp.lt.s32.totalorder %s373, 3
          %s375 = scalar_select %p374, %s373, 3
          %s376 = smul.addr %s375, 8
          %s377 = scalar_lea.vmem %s1, %s376
          %s378 = smul.u32 2, %s22
        $region60: #{tpu_custom_call.1} parent=51 // pred_fallthru
          _
      $region52: #{tpu_custom_call.1} parent=5 // pred_fallthru
        _
      %p379 = scmp.le.s32.totalorder 1, %s22
      %p380 = scmp.lt.s32.totalorder %s22, 3
      %p381 = pnand %p379, %p380
      %p382 = pneg %p381
      // Predicated region
      $region61: #{tpu_custom_call.1} parent=5 // pred_check
        _
      $region62: #{tpu_custom_call.1} parent=5 // pred_check_branch
        %384 = sbr.rel (%p381) target = $region64
      $region63: #{tpu_custom_call.1} parent=5 // pred_region
        %s385 = ssub.s32 %s22, 1
        %s386 = smul.u32 2, %s27
        %p387 = scmp.lt.s32.totalorder %s386, 3
        %s388 = scalar_select %p387, %s386, 3
        %s389 = smul.addr %s388, 8
        %s390 = scalar_lea.vmem %s0, %s389
        %p391 = pneg %p48
        %p392 = pneg %p45
        %s393 = smul.u32 2, %s27
        %p394 = scmp.lt.s32.totalorder %s393, 3
        %s395 = scalar_select %p394, %s393, 3
        %s396 = smul.addr %s395, 8
        %s397 = scalar_lea.vmem %s1, %s396
        %p398 = pneg %p74
        %p399 = pneg %p71
        %p400 = pneg %p95
        %p401 = pneg %p92
        %p402 = pneg %p116
        %p403 = pneg %p113
        %p404 = pneg %p137
        %p405 = pneg %p134
        %p406 = pneg %p158
        %p407 = pneg %p155
        %p408 = pneg %p179
        %p409 = pneg %p176
        %p410 = pneg %p200
        %p411 = pneg %p197
        %p412 = pneg %p221
        %p413 = pneg %p218
        %p414 = pneg %p242
        %p415 = pneg %p239
        %p416 = pneg %p263
        %p417 = pneg %p260
        %p418 = pneg %p289
        %p419 = pneg %p286
        %s420 = sand.u32 %s276, 1
        %s421 = scalar_lea.sflag [#allocation3], %s420
        %s422 = sand.u32 %s276, 1
        %s423 = smul.addr %s422, 16
        %s424 = scalar_lea.vmem [#allocation2], %s423
        %p425 = pneg %p315
        %p426 = pneg %p312
        %s427 = smul.u32 2, %s27
        %p428 = scmp.lt.s32.totalorder %s427, 3
        %s429 = scalar_select %p428, %s427, 3
        %s430 = smul.addr %s429, 8
        %s431 = scalar_lea.vmem %s12, %s430
        %s432 = smul.u32 2, %s27
        %p433 = scmp.lt.s32.totalorder %s432, 3
        %s434 = scalar_select %p433, %s432, 3
        %s435 = smul.addr %s434, 8
        %s436 = scalar_lea.vmem %s0, %s435
        %s437 = smul.u32 2, %s27
        %s438 = smul.u32 2, %s27
        %p439 = scmp.lt.s32.totalorder %s438, 3
        %s440 = scalar_select %p439, %s438, 3
        %s441 = smul.addr %s440, 8
        %s442 = scalar_lea.vmem %s1, %s441
        %s443 = smul.u32 2, %s27
        %s444 = smul.u32 2, %s27
        %s445 = smul.u32 2, %s27
        %p446 = scmp.lt.s32.totalorder %s445, 3
        %s447 = scalar_select %p446, %s445, 3
        %s448 = smul.addr %s447, 8
        %s449 = scalar_lea.vmem %s12, %s448
        %s450 = smul.u32 2, %s27
        %v452 = vld [vmem:[%s442] sm:$0xff]
        %v453 = vld [vmem:[%s442 + $0x8] sm:$0xff]
        %v454 = vld [vmem:[%s436] sm:$0xff]
        %v455 = vld [vmem:[%s436 + $0x8] sm:$0xff]
        %v456 = vld [vmem:[%s9] sm:$0xff]
        %v457 = vld [vmem:[%s9 + $0x8] sm:$0x7]
        %v458 = vld [vmem:[%s8] sm:$0x3]
        %v459 = vld [vmem:[%s2] sm:$0xf]
        %v460 = vld [vmem:[%s2 + $0x4] sm:$0xf]
        %v461 = vld [vmem:[%s2 + $0x8] sm:$0xf]
        %v462 = vld [vmem:[%s2 + $0xc] sm:$0xf]
        %v463 = vld [vmem:[%s2 + $0x10] sm:$0xf]
        %v464 = vld [vmem:[%s2 + $0x14] sm:$0xf]
        %v465 = vld [vmem:[%s2 + $0x18] sm:$0xf]
        %v466 = vld [vmem:[%s2 + $0x1c] sm:$0xf]
        %v467 = vld [vmem:[%s2 + $0x20] sm:$0xf]
        %v468 = vld [vmem:[%s2 + $0x24] sm:$0xf]
        %v469 = vld [vmem:[%s2 + $0x28] sm:$0xf]
        %v470 = vld [vmem:[%s2 + $0x2c] sm:$0xf]
        %v471 = vpack.c.bf16 %v453, %v452
        %v472 = vperm.slane %v458, 0
        %v477 = vunpack.c.l.b16 %v459
        %v478 = vunpack.c.l.b16 %v460
        %v479 = vunpack.c.l.b16 %v461
        %v480 = vunpack.c.l.b16 %v462
        %v481 = vpack.c.b16 %v478, %v477
        %v482 = vpack.c.b16 %v480, %v479
        %vm483 = vcmask 261120
        %v485 = vsel %vm483, %v471, 0
        %v488 = vsel %vm483, %v481, 0
        %v491 = vsel %vm483, %v482, 0
        %493 = vmatpush.bf16.xpose.msra.mxu0 0
        %494 = vmatpush.bf16.xpose.msra.mxu0 0
        %495 = vmatpush.bf16.xpose.msra.mxu0 0
        %496 = vmatpush.bf16.xpose.msra.mxu0 0
        %497 = vmatpush.bf16.xpose.msra.mxu0 0
        %498 = vmatpush.bf16.xpose.msra.mxu0 0
        %499 = vmatpush.bf16.xpose.msra.mxu0 %v491
        %500 = vmatpush.bf16.xpose.msra.mxu0 %v488
        %501 = vmatmul.bf16.gmra.mxu0 %v485
        %v502 = vpop.f32.mrf.mxu0
        %v503 = vadd.f32 %v472, %v502
        %v504 = vpop.f32.mrf.mxu0
        %v505 = vadd.f32 %v472, %v504
        %506 = vdwg.mxu0
        %v511 = vunpack.c.l.b16 %v463
        %v512 = vunpack.c.l.b16 %v464
        %v513 = vunpack.c.l.b16 %v465
        %v514 = vunpack.c.l.b16 %v466
        %v515 = vpack.c.b16 %v512, %v511
        %v516 = vpack.c.b16 %v514, %v513
        %518 = vrot.lane.b32.xlu0 %v472, 96
        %v519 = vpop.permute.xlu0 %518
        %v522 = vsel %vm483, %v515, 0
        %v525 = vsel %vm483, %v516, 0
        %527 = vmatpush.bf16.xpose.msra.mxu0 0
        %528 = vmatpush.bf16.xpose.msra.mxu0 0
        %529 = vmatpush.bf16.xpose.msra.mxu0 0
        %530 = vmatpush.bf16.xpose.msra.mxu0 0
        %531 = vmatpush.bf16.xpose.msra.mxu0 0
        %532 = vmatpush.bf16.xpose.msra.mxu0 0
        %533 = vmatpush.bf16.xpose.msra.mxu0 %v525
        %534 = vmatpush.bf16.xpose.msra.mxu0 %v522
        %535 = vmatmul.bf16.gmra.mxu0 %v485
        %v536 = vpop.f32.mrf.mxu0
        %v537 = vadd.f32 %v519, %v536
        %v538 = vpop.f32.mrf.mxu0
        %v539 = vadd.f32 %v519, %v538
        %540 = vdwg.mxu0
        %v545 = vunpack.c.l.b16 %v467
        %v546 = vunpack.c.l.b16 %v468
        %v547 = vunpack.c.l.b16 %v469
        %v548 = vunpack.c.l.b16 %v470
        %v549 = vpack.c.b16 %v546, %v545
        %v550 = vpack.c.b16 %v548, %v547
        %551 = vrot.lane.b32.xlu0 %v472, 64
        %v552 = vpop.permute.xlu0 %551
        %v555 = vsel %vm483, %v549, 0
        %v558 = vsel %vm483, %v550, 0
        %560 = vmatpush.bf16.xpose.msra.mxu0 0
        %561 = vmatpush.bf16.xpose.msra.mxu0 0
        %562 = vmatpush.bf16.xpose.msra.mxu0 0
        %563 = vmatpush.bf16.xpose.msra.mxu0 0
        %564 = vmatpush.bf16.xpose.msra.mxu0 0
        %565 = vmatpush.bf16.xpose.msra.mxu0 0
        %566 = vmatpush.bf16.xpose.msra.mxu0 %v558
        %567 = vmatpush.bf16.xpose.msra.mxu0 %v555
        %568 = vmatmul.bf16.gmra.mxu0 %v485
        %v569 = vpop.f32.mrf.mxu0
        %v570 = vadd.f32 %v552, %v569
        %v571 = vpop.f32.mrf.mxu0
        %v572 = vadd.f32 %v552, %v571
        %573 = vdwg.mxu0
        %v574 = vpack.c.bf16 %v503, %v503
        %v575 = vpack.c.bf16 %v505, %v505
        %v576 = vpack.c.bf16 %v537, %v537
        %v577 = vpack.c.bf16 %v539, %v539
        %vm578 = vcmask 64512
        %v580 = vsel %vm578, %v574, 0
        %v583 = vsel %vm578, %v576, 0
        %585 = vmatpush.bf16.xpose.msra.mxu0 0
        %586 = vmatpush.bf16.xpose.msra.mxu0 0
        %587 = vmatpush.bf16.xpose.msra.mxu0 0
        %588 = vmatpush.bf16.xpose.msra.mxu0 0
        %589 = vmatpush.bf16.xpose.msra.mxu0 0
        %590 = vmatpush.bf16.xpose.msra.mxu0 0
        %591 = vmatpush.bf16.xpose.msra.mxu0 0
        %592 = vmatpush.bf16.xpose.msra.mxu0 %v583
        %593 = vmatmul.bf16.gmra.mxu0 %v580
        %v594 = vpop.f32.mrf.mxu0
        %v595 = vadd.f32 0.0, %v594
        %v596 = vpop.f32.mrf.mxu0
        %597 = vdwg.mxu0
        %v599 = vsel %vm578, %v575, 0
        %v602 = vsel %vm578, %v577, 0
        %604 = vmatpush.bf16.xpose.msra.mxu0 0
        %605 = vmatpush.bf16.xpose.msra.mxu0 0
        %606 = vmatpush.bf16.xpose.msra.mxu0 0
        %607 = vmatpush.bf16.xpose.msra.mxu0 0
        %608 = vmatpush.bf16.xpose.msra.mxu0 0
        %609 = vmatpush.bf16.xpose.msra.mxu0 0
        %610 = vmatpush.bf16.xpose.msra.mxu0 0
        %611 = vmatpush.bf16.xpose.msra.mxu0 %v602
        %612 = vmatmul.bf16.gmra.mxu0 %v599
        %v613 = vpop.f32.mrf.mxu0
        %v614 = vadd.f32 0.0, %v613
        %v615 = vpop.f32.mrf.mxu0
        %616 = vdwg.mxu0
        %v617 = vsel %vm578, %v595, -inf
        %618 = vmax.xlane.f32.xlu0 %v617
        %v619 = vpop.xlane.xlu0 %618
        %v620 = vsel %vm578, %v614, -inf
        %621 = vmax.xlane.f32.xlu0 %v620
        %v622 = vpop.xlane.xlu0 %621
        %v623 = vsub.f32 %v595, %v619
        %v624 = vsub.f32 %v614, %v622
        %v625 = vmul.f32 %v623, 1.442695
        %v626 = vpow.pop %v625
        %v627 = vmul.f32 %v624, 1.442695
        %v628 = vpow.pop %v627
        %v629 = vsel %vm578, %v626, 0.0
        %630 = vadd.xlane.f32.xlu0 %v629
        %v631 = vpop.xlane.xlu0 %630
        %v632 = vsel %vm578, %v628, 0.0
        %633 = vadd.xlane.f32.xlu0 %v632
        %v634 = vpop.xlane.xlu0 %633
        %v635 = vrcp.pop %v631
        %v636 = vrcp.pop %v634
        %v637 = vmul.f32 %v626, %v635
        %v638 = vmul.f32 %v628, %v636
        %v639 = vpack.c.bf16 %v637, %v637
        %v640 = vpack.c.bf16 %v638, %v638
        %v641 = vpack.c.bf16 %v570, %v570
        %v642 = vpack.c.bf16 %v572, %v572
        %v644 = vsel %vm578, %v639, 0
        %vm646 = vcmask 1043456
        %v648 = vsel %vm646, %v641, 0
        %650 = vmatpush.bf16.msra.mxu0 0
        %651 = vmatpush.bf16.msra.mxu0 0
        %652 = vmatpush.bf16.msra.mxu0 0
        %653 = vmatpush.bf16.msra.mxu0 0
        %654 = vmatpush.bf16.msra.mxu0 0
        %655 = vmatpush.bf16.msra.mxu0 0
        %656 = vmatpush.bf16.msra.mxu0 0
        %657 = vmatpush.bf16.msra.mxu0 %v648
        %658 = vmatmul.bf16.gmra.mxu0 %v644
        %v659 = vpop.f32.mrf.mxu0
        %v660 = vadd.f32 0.0, %v659
        %v661 = vpop.f32.mrf.mxu0
        %662 = vdwg.mxu0
        %v664 = vsel %vm578, %v640, 0
        %v667 = vsel %vm646, %v642, 0
        %669 = vmatpush.bf16.msra.mxu0 0
        %670 = vmatpush.bf16.msra.mxu0 0
        %671 = vmatpush.bf16.msra.mxu0 0
        %672 = vmatpush.bf16.msra.mxu0 0
        %673 = vmatpush.bf16.msra.mxu0 0
        %674 = vmatpush.bf16.msra.mxu0 0
        %675 = vmatpush.bf16.msra.mxu0 0
        %676 = vmatpush.bf16.msra.mxu0 %v667
        %677 = vmatmul.bf16.gmra.mxu0 %v664
        %v678 = vpop.f32.mrf.mxu0
        %v679 = vadd.f32 0.0, %v678
        %v680 = vpop.f32.mrf.mxu0
        %681 = vdwg.mxu0
        %v683 = vunpack.c.l.b16 %v574
        %v684 = vpack.c.b16 %v683, %v683
        %685 = vrot.lane.b32.xlu0 %v684, 120
        %v686 = vpop.permute.xlu0 %685
        %v688 = vunpack.c.l.b16 %v576
        %v689 = vpack.c.b16 %v688, %v688
        %690 = vrot.lane.b32.xlu0 %v689, 120
        %v691 = vpop.permute.xlu0 %690
        %v693 = vsel %vm578, %v686, 0
        %v696 = vsel %vm578, %v691, 0
        %698 = vmatpush.bf16.xpose.msra.mxu0 0
        %699 = vmatpush.bf16.xpose.msra.mxu0 0
        %700 = vmatpush.bf16.xpose.msra.mxu0 0
        %701 = vmatpush.bf16.xpose.msra.mxu0 0
        %702 = vmatpush.bf16.xpose.msra.mxu0 0
        %703 = vmatpush.bf16.xpose.msra.mxu0 0
        %704 = vmatpush.bf16.xpose.msra.mxu0 0
        %705 = vmatpush.bf16.xpose.msra.mxu0 %v696
        %706 = vmatmul.bf16.gmra.mxu0 %v693
        %v707 = vpop.f32.mrf.mxu0
        %v708 = vadd.f32 0.0, %v707
        %v709 = vpop.f32.mrf.mxu0
        %710 = vdwg.mxu0
        %v712 = vunpack.c.l.b16 %v575
        %v713 = vpack.c.b16 %v712, %v712
        %714 = vrot.lane.b32.xlu0 %v713, 120
        %v715 = vpop.permute.xlu0 %714
        %v717 = vunpack.c.l.b16 %v577
        %v718 = vpack.c.b16 %v717, %v717
        %719 = vrot.lane.b32.xlu0 %v718, 120
        %v720 = vpop.permute.xlu0 %719
        %v722 = vsel %vm578, %v715, 0
        %v725 = vsel %vm578, %v720, 0
        %727 = vmatpush.bf16.xpose.msra.mxu0 0
        %728 = vmatpush.bf16.xpose.msra.mxu0 0
        %729 = vmatpush.bf16.xpose.msra.mxu0 0
        %730 = vmatpush.bf16.xpose.msra.mxu0 0
        %731 = vmatpush.bf16.xpose.msra.mxu0 0
        %732 = vmatpush.bf16.xpose.msra.mxu0 0
        %733 = vmatpush.bf16.xpose.msra.mxu0 0
        %734 = vmatpush.bf16.xpose.msra.mxu0 %v725
        %735 = vmatmul.bf16.gmra.mxu0 %v722
        %v736 = vpop.f32.mrf.mxu0
        %v737 = vadd.f32 0.0, %v736
        %v738 = vpop.f32.mrf.mxu0
        %739 = vdwg.mxu0
        %v740 = vsel %vm578, %v708, -inf
        %741 = vmax.xlane.f32.xlu0 %v740
        %v742 = vpop.xlane.xlu0 %741
        %v743 = vsel %vm578, %v737, -inf
        %744 = vmax.xlane.f32.xlu0 %v743
        %v745 = vpop.xlane.xlu0 %744
        %v746 = vsub.f32 %v708, %v742
        %v747 = vsub.f32 %v737, %v745
        %v748 = vmul.f32 %v746, 1.442695
        %v749 = vpow.pop %v748
        %v750 = vmul.f32 %v747, 1.442695
        %v751 = vpow.pop %v750
        %v752 = vsel %vm578, %v749, 0.0
        %753 = vadd.xlane.f32.xlu0 %v752
        %v754 = vpop.xlane.xlu0 %753
        %v755 = vsel %vm578, %v751, 0.0
        %756 = vadd.xlane.f32.xlu0 %v755
        %v757 = vpop.xlane.xlu0 %756
        %v758 = vrcp.pop %v754
        %v759 = vrcp.pop %v757
        %v760 = vmul.f32 %v749, %v758
        %v761 = vmul.f32 %v751, %v759
        %v762 = vpack.c.bf16 %v760, %v760
        %v763 = vpack.c.bf16 %v761, %v761
        %v765 = vunpack.c.l.b16 %v641
        %v766 = vpack.c.b16 %v765, %v765
        %767 = vrot.lane.b32.xlu0 %v766, 120
        %v768 = vpop.permute.xlu0 %767
        %v770 = vsel %vm578, %v762, 0
        %v773 = vsel %vm646, %v768, 0
        %775 = vmatpush.bf16.msra.mxu0 0
        %776 = vmatpush.bf16.msra.mxu0 0
        %777 = vmatpush.bf16.msra.mxu0 0
        %778 = vmatpush.bf16.msra.mxu0 0
        %779 = vmatpush.bf16.msra.mxu0 0
        %780 = vmatpush.bf16.msra.mxu0 0
        %781 = vmatpush.bf16.msra.mxu0 0
        %782 = vmatpush.bf16.msra.mxu0 %v773
        %783 = vmatmul.bf16.gmra.mxu0 %v770
        %v784 = vpop.f32.mrf.mxu0
        %v785 = vadd.f32 0.0, %v784
        %v786 = vpop.f32.mrf.mxu0
        %787 = vdwg.mxu0
        %v789 = vunpack.c.l.b16 %v642
        %v790 = vpack.c.b16 %v789, %v789
        %791 = vrot.lane.b32.xlu0 %v790, 120
        %v792 = vpop.permute.xlu0 %791
        %v794 = vsel %vm578, %v763, 0
        %v797 = vsel %vm646, %v792, 0
        %799 = vmatpush.bf16.msra.mxu0 0
        %800 = vmatpush.bf16.msra.mxu0 0
        %801 = vmatpush.bf16.msra.mxu0 0
        %802 = vmatpush.bf16.msra.mxu0 0
        %803 = vmatpush.bf16.msra.mxu0 0
        %804 = vmatpush.bf16.msra.mxu0 0
        %805 = vmatpush.bf16.msra.mxu0 0
        %806 = vmatpush.bf16.msra.mxu0 %v797
        %807 = vmatmul.bf16.gmra.mxu0 %v794
        %v808 = vpop.f32.mrf.mxu0
        %v809 = vadd.f32 0.0, %v808
        %v810 = vpop.f32.mrf.mxu0
        %811 = vdwg.mxu0
        %812 = vrot.lane.b32.xlu0 %v684, 112
        %v813 = vpop.permute.xlu0 %812
        %814 = vrot.lane.b32.xlu0 %v689, 112
        %v815 = vpop.permute.xlu0 %814
        %v817 = vsel %vm578, %v813, 0
        %v820 = vsel %vm578, %v815, 0
        %822 = vmatpush.bf16.xpose.msra.mxu0 0
        %823 = vmatpush.bf16.xpose.msra.mxu0 0
        %824 = vmatpush.bf16.xpose.msra.mxu0 0
        %825 = vmatpush.bf16.xpose.msra.mxu0 0
        %826 = vmatpush.bf16.xpose.msra.mxu0 0
        %827 = vmatpush.bf16.xpose.msra.mxu0 0
        %828 = vmatpush.bf16.xpose.msra.mxu0 0
        %829 = vmatpush.bf16.xpose.msra.mxu0 %v820
        %830 = vmatmul.bf16.gmra.mxu0 %v817
        %v831 = vpop.f32.mrf.mxu0
        %v832 = vadd.f32 0.0, %v831
        %v833 = vpop.f32.mrf.mxu0
        %834 = vdwg.mxu0
        %835 = vrot.lane.b32.xlu0 %v713, 112
        %v836 = vpop.permute.xlu0 %835
        %837 = vrot.lane.b32.xlu0 %v718, 112
        %v838 = vpop.permute.xlu0 %837
        %v840 = vsel %vm578, %v836, 0
        %v843 = vsel %vm578, %v838, 0
        %845 = vmatpush.bf16.xpose.msra.mxu0 0
        %846 = vmatpush.bf16.xpose.msra.mxu0 0
        %847 = vmatpush.bf16.xpose.msra.mxu0 0
        %848 = vmatpush.bf16.xpose.msra.mxu0 0
        %849 = vmatpush.bf16.xpose.msra.mxu0 0
        %850 = vmatpush.bf16.xpose.msra.mxu0 0
        %851 = vmatpush.bf16.xpose.msra.mxu0 0
        %852 = vmatpush.bf16.xpose.msra.mxu0 %v843
        %853 = vmatmul.bf16.gmra.mxu0 %v840
        %v854 = vpop.f32.mrf.mxu0
        %v855 = vadd.f32 0.0, %v854
        %v856 = vpop.f32.mrf.mxu0
        %857 = vdwg.mxu0
        %v858 = vsel %vm578, %v832, -inf
        %859 = vmax.xlane.f32.xlu0 %v858
        %v860 = vpop.xlane.xlu0 %859
        %v861 = vsel %vm578, %v855, -inf
        %862 = vmax.xlane.f32.xlu0 %v861
        %v863 = vpop.xlane.xlu0 %862
        %v864 = vsub.f32 %v832, %v860
        %v865 = vsub.f32 %v855, %v863
        %v866 = vmul.f32 %v864, 1.442695
        %v867 = vpow.pop %v866
        %v868 = vmul.f32 %v865, 1.442695
        %v869 = vpow.pop %v868
        %v870 = vsel %vm578, %v867, 0.0
        %871 = vadd.xlane.f32.xlu0 %v870
        %v872 = vpop.xlane.xlu0 %871
        %v873 = vsel %vm578, %v869, 0.0
        %874 = vadd.xlane.f32.xlu0 %v873
        %v875 = vpop.xlane.xlu0 %874
        %v876 = vrcp.pop %v872
        %v877 = vrcp.pop %v875
        %v878 = vmul.f32 %v867, %v876
        %v879 = vmul.f32 %v869, %v877
        %v880 = vpack.c.bf16 %v878, %v878
        %v881 = vpack.c.bf16 %v879, %v879
        %882 = vrot.lane.b32.xlu0 %v766, 112
        %v883 = vpop.permute.xlu0 %882
        %v885 = vsel %vm578, %v880, 0
        %v888 = vsel %vm646, %v883, 0
        %890 = vmatpush.bf16.msra.mxu0 0
        %891 = vmatpush.bf16.msra.mxu0 0
        %892 = vmatpush.bf16.msra.mxu0 0
        %893 = vmatpush.bf16.msra.mxu0 0
        %894 = vmatpush.bf16.msra.mxu0 0
        %895 = vmatpush.bf16.msra.mxu0 0
        %896 = vmatpush.bf16.msra.mxu0 0
        %897 = vmatpush.bf16.msra.mxu0 %v888
        %898 = vmatmul.bf16.gmra.mxu0 %v885
        %v899 = vpop.f32.mrf.mxu0
        %v900 = vadd.f32 0.0, %v899
        %v901 = vpop.f32.mrf.mxu0
        %902 = vdwg.mxu0
        %903 = vrot.lane.b32.xlu0 %v790, 112
        %v904 = vpop.permute.xlu0 %903
        %v906 = vsel %vm578, %v881, 0
        %v909 = vsel %vm646, %v904, 0
        %911 = vmatpush.bf16.msra.mxu0 0
        %912 = vmatpush.bf16.msra.mxu0 0
        %913 = vmatpush.bf16.msra.mxu0 0
        %914 = vmatpush.bf16.msra.mxu0 0
        %915 = vmatpush.bf16.msra.mxu0 0
        %916 = vmatpush.bf16.msra.mxu0 0
        %917 = vmatpush.bf16.msra.mxu0 0
        %918 = vmatpush.bf16.msra.mxu0 %v909
        %919 = vmatmul.bf16.gmra.mxu0 %v906
        %v920 = vpop.f32.mrf.mxu0
        %v921 = vadd.f32 0.0, %v920
        %v922 = vpop.f32.mrf.mxu0
        %923 = vdwg.mxu0
        %924 = vrot.lane.b32.xlu0 %v684, 104
        %v925 = vpop.permute.xlu0 %924
        %926 = vrot.lane.b32.xlu0 %v689, 104
        %v927 = vpop.permute.xlu0 %926
        %v929 = vsel %vm578, %v925, 0
        %v932 = vsel %vm578, %v927, 0
        %934 = vmatpush.bf16.xpose.msra.mxu0 0
        %935 = vmatpush.bf16.xpose.msra.mxu0 0
        %936 = vmatpush.bf16.xpose.msra.mxu0 0
        %937 = vmatpush.bf16.xpose.msra.mxu0 0
        %938 = vmatpush.bf16.xpose.msra.mxu0 0
        %939 = vmatpush.bf16.xpose.msra.mxu0 0
        %940 = vmatpush.bf16.xpose.msra.mxu0 0
        %941 = vmatpush.bf16.xpose.msra.mxu0 %v932
        %942 = vmatmul.bf16.gmra.mxu0 %v929
        %v943 = vpop.f32.mrf.mxu0
        %v944 = vadd.f32 0.0, %v943
        %v945 = vpop.f32.mrf.mxu0
        %946 = vdwg.mxu0
        %947 = vrot.lane.b32.xlu0 %v713, 104
        %v948 = vpop.permute.xlu0 %947
        %949 = vrot.lane.b32.xlu0 %v718, 104
        %v950 = vpop.permute.xlu0 %949
        %v952 = vsel %vm578, %v948, 0
        %v955 = vsel %vm578, %v950, 0
        %957 = vmatpush.bf16.xpose.msra.mxu0 0
        %958 = vmatpush.bf16.xpose.msra.mxu0 0
        %959 = vmatpush.bf16.xpose.msra.mxu0 0
        %960 = vmatpush.bf16.xpose.msra.mxu0 0
        %961 = vmatpush.bf16.xpose.msra.mxu0 0
        %962 = vmatpush.bf16.xpose.msra.mxu0 0
        %963 = vmatpush.bf16.xpose.msra.mxu0 0
        %964 = vmatpush.bf16.xpose.msra.mxu0 %v955
        %965 = vmatmul.bf16.gmra.mxu0 %v952
        %v966 = vpop.f32.mrf.mxu0
        %v967 = vadd.f32 0.0, %v966
        %v968 = vpop.f32.mrf.mxu0
        %969 = vdwg.mxu0
        %v970 = vsel %vm578, %v944, -inf
        %971 = vmax.xlane.f32.xlu0 %v970
        %v972 = vpop.xlane.xlu0 %971
        %v973 = vsel %vm578, %v967, -inf
        %974 = vmax.xlane.f32.xlu0 %v973
        %v975 = vpop.xlane.xlu0 %974
        %v976 = vsub.f32 %v944, %v972
        %v977 = vsub.f32 %v967, %v975
        %v978 = vmul.f32 %v976, 1.442695
        %v979 = vpow.pop %v978
        %v980 = vmul.f32 %v977, 1.442695
        %v981 = vpow.pop %v980
        %v982 = vsel %vm578, %v979, 0.0
        %983 = vadd.xlane.f32.xlu0 %v982
        %v984 = vpop.xlane.xlu0 %983
        %v985 = vsel %vm578, %v981, 0.0
        %986 = vadd.xlane.f32.xlu0 %v985
        %v987 = vpop.xlane.xlu0 %986
        %v988 = vrcp.pop %v984
        %v989 = vrcp.pop %v987
        %v990 = vmul.f32 %v979, %v988
        %v991 = vmul.f32 %v981, %v989
        %v992 = vpack.c.bf16 %v990, %v990
        %v993 = vpack.c.bf16 %v991, %v991
        %994 = vrot.lane.b32.xlu0 %v766, 104
        %v995 = vpop.permute.xlu0 %994
        %v997 = vsel %vm578, %v992, 0
        %v1000 = vsel %vm646, %v995, 0
        %1002 = vmatpush.bf16.msra.mxu0 0
        %1003 = vmatpush.bf16.msra.mxu0 0
        %1004 = vmatpush.bf16.msra.mxu0 0
        %1005 = vmatpush.bf16.msra.mxu0 0
        %1006 = vmatpush.bf16.msra.mxu0 0
        %1007 = vmatpush.bf16.msra.mxu0 0
        %1008 = vmatpush.bf16.msra.mxu0 0
        %1009 = vmatpush.bf16.msra.mxu0 %v1000
        %1010 = vmatmul.bf16.gmra.mxu0 %v997
        %v1011 = vpop.f32.mrf.mxu0
        %v1012 = vadd.f32 0.0, %v1011
        %v1013 = vpop.f32.mrf.mxu0
        %1014 = vdwg.mxu0
        %1015 = vrot.lane.b32.xlu0 %v790, 104
        %v1016 = vpop.permute.xlu0 %1015
        %v1018 = vsel %vm578, %v993, 0
        %v1021 = vsel %vm646, %v1016, 0
        %1023 = vmatpush.bf16.msra.mxu0 0
        %1024 = vmatpush.bf16.msra.mxu0 0
        %1025 = vmatpush.bf16.msra.mxu0 0
        %1026 = vmatpush.bf16.msra.mxu0 0
        %1027 = vmatpush.bf16.msra.mxu0 0
        %1028 = vmatpush.bf16.msra.mxu0 0
        %1029 = vmatpush.bf16.msra.mxu0 0
        %1030 = vmatpush.bf16.msra.mxu0 %v1021
        %1031 = vmatmul.bf16.gmra.mxu0 %v1018
        %v1032 = vpop.f32.mrf.mxu0
        %v1033 = vadd.f32 0.0, %v1032
        %v1034 = vpop.f32.mrf.mxu0
        %1035 = vdwg.mxu0
        %1038 = vrot.lane.b32.xlu0 %v785, 8
        %v1039 = vpop.permute.xlu0 %1038
        %1040 = vrot.lane.b32.xlu0 %v809, 8
        %v1041 = vpop.permute.xlu0 %1040
        %1046 = vrot.lane.b32.xlu0 %v900, 16
        %v1047 = vpop.permute.xlu0 %1046
        %1048 = vrot.lane.b32.xlu0 %v921, 16
        %v1049 = vpop.permute.xlu0 %1048
        %1054 = vrot.lane.b32.xlu0 %v1012, 24
        %v1055 = vpop.permute.xlu0 %1054
        %1056 = vrot.lane.b32.xlu0 %v1033, 24
        %v1057 = vpop.permute.xlu0 %1056
        %v1060 = vsel %vm578, %v660, %v1039
        %v1061 = vsel %vm578, %v679, %v1041
        %vm1062 = vcmask 130048
        %v1063 = vsel %vm1062, %v1060, %v1047
        %v1064 = vsel %vm1062, %v1061, %v1049
        %vm1065 = vcmask 195584
        %v1066 = vsel %vm1065, %v1063, %v1055
        %v1067 = vsel %vm1065, %v1064, %v1057
        %v1068 = vld [vmem:[%s3] sm:$0xf]
        %v1069 = vld [vmem:[%s3 + $0x4] sm:$0xf]
        %v1070 = vld [vmem:[%s3 + $0x8] sm:$0xf]
        %v1071 = vld [vmem:[%s3 + $0xc] sm:$0xf]
        %v1072 = vpack.c.bf16 %v1067, %v1066
        %v1073 = vperm.slane %v456, 0
        %v1078 = vunpack.c.l.b16 %v1068
        %v1079 = vunpack.c.l.b16 %v1069
        %v1080 = vunpack.c.l.b16 %v1070
        %v1081 = vunpack.c.l.b16 %v1071
        %v1082 = vpack.c.b16 %v1079, %v1078
        %v1083 = vpack.c.b16 %v1081, %v1080
        %v1085 = vsel %vm483, %v1072, 0
        %v1088 = vsel %vm483, %v1082, 0
        %v1091 = vsel %vm483, %v1083, 0
        %1093 = vmatpush.bf16.xpose.msra.mxu0 0
        %1094 = vmatpush.bf16.xpose.msra.mxu0 0
        %1095 = vmatpush.bf16.xpose.msra.mxu0 0
        %1096 = vmatpush.bf16.xpose.msra.mxu0 0
        %1097 = vmatpush.bf16.xpose.msra.mxu0 0
        %1098 = vmatpush.bf16.xpose.msra.mxu0 0
        %1099 = vmatpush.bf16.xpose.msra.mxu0 %v1091
        %1100 = vmatpush.bf16.xpose.msra.mxu0 %v1088
        %1101 = vmatmul.bf16.gmra.mxu0 %v1085
        %v1102 = vpop.f32.mrf.mxu0
        %v1103 = vadd.f32 %v1073, %v1102
        %v1104 = vpop.f32.mrf.mxu0
        %v1105 = vadd.f32 %v1073, %v1104
        %1106 = vdwg.mxu0
        %v1107 = vadd.f32 %v1103, %v452
        %v1108 = vadd.f32 %v1105, %v453
        %v1109 = vsel %vm483, %v1107, 0.0
        %1110 = vadd.xlane.f32.xlu0 %v1109
        %v1111 = vpop.xlane.xlu0 %1110
        %v1112 = vsel %vm483, %v1108, 0.0
        %1113 = vadd.xlane.f32.xlu0 %v1112
        %v1114 = vpop.xlane.xlu0 %1113
        %v1115 = vrcp.pop 32.0
        %v1116 = vmul.f32 32.0, %v1115
        %v1117 = vsub.f32 1.0, %v1116
        %v1118 = vmul.f32 %v1115, %v1117
        %v1119 = vadd.f32 %v1115, %v1118
        %vm1120 = vweird.f32 %v1115
        %v1121 = vsel %vm1120, %v1115, %v1119
        %v1122 = vmul.f32 %v1111, %v1121
        %v1123 = vmul.f32 %v1114, %v1121
        %v1124 = vsub.f32 %v1107, %v1122
        %v1125 = vsub.f32 %v1108, %v1123
        %v1126 = vmul.f32 %v1124, %v1124
        %v1127 = vmul.f32 %v1125, %v1125
        %v1128 = vsel %vm483, %v1126, 0.0
        %1129 = vadd.xlane.f32.xlu0 %v1128
        %v1130 = vpop.xlane.xlu0 %1129
        %v1131 = vsel %vm483, %v1127, 0.0
        %1132 = vadd.xlane.f32.xlu0 %v1131
        %v1133 = vpop.xlane.xlu0 %1132
        %v1134 = vmul.f32 %v1130, %v1121
        %v1135 = vmul.f32 %v1133, %v1121
        %v1136 = vadd.f32 %v1134, 1e-05
        %v1137 = vadd.f32 %v1135, 1e-05
        %v1138 = vrsqrt.pop %v1136
        %v1139 = vmul.f32 %v1138, %v1136
        %v1140 = vmul.f32 %v1139, %v1138
        %v1141 = vmul.f32 0.5, %v1140
        %v1142 = vsub.f32 1.5, %v1141
        %v1143 = vmul.f32 %v1138, %v1142
        %vm1144 = vweird.f32 %v1136
        %vm1145 = vweird.f32 %v1138
        %vm1146 = vmor %vm1144, %vm1145
        %v1147 = vsel %vm1146, %v1138, %v1143
        %v1148 = vrsqrt.pop %v1137
        %v1149 = vmul.f32 %v1148, %v1137
        %v1150 = vmul.f32 %v1149, %v1148
        %v1151 = vmul.f32 0.5, %v1150
        %v1152 = vsub.f32 1.5, %v1151
        %v1153 = vmul.f32 %v1148, %v1152
        %vm1154 = vweird.f32 %v1137
        %vm1155 = vweird.f32 %v1148
        %vm1156 = vmor %vm1154, %vm1155
        %v1157 = vsel %vm1156, %v1148, %v1153
        %v1158 = vmul.f32 %v1124, %v1147
        %v1159 = vmul.f32 %v1125, %v1157
        %v1160 = vperm.slane %v456, 1
        %v1161 = vmul.f32 %v1158, %v1160
        %v1162 = vmul.f32 %v1159, %v1160
        %v1163 = vperm.slane %v456, 2
        %v1164 = vadd.f32 %v1161, %v1163
        %v1165 = vadd.f32 %v1162, %v1163
        %v1166 = vld [vmem:[%s4] sm:$0xf]
        %v1167 = vld [vmem:[%s4 + $0x4] sm:$0xf]
        %v1168 = vld [vmem:[%s4 + $0x8] sm:$0xf]
        %v1169 = vld [vmem:[%s4 + $0xc] sm:$0xf]
        %v1170 = vld [vmem:[%s4 + $0x10] sm:$0xf]
        %v1171 = vld [vmem:[%s4 + $0x14] sm:$0xf]
        %v1172 = vld [vmem:[%s4 + $0x18] sm:$0xf]
        %v1173 = vld [vmem:[%s4 + $0x1c] sm:$0xf]
        %v1174 = vld [vmem:[%s4 + $0x20] sm:$0xf]
        %v1175 = vld [vmem:[%s4 + $0x24] sm:$0xf]
        %v1176 = vld [vmem:[%s4 + $0x28] sm:$0xf]
        %v1177 = vld [vmem:[%s4 + $0x2c] sm:$0xf]
        %v1178 = vpack.c.bf16 %v1165, %v1164
        %v1179 = vperm.slane %v458, 1
        %v1184 = vunpack.c.l.b16 %v1166
        %v1185 = vunpack.c.l.b16 %v1167
        %v1186 = vunpack.c.l.b16 %v1168
        %v1187 = vunpack.c.l.b16 %v1169
        %v1188 = vpack.c.b16 %v1185, %v1184
        %v1189 = vpack.c.b16 %v1187, %v1186
        %v1191 = vsel %vm483, %v1178, 0
        %v1194 = vsel %vm483, %v1188, 0
        %v1197 = vsel %vm483, %v1189, 0
        %1199 = vmatpush.bf16.xpose.msra.mxu0 0
        %1200 = vmatpush.bf16.xpose.msra.mxu0 0
        %1201 = vmatpush.bf16.xpose.msra.mxu0 0
        %1202 = vmatpush.bf16.xpose.msra.mxu0 0
        %1203 = vmatpush.bf16.xpose.msra.mxu0 0
        %1204 = vmatpush.bf16.xpose.msra.mxu0 0
        %1205 = vmatpush.bf16.xpose.msra.mxu0 %v1197
        %1206 = vmatpush.bf16.xpose.msra.mxu0 %v1194
        %1207 = vmatmul.bf16.gmra.mxu0 %v1191
        %v1208 = vpop.f32.mrf.mxu0
        %v1209 = vadd.f32 %v1179, %v1208
        %v1210 = vpop.f32.mrf.mxu0
        %v1211 = vadd.f32 %v1179, %v1210
        %1212 = vdwg.mxu0
        %v1213 = vpack.c.bf16 %v455, %v454
        %v1218 = vunpack.c.l.b16 %v1170
        %v1219 = vunpack.c.l.b16 %v1171
        %v1220 = vunpack.c.l.b16 %v1172
        %v1221 = vunpack.c.l.b16 %v1173
        %v1222 = vpack.c.b16 %v1219, %v1218
        %v1223 = vpack.c.b16 %v1221, %v1220
        %1225 = vrot.lane.b32.xlu0 %v1179, 96
        %v1226 = vpop.permute.xlu0 %1225
        %v1229 = vsel %vm483, %v1213, 0
        %v1232 = vsel %vm483, %v1222, 0
        %v1235 = vsel %vm483, %v1223, 0
        %1237 = vmatpush.bf16.xpose.msra.mxu0 0
        %1238 = vmatpush.bf16.xpose.msra.mxu0 0
        %1239 = vmatpush.bf16.xpose.msra.mxu0 0
        %1240 = vmatpush.bf16.xpose.msra.mxu0 0
        %1241 = vmatpush.bf16.xpose.msra.mxu0 0
        %1242 = vmatpush.bf16.xpose.msra.mxu0 0
        %1243 = vmatpush.bf16.xpose.msra.mxu0 %v1235
        %1244 = vmatpush.bf16.xpose.msra.mxu0 %v1232
        %1245 = vmatmul.bf16.gmra.mxu0 %v1229
        %v1246 = vpop.f32.mrf.mxu0
        %v1247 = vadd.f32 %v1226, %v1246
        %v1248 = vpop.f32.mrf.mxu0
        %v1249 = vadd.f32 %v1226, %v1248
        %1250 = vdwg.mxu0
        %v1255 = vunpack.c.l.b16 %v1174
        %v1256 = vunpack.c.l.b16 %v1175
        %v1257 = vunpack.c.l.b16 %v1176
        %v1258 = vunpack.c.l.b16 %v1177
        %v1259 = vpack.c.b16 %v1256, %v1255
        %v1260 = vpack.c.b16 %v1258, %v1257
        %1261 = vrot.lane.b32.xlu0 %v1179, 64
        %v1262 = vpop.permute.xlu0 %1261
        %v1265 = vsel %vm483, %v1259, 0
        %v1268 = vsel %vm483, %v1260, 0
        %1270 = vmatpush.bf16.xpose.msra.mxu0 0
        %1271 = vmatpush.bf16.xpose.msra.mxu0 0
        %1272 = vmatpush.bf16.xpose.msra.mxu0 0
        %1273 = vmatpush.bf16.xpose.msra.mxu0 0
        %1274 = vmatpush.bf16.xpose.msra.mxu0 0
        %1275 = vmatpush.bf16.xpose.msra.mxu0 0
        %1276 = vmatpush.bf16.xpose.msra.mxu0 %v1268
        %1277 = vmatpush.bf16.xpose.msra.mxu0 %v1265
        %1278 = vmatmul.bf16.gmra.mxu0 %v1229
        %v1279 = vpop.f32.mrf.mxu0
        %v1280 = vadd.f32 %v1262, %v1279
        %v1281 = vpop.f32.mrf.mxu0
        %v1282 = vadd.f32 %v1262, %v1281
        %1283 = vdwg.mxu0
        %v1284 = vpack.c.bf16 %v1209, %v1209
        %v1285 = vpack.c.bf16 %v1211, %v1211
        %v1286 = vpack.c.bf16 %v1247, %v1247
        %v1287 = vpack.c.bf16 %v1249, %v1249
        %v1289 = vsel %vm578, %v1284, 0
        %v1292 = vsel %vm578, %v1286, 0
        %1294 = vmatpush.bf16.xpose.msra.mxu0 0
        %1295 = vmatpush.bf16.xpose.msra.mxu0 0
        %1296 = vmatpush.bf16.xpose.msra.mxu0 0
        %1297 = vmatpush.bf16.xpose.msra.mxu0 0
        %1298 = vmatpush.bf16.xpose.msra.mxu0 0
        %1299 = vmatpush.bf16.xpose.msra.mxu0 0
        %1300 = vmatpush.bf16.xpose.msra.mxu0 0
        %1301 = vmatpush.bf16.xpose.msra.mxu0 %v1292
        %1302 = vmatmul.bf16.gmra.mxu0 %v1289
        %v1303 = vpop.f32.mrf.mxu0
        %v1304 = vadd.f32 0.0, %v1303
        %v1305 = vpop.f32.mrf.mxu0
        %1306 = vdwg.mxu0
        %v1308 = vsel %vm578, %v1285, 0
        %v1311 = vsel %vm578, %v1287, 0
        %1313 = vmatpush.bf16.xpose.msra.mxu0 0
        %1314 = vmatpush.bf16.xpose.msra.mxu0 0
        %1315 = vmatpush.bf16.xpose.msra.mxu0 0
        %1316 = vmatpush.bf16.xpose.msra.mxu0 0
        %1317 = vmatpush.bf16.xpose.msra.mxu0 0
        %1318 = vmatpush.bf16.xpose.msra.mxu0 0
        %1319 = vmatpush.bf16.xpose.msra.mxu0 0
        %1320 = vmatpush.bf16.xpose.msra.mxu0 %v1311
        %1321 = vmatmul.bf16.gmra.mxu0 %v1308
        %v1322 = vpop.f32.mrf.mxu0
        %v1323 = vadd.f32 0.0, %v1322
        %v1324 = vpop.f32.mrf.mxu0
        %1325 = vdwg.mxu0
        %v1326 = vsel %vm578, %v1304, -inf
        %1327 = vmax.xlane.f32.xlu0 %v1326
        %v1328 = vpop.xlane.xlu0 %1327
        %v1329 = vsel %vm578, %v1323, -inf
        %1330 = vmax.xlane.f32.xlu0 %v1329
        %v1331 = vpop.xlane.xlu0 %1330
        %v1332 = vsub.f32 %v1304, %v1328
        %v1333 = vsub.f32 %v1323, %v1331
        %v1334 = vmul.f32 %v1332, 1.442695
        %v1335 = vpow.pop %v1334
        %v1336 = vmul.f32 %v1333, 1.442695
        %v1337 = vpow.pop %v1336
        %v1338 = vsel %vm578, %v1335, 0.0
        %1339 = vadd.xlane.f32.xlu0 %v1338
        %v1340 = vpop.xlane.xlu0 %1339
        %v1341 = vsel %vm578, %v1337, 0.0
        %1342 = vadd.xlane.f32.xlu0 %v1341
        %v1343 = vpop.xlane.xlu0 %1342
        %v1344 = vrcp.pop %v1340
        %v1345 = vrcp.pop %v1343
        %v1346 = vmul.f32 %v1335, %v1344
        %v1347 = vmul.f32 %v1337, %v1345
        %v1348 = vadd.f32 %v1346, 0.0
        %v1349 = vadd.f32 %v1347, 0.0
        %v1350 = vpack.c.bf16 %v1346, %v1346
        %v1351 = vpack.c.bf16 %v1347, %v1347
        %v1352 = vpack.c.bf16 %v1280, %v1280
        %v1353 = vpack.c.bf16 %v1282, %v1282
        %v1355 = vsel %vm578, %v1350, 0
        %v1358 = vsel %vm646, %v1352, 0
        %1360 = vmatpush.bf16.msra.mxu0 0
        %1361 = vmatpush.bf16.msra.mxu0 0
        %1362 = vmatpush.bf16.msra.mxu0 0
        %1363 = vmatpush.bf16.msra.mxu0 0
        %1364 = vmatpush.bf16.msra.mxu0 0
        %1365 = vmatpush.bf16.msra.mxu0 0
        %1366 = vmatpush.bf16.msra.mxu0 0
        %1367 = vmatpush.bf16.msra.mxu0 %v1358
        %1368 = vmatmul.bf16.gmra.mxu0 %v1355
        %v1369 = vpop.f32.mrf.mxu0
        %v1370 = vadd.f32 0.0, %v1369
        %v1371 = vpop.f32.mrf.mxu0
        %1372 = vdwg.mxu0
        %v1374 = vsel %vm578, %v1351, 0
        %v1377 = vsel %vm646, %v1353, 0
        %1379 = vmatpush.bf16.msra.mxu0 0
        %1380 = vmatpush.bf16.msra.mxu0 0
        %1381 = vmatpush.bf16.msra.mxu0 0
        %1382 = vmatpush.bf16.msra.mxu0 0
        %1383 = vmatpush.bf16.msra.mxu0 0
        %1384 = vmatpush.bf16.msra.mxu0 0
        %1385 = vmatpush.bf16.msra.mxu0 0
        %1386 = vmatpush.bf16.msra.mxu0 %v1377
        %1387 = vmatmul.bf16.gmra.mxu0 %v1374
        %v1388 = vpop.f32.mrf.mxu0
        %v1389 = vadd.f32 0.0, %v1388
        %v1390 = vpop.f32.mrf.mxu0
        %1391 = vdwg.mxu0
        %v1393 = vunpack.c.l.b16 %v1284
        %v1394 = vpack.c.b16 %v1393, %v1393
        %1395 = vrot.lane.b32.xlu0 %v1394, 120
        %v1396 = vpop.permute.xlu0 %1395
        %v1398 = vunpack.c.l.b16 %v1286
        %v1399 = vpack.c.b16 %v1398, %v1398
        %1400 = vrot.lane.b32.xlu0 %v1399, 120
        %v1401 = vpop.permute.xlu0 %1400
        %v1403 = vsel %vm578, %v1396, 0
        %v1406 = vsel %vm578, %v1401, 0
        %1408 = vmatpush.bf16.xpose.msra.mxu0 0
        %1409 = vmatpush.bf16.xpose.msra.mxu0 0
        %1410 = vmatpush.bf16.xpose.msra.mxu0 0
        %1411 = vmatpush.bf16.xpose.msra.mxu0 0
        %1412 = vmatpush.bf16.xpose.msra.mxu0 0
        %1413 = vmatpush.bf16.xpose.msra.mxu0 0
        %1414 = vmatpush.bf16.xpose.msra.mxu0 0
        %1415 = vmatpush.bf16.xpose.msra.mxu0 %v1406
        %1416 = vmatmul.bf16.gmra.mxu0 %v1403
        %v1417 = vpop.f32.mrf.mxu0
        %v1418 = vadd.f32 0.0, %v1417
        %v1419 = vpop.f32.mrf.mxu0
        %1420 = vdwg.mxu0
        %v1422 = vunpack.c.l.b16 %v1285
        %v1423 = vpack.c.b16 %v1422, %v1422
        %1424 = vrot.lane.b32.xlu0 %v1423, 120
        %v1425 = vpop.permute.xlu0 %1424
        %v1427 = vunpack.c.l.b16 %v1287
        %v1428 = vpack.c.b16 %v1427, %v1427
        %1429 = vrot.lane.b32.xlu0 %v1428, 120
        %v1430 = vpop.permute.xlu0 %1429
        %v1432 = vsel %vm578, %v1425, 0
        %v1435 = vsel %vm578, %v1430, 0
        %1437 = vmatpush.bf16.xpose.msra.mxu0 0
        %1438 = vmatpush.bf16.xpose.msra.mxu0 0
        %1439 = vmatpush.bf16.xpose.msra.mxu0 0
        %1440 = vmatpush.bf16.xpose.msra.mxu0 0
        %1441 = vmatpush.bf16.xpose.msra.mxu0 0
        %1442 = vmatpush.bf16.xpose.msra.mxu0 0
        %1443 = vmatpush.bf16.xpose.msra.mxu0 0
        %1444 = vmatpush.bf16.xpose.msra.mxu0 %v1435
        %1445 = vmatmul.bf16.gmra.mxu0 %v1432
        %v1446 = vpop.f32.mrf.mxu0
        %v1447 = vadd.f32 0.0, %v1446
        %v1448 = vpop.f32.mrf.mxu0
        %1449 = vdwg.mxu0
        %v1450 = vsel %vm578, %v1418, -inf
        %1451 = vmax.xlane.f32.xlu0 %v1450
        %v1452 = vpop.xlane.xlu0 %1451
        %v1453 = vsel %vm578, %v1447, -inf
        %1454 = vmax.xlane.f32.xlu0 %v1453
        %v1455 = vpop.xlane.xlu0 %1454
        %v1456 = vsub.f32 %v1418, %v1452
        %v1457 = vsub.f32 %v1447, %v1455
        %v1458 = vmul.f32 %v1456, 1.442695
        %v1459 = vpow.pop %v1458
        %v1460 = vmul.f32 %v1457, 1.442695
        %v1461 = vpow.pop %v1460
        %v1462 = vsel %vm578, %v1459, 0.0
        %1463 = vadd.xlane.f32.xlu0 %v1462
        %v1464 = vpop.xlane.xlu0 %1463
        %v1465 = vsel %vm578, %v1461, 0.0
        %1466 = vadd.xlane.f32.xlu0 %v1465
        %v1467 = vpop.xlane.xlu0 %1466
        %v1468 = vrcp.pop %v1464
        %v1469 = vrcp.pop %v1467
        %v1470 = vmul.f32 %v1459, %v1468
        %v1471 = vmul.f32 %v1461, %v1469
        %v1472 = vadd.f32 %v1348, %v1470
        %v1473 = vadd.f32 %v1349, %v1471
        %v1474 = vpack.c.bf16 %v1470, %v1470
        %v1475 = vpack.c.bf16 %v1471, %v1471
        %v1477 = vunpack.c.l.b16 %v1352
        %v1478 = vpack.c.b16 %v1477, %v1477
        %1479 = vrot.lane.b32.xlu0 %v1478, 120
        %v1480 = vpop.permute.xlu0 %1479
        %v1482 = vsel %vm578, %v1474, 0
        %v1485 = vsel %vm646, %v1480, 0
        %1487 = vmatpush.bf16.msra.mxu0 0
        %1488 = vmatpush.bf16.msra.mxu0 0
        %1489 = vmatpush.bf16.msra.mxu0 0
        %1490 = vmatpush.bf16.msra.mxu0 0
        %1491 = vmatpush.bf16.msra.mxu0 0
        %1492 = vmatpush.bf16.msra.mxu0 0
        %1493 = vmatpush.bf16.msra.mxu0 0
        %1494 = vmatpush.bf16.msra.mxu0 %v1485
        %1495 = vmatmul.bf16.gmra.mxu0 %v1482
        %v1496 = vpop.f32.mrf.mxu0
        %v1497 = vadd.f32 0.0, %v1496
        %v1498 = vpop.f32.mrf.mxu0
        %1499 = vdwg.mxu0
        %v1501 = vunpack.c.l.b16 %v1353
        %v1502 = vpack.c.b16 %v1501, %v1501
        %1503 = vrot.lane.b32.xlu0 %v1502, 120
        %v1504 = vpop.permute.xlu0 %1503
        %v1506 = vsel %vm578, %v1475, 0
        %v1509 = vsel %vm646, %v1504, 0
        %1511 = vmatpush.bf16.msra.mxu0 0
        %1512 = vmatpush.bf16.msra.mxu0 0
        %1513 = vmatpush.bf16.msra.mxu0 0
        %1514 = vmatpush.bf16.msra.mxu0 0
        %1515 = vmatpush.bf16.msra.mxu0 0
        %1516 = vmatpush.bf16.msra.mxu0 0
        %1517 = vmatpush.bf16.msra.mxu0 0
        %1518 = vmatpush.bf16.msra.mxu0 %v1509
        %1519 = vmatmul.bf16.gmra.mxu0 %v1506
        %v1520 = vpop.f32.mrf.mxu0
        %v1521 = vadd.f32 0.0, %v1520
        %v1522 = vpop.f32.mrf.mxu0
        %1523 = vdwg.mxu0
        %1524 = vrot.lane.b32.xlu0 %v1394, 112
        %v1525 = vpop.permute.xlu0 %1524
        %1526 = vrot.lane.b32.xlu0 %v1399, 112
        %v1527 = vpop.permute.xlu0 %1526
        %v1529 = vsel %vm578, %v1525, 0
        %v1532 = vsel %vm578, %v1527, 0
        %1534 = vmatpush.bf16.xpose.msra.mxu0 0
        %1535 = vmatpush.bf16.xpose.msra.mxu0 0
        %1536 = vmatpush.bf16.xpose.msra.mxu0 0
        %1537 = vmatpush.bf16.xpose.msra.mxu0 0
        %1538 = vmatpush.bf16.xpose.msra.mxu0 0
        %1539 = vmatpush.bf16.xpose.msra.mxu0 0
        %1540 = vmatpush.bf16.xpose.msra.mxu0 0
        %1541 = vmatpush.bf16.xpose.msra.mxu0 %v1532
        %1542 = vmatmul.bf16.gmra.mxu0 %v1529
        %v1543 = vpop.f32.mrf.mxu0
        %v1544 = vadd.f32 0.0, %v1543
        %v1545 = vpop.f32.mrf.mxu0
        %1546 = vdwg.mxu0
        %1547 = vrot.lane.b32.xlu0 %v1423, 112
        %v1548 = vpop.permute.xlu0 %1547
        %1549 = vrot.lane.b32.xlu0 %v1428, 112
        %v1550 = vpop.permute.xlu0 %1549
        %v1552 = vsel %vm578, %v1548, 0
        %v1555 = vsel %vm578, %v1550, 0
        %1557 = vmatpush.bf16.xpose.msra.mxu0 0
        %1558 = vmatpush.bf16.xpose.msra.mxu0 0
        %1559 = vmatpush.bf16.xpose.msra.mxu0 0
        %1560 = vmatpush.bf16.xpose.msra.mxu0 0
        %1561 = vmatpush.bf16.xpose.msra.mxu0 0
        %1562 = vmatpush.bf16.xpose.msra.mxu0 0
        %1563 = vmatpush.bf16.xpose.msra.mxu0 0
        %1564 = vmatpush.bf16.xpose.msra.mxu0 %v1555
        %1565 = vmatmul.bf16.gmra.mxu0 %v1552
        %v1566 = vpop.f32.mrf.mxu0
        %v1567 = vadd.f32 0.0, %v1566
        %v1568 = vpop.f32.mrf.mxu0
        %1569 = vdwg.mxu0
        %v1570 = vsel %vm578, %v1544, -inf
        %1571 = vmax.xlane.f32.xlu0 %v1570
        %v1572 = vpop.xlane.xlu0 %1571
        %v1573 = vsel %vm578, %v1567, -inf
        %1574 = vmax.xlane.f32.xlu0 %v1573
        %v1575 = vpop.xlane.xlu0 %1574
        %v1576 = vsub.f32 %v1544, %v1572
        %v1577 = vsub.f32 %v1567, %v1575
        %v1578 = vmul.f32 %v1576, 1.442695
        %v1579 = vpow.pop %v1578
        %v1580 = vmul.f32 %v1577, 1.442695
        %v1581 = vpow.pop %v1580
        %v1582 = vsel %vm578, %v1579, 0.0
        %1583 = vadd.xlane.f32.xlu0 %v1582
        %v1584 = vpop.xlane.xlu0 %1583
        %v1585 = vsel %vm578, %v1581, 0.0
        %1586 = vadd.xlane.f32.xlu0 %v1585
        %v1587 = vpop.xlane.xlu0 %1586
        %v1588 = vrcp.pop %v1584
        %v1589 = vrcp.pop %v1587
        %v1590 = vmul.f32 %v1579, %v1588
        %v1591 = vmul.f32 %v1581, %v1589
        %v1592 = vadd.f32 %v1472, %v1590
        %v1593 = vadd.f32 %v1473, %v1591
        %v1594 = vpack.c.bf16 %v1590, %v1590
        %v1595 = vpack.c.bf16 %v1591, %v1591
        %1596 = vrot.lane.b32.xlu0 %v1478, 112
        %v1597 = vpop.permute.xlu0 %1596
        %v1599 = vsel %vm578, %v1594, 0
        %v1602 = vsel %vm646, %v1597, 0
        %1604 = vmatpush.bf16.msra.mxu0 0
        %1605 = vmatpush.bf16.msra.mxu0 0
        %1606 = vmatpush.bf16.msra.mxu0 0
        %1607 = vmatpush.bf16.msra.mxu0 0
        %1608 = vmatpush.bf16.msra.mxu0 0
        %1609 = vmatpush.bf16.msra.mxu0 0
        %1610 = vmatpush.bf16.msra.mxu0 0
        %1611 = vmatpush.bf16.msra.mxu0 %v1602
        %1612 = vmatmul.bf16.gmra.mxu0 %v1599
        %v1613 = vpop.f32.mrf.mxu0
        %v1614 = vadd.f32 0.0, %v1613
        %v1615 = vpop.f32.mrf.mxu0
        %1616 = vdwg.mxu0
        %1617 = vrot.lane.b32.xlu0 %v1502, 112
        %v1618 = vpop.permute.xlu0 %1617
        %v1620 = vsel %vm578, %v1595, 0
        %v1623 = vsel %vm646, %v1618, 0
        %1625 = vmatpush.bf16.msra.mxu0 0
        %1626 = vmatpush.bf16.msra.mxu0 0
        %1627 = vmatpush.bf16.msra.mxu0 0
        %1628 = vmatpush.bf16.msra.mxu0 0
        %1629 = vmatpush.bf16.msra.mxu0 0
        %1630 = vmatpush.bf16.msra.mxu0 0
        %1631 = vmatpush.bf16.msra.mxu0 0
        %1632 = vmatpush.bf16.msra.mxu0 %v1623
        %1633 = vmatmul.bf16.gmra.mxu0 %v1620
        %v1634 = vpop.f32.mrf.mxu0
        %v1635 = vadd.f32 0.0, %v1634
        %v1636 = vpop.f32.mrf.mxu0
        %1637 = vdwg.mxu0
        %1638 = vrot.lane.b32.xlu0 %v1394, 104
        %v1639 = vpop.permute.xlu0 %1638
        %1640 = vrot.lane.b32.xlu0 %v1399, 104
        %v1641 = vpop.permute.xlu0 %1640
        %v1643 = vsel %vm578, %v1639, 0
        %v1646 = vsel %vm578, %v1641, 0
        %1648 = vmatpush.bf16.xpose.msra.mxu0 0
        %1649 = vmatpush.bf16.xpose.msra.mxu0 0
        %1650 = vmatpush.bf16.xpose.msra.mxu0 0
        %1651 = vmatpush.bf16.xpose.msra.mxu0 0
        %1652 = vmatpush.bf16.xpose.msra.mxu0 0
        %1653 = vmatpush.bf16.xpose.msra.mxu0 0
        %1654 = vmatpush.bf16.xpose.msra.mxu0 0
        %1655 = vmatpush.bf16.xpose.msra.mxu0 %v1646
        %1656 = vmatmul.bf16.gmra.mxu0 %v1643
        %v1657 = vpop.f32.mrf.mxu0
        %v1658 = vadd.f32 0.0, %v1657
        %v1659 = vpop.f32.mrf.mxu0
        %1660 = vdwg.mxu0
        %1661 = vrot.lane.b32.xlu0 %v1423, 104
        %v1662 = vpop.permute.xlu0 %1661
        %1663 = vrot.lane.b32.xlu0 %v1428, 104
        %v1664 = vpop.permute.xlu0 %1663
        %v1666 = vsel %vm578, %v1662, 0
        %v1669 = vsel %vm578, %v1664, 0
        %1671 = vmatpush.bf16.xpose.msra.mxu0 0
        %1672 = vmatpush.bf16.xpose.msra.mxu0 0
        %1673 = vmatpush.bf16.xpose.msra.mxu0 0
        %1674 = vmatpush.bf16.xpose.msra.mxu0 0
        %1675 = vmatpush.bf16.xpose.msra.mxu0 0
        %1676 = vmatpush.bf16.xpose.msra.mxu0 0
        %1677 = vmatpush.bf16.xpose.msra.mxu0 0
        %1678 = vmatpush.bf16.xpose.msra.mxu0 %v1669
        %1679 = vmatmul.bf16.gmra.mxu0 %v1666
        %v1680 = vpop.f32.mrf.mxu0
        %v1681 = vadd.f32 0.0, %v1680
        %v1682 = vpop.f32.mrf.mxu0
        %1683 = vdwg.mxu0
        %v1684 = vsel %vm578, %v1658, -inf
        %1685 = vmax.xlane.f32.xlu0 %v1684
        %v1686 = vpop.xlane.xlu0 %1685
        %v1687 = vsel %vm578, %v1681, -inf
        %1688 = vmax.xlane.f32.xlu0 %v1687
        %v1689 = vpop.xlane.xlu0 %1688
        %v1690 = vsub.f32 %v1658, %v1686
        %v1691 = vsub.f32 %v1681, %v1689
        %v1692 = vmul.f32 %v1690, 1.442695
        %v1693 = vpow.pop %v1692
        %v1694 = vmul.f32 %v1691, 1.442695
        %v1695 = vpow.pop %v1694
        %v1696 = vsel %vm578, %v1693, 0.0
        %1697 = vadd.xlane.f32.xlu0 %v1696
        %v1698 = vpop.xlane.xlu0 %1697
        %v1699 = vsel %vm578, %v1695, 0.0
        %1700 = vadd.xlane.f32.xlu0 %v1699
        %v1701 = vpop.xlane.xlu0 %1700
        %v1702 = vrcp.pop %v1698
        %v1703 = vrcp.pop %v1701
        %v1704 = vmul.f32 %v1693, %v1702
        %v1705 = vmul.f32 %v1695, %v1703
        %v1706 = vadd.f32 %v1592, %v1704
        %v1707 = vadd.f32 %v1593, %v1705
        %v1708 = vpack.c.bf16 %v1704, %v1704
        %v1709 = vpack.c.bf16 %v1705, %v1705
        %1710 = vrot.lane.b32.xlu0 %v1478, 104
        %v1711 = vpop.permute.xlu0 %1710
        %v1713 = vsel %vm578, %v1708, 0
        %v1716 = vsel %vm646, %v1711, 0
        %1718 = vmatpush.bf16.msra.mxu0 0
        %1719 = vmatpush.bf16.msra.mxu0 0
        %1720 = vmatpush.bf16.msra.mxu0 0
        %1721 = vmatpush.bf16.msra.mxu0 0
        %1722 = vmatpush.bf16.msra.mxu0 0
        %1723 = vmatpush.bf16.msra.mxu0 0
        %1724 = vmatpush.bf16.msra.mxu0 0
        %1725 = vmatpush.bf16.msra.mxu0 %v1716
        %1726 = vmatmul.bf16.gmra.mxu0 %v1713
        %v1727 = vpop.f32.mrf.mxu0
        %v1728 = vadd.f32 0.0, %v1727
        %v1729 = vpop.f32.mrf.mxu0
        %1730 = vdwg.mxu0
        %1731 = vrot.lane.b32.xlu0 %v1502, 104
        %v1732 = vpop.permute.xlu0 %1731
        %v1734 = vsel %vm578, %v1709, 0
        %v1737 = vsel %vm646, %v1732, 0
        %1739 = vmatpush.bf16.msra.mxu0 0
        %1740 = vmatpush.bf16.msra.mxu0 0
        %1741 = vmatpush.bf16.msra.mxu0 0
        %1742 = vmatpush.bf16.msra.mxu0 0
        %1743 = vmatpush.bf16.msra.mxu0 0
        %1744 = vmatpush.bf16.msra.mxu0 0
        %1745 = vmatpush.bf16.msra.mxu0 0
        %1746 = vmatpush.bf16.msra.mxu0 %v1737
        %1747 = vmatmul.bf16.gmra.mxu0 %v1734
        %v1748 = vpop.f32.mrf.mxu0
        %v1749 = vadd.f32 0.0, %v1748
        %v1750 = vpop.f32.mrf.mxu0
        %1751 = vdwg.mxu0
        %1754 = vrot.lane.b32.xlu0 %v1497, 8
        %v1755 = vpop.permute.xlu0 %1754
        %1756 = vrot.lane.b32.xlu0 %v1521, 8
        %v1757 = vpop.permute.xlu0 %1756
        %1762 = vrot.lane.b32.xlu0 %v1614, 16
        %v1763 = vpop.permute.xlu0 %1762
        %1764 = vrot.lane.b32.xlu0 %v1635, 16
        %v1765 = vpop.permute.xlu0 %1764
        %1770 = vrot.lane.b32.xlu0 %v1728, 24
        %v1771 = vpop.permute.xlu0 %1770
        %1772 = vrot.lane.b32.xlu0 %v1749, 24
        %v1773 = vpop.permute.xlu0 %1772
        %v1776 = vsel %vm578, %v1370, %v1755
        %v1777 = vsel %vm578, %v1389, %v1757
        %v1778 = vsel %vm1062, %v1776, %v1763
        %v1779 = vsel %vm1062, %v1777, %v1765
        %v1780 = vsel %vm1065, %v1778, %v1771
        %v1781 = vsel %vm1065, %v1779, %v1773
        %v1782 = vld [vmem:[%s5] sm:$0xf]
        %v1783 = vld [vmem:[%s5 + $0x4] sm:$0xf]
        %v1784 = vld [vmem:[%s5 + $0x8] sm:$0xf]
        %v1785 = vld [vmem:[%s5 + $0xc] sm:$0xf]
        %v1786 = vpack.c.bf16 %v1781, %v1780
        %v1787 = vperm.slane %v456, 3
        %v1792 = vunpack.c.l.b16 %v1782
        %v1793 = vunpack.c.l.b16 %v1783
        %v1794 = vunpack.c.l.b16 %v1784
        %v1795 = vunpack.c.l.b16 %v1785
        %v1796 = vpack.c.b16 %v1793, %v1792
        %v1797 = vpack.c.b16 %v1795, %v1794
        %v1799 = vsel %vm483, %v1786, 0
        %v1802 = vsel %vm483, %v1796, 0
        %v1805 = vsel %vm483, %v1797, 0
        %1807 = vmatpush.bf16.xpose.msra.mxu0 0
        %1808 = vmatpush.bf16.xpose.msra.mxu0 0
        %1809 = vmatpush.bf16.xpose.msra.mxu0 0
        %1810 = vmatpush.bf16.xpose.msra.mxu0 0
        %1811 = vmatpush.bf16.xpose.msra.mxu0 0
        %1812 = vmatpush.bf16.xpose.msra.mxu0 0
        %1813 = vmatpush.bf16.xpose.msra.mxu0 %v1805
        %1814 = vmatpush.bf16.xpose.msra.mxu0 %v1802
        %1815 = vmatmul.bf16.gmra.mxu0 %v1799
        %v1816 = vpop.f32.mrf.mxu0
        %v1817 = vadd.f32 %v1787, %v1816
        %v1818 = vpop.f32.mrf.mxu0
        %v1819 = vadd.f32 %v1787, %v1818
        %1820 = vdwg.mxu0
        %v1821 = vmul.f32 %v1706, 0.25
        %v1822 = vmul.f32 %v1707, 0.25
        %v1823 = vadd.f32 %v1817, %v1164
        %v1824 = vadd.f32 %v1819, %v1165
        %v1825 = vsel %vm483, %v1823, 0.0
        %1826 = vadd.xlane.f32.xlu0 %v1825
        %v1827 = vpop.xlane.xlu0 %1826
        %v1828 = vsel %vm483, %v1824, 0.0
        %1829 = vadd.xlane.f32.xlu0 %v1828
        %v1830 = vpop.xlane.xlu0 %1829
        %v1831 = vmul.f32 %v1827, %v1121
        %v1832 = vmul.f32 %v1830, %v1121
        %v1833 = vsub.f32 %v1823, %v1831
        %v1834 = vsub.f32 %v1824, %v1832
        %v1835 = vmul.f32 %v1833, %v1833
        %v1836 = vmul.f32 %v1834, %v1834
        %v1837 = vsel %vm483, %v1835, 0.0
        %1838 = vadd.xlane.f32.xlu0 %v1837
        %v1839 = vpop.xlane.xlu0 %1838
        %v1840 = vsel %vm483, %v1836, 0.0
        %1841 = vadd.xlane.f32.xlu0 %v1840
        %v1842 = vpop.xlane.xlu0 %1841
        %v1843 = vmul.f32 %v1839, %v1121
        %v1844 = vmul.f32 %v1842, %v1121
        %v1845 = vadd.f32 %v1843, 1e-05
        %v1846 = vadd.f32 %v1844, 1e-05
        %v1847 = vrsqrt.pop %v1845
        %v1848 = vmul.f32 %v1847, %v1845
        %v1849 = vmul.f32 %v1848, %v1847
        %v1850 = vmul.f32 0.5, %v1849
        %v1851 = vsub.f32 1.5, %v1850
        %v1852 = vmul.f32 %v1847, %v1851
        %vm1853 = vweird.f32 %v1845
        %vm1854 = vweird.f32 %v1847
        %vm1855 = vmor %vm1853, %vm1854
        %v1856 = vsel %vm1855, %v1847, %v1852
        %v1857 = vrsqrt.pop %v1846
        %v1858 = vmul.f32 %v1857, %v1846
        %v1859 = vmul.f32 %v1858, %v1857
        %v1860 = vmul.f32 0.5, %v1859
        %v1861 = vsub.f32 1.5, %v1860
        %v1862 = vmul.f32 %v1857, %v1861
        %vm1863 = vweird.f32 %v1846
        %vm1864 = vweird.f32 %v1857
        %vm1865 = vmor %vm1863, %vm1864
        %v1866 = vsel %vm1865, %v1857, %v1862
        %v1867 = vmul.f32 %v1833, %v1856
        %v1868 = vmul.f32 %v1834, %v1866
        %v1869 = vperm.slane %v456, 4
        %v1870 = vmul.f32 %v1867, %v1869
        %v1871 = vmul.f32 %v1868, %v1869
        %v1872 = vperm.slane %v456, 5
        %v1873 = vadd.f32 %v1870, %v1872
        %v1874 = vadd.f32 %v1871, %v1872
        %v1875 = vld [vmem:[%s6] sm:$0xf]
        %v1876 = vld [vmem:[%s6 + $0x4] sm:$0xf]
        %v1877 = vld [vmem:[%s6 + $0x8] sm:$0xf]
        %v1878 = vld [vmem:[%s6 + $0xc] sm:$0xf]
        %v1879 = vld [vmem:[%s6 + $0x10] sm:$0xf]
        %v1880 = vld [vmem:[%s6 + $0x14] sm:$0xf]
        %v1881 = vld [vmem:[%s6 + $0x18] sm:$0xf]
        %v1882 = vld [vmem:[%s6 + $0x1c] sm:$0xf]
        %v1883 = vpack.c.bf16 %v1874, %v1873
        %v1884 = vld [vmem:[%s10] sm:$0x1]
        %v1886 = vperm.slane %v1884, 0
        %v1896 = vunpack.c.l.b16 %v1875
        %v1897 = vunpack.c.l.b16 %v1876
        %v1898 = vunpack.c.l.b16 %v1877
        %v1899 = vunpack.c.l.b16 %v1878
        %v1900 = vunpack.c.l.b16 %v1879
        %v1901 = vunpack.c.l.b16 %v1880
        %v1902 = vunpack.c.l.b16 %v1881
        %v1903 = vunpack.c.l.b16 %v1882
        %v1904 = vpack.c.b16 %v1897, %v1896
        %v1905 = vpack.c.b16 %v1899, %v1898
        %v1906 = vpack.c.b16 %v1901, %v1900
        %v1907 = vpack.c.b16 %v1903, %v1902
        %v1909 = vsel %vm483, %v1883, 0
        %v1912 = vsel %vm483, %v1904, 0
        %v1915 = vsel %vm483, %v1905, 0
        %v1918 = vsel %vm483, %v1906, 0
        %v1921 = vsel %vm483, %v1907, 0
        %1923 = vmatpush.bf16.xpose.msra.mxu0 0
        %1924 = vmatpush.bf16.xpose.msra.mxu0 0
        %1925 = vmatpush.bf16.xpose.msra.mxu0 0
        %1926 = vmatpush.bf16.xpose.msra.mxu0 0
        %1927 = vmatpush.bf16.xpose.msra.mxu0 %v1921
        %1928 = vmatpush.bf16.xpose.msra.mxu0 %v1918
        %1929 = vmatpush.bf16.xpose.msra.mxu0 %v1915
        %1930 = vmatpush.bf16.xpose.msra.mxu0 %v1912
        %1931 = vmatmul.bf16.gmra.mxu0 %v1909
        %v1932 = vpop.f32.mrf.mxu0
        %v1933 = vadd.f32 %v1886, %v1932
        %v1934 = vpop.f32.mrf.mxu0
        %v1935 = vadd.f32 %v1886, %v1934
        %1936 = vdwg.mxu0
        %v1937 = vmax.f32 %v1933, 0.0
        %v1938 = vmax.f32 %v1935, 0.0
        %v1939 = vld [vmem:[%s7] sm:$0xf]
        %v1940 = vld [vmem:[%s7 + $0x4] sm:$0xf]
        %v1941 = vld [vmem:[%s7 + $0x8] sm:$0xf]
        %v1942 = vld [vmem:[%s7 + $0xc] sm:$0xf]
        %v1943 = vpack.c.bf16 %v1938, %v1937
        %v1944 = vperm.slane %v456, 6
        %v1949 = vunpack.c.l.b16 %v1939
        %v1950 = vunpack.c.l.b16 %v1940
        %v1951 = vunpack.c.l.b16 %v1941
        %v1952 = vunpack.c.l.b16 %v1942
        %v1953 = vpack.c.b16 %v1950, %v1949
        %v1954 = vpack.c.b16 %v1952, %v1951
        %vm1955 = vcmask 523264
        %v1957 = vsel %vm1955, %v1943, 0
        %v1960 = vsel %vm1955, %v1953, 0
        %v1963 = vsel %vm1955, %v1954, 0
        %1965 = vmatpush.bf16.xpose.msra.mxu0 0
        %1966 = vmatpush.bf16.xpose.msra.mxu0 0
        %1967 = vmatpush.bf16.xpose.msra.mxu0 0
        %1968 = vmatpush.bf16.xpose.msra.mxu0 0
        %1969 = vmatpush.bf16.xpose.msra.mxu0 0
        %1970 = vmatpush.bf16.xpose.msra.mxu0 0
        %1971 = vmatpush.bf16.xpose.msra.mxu0 %v1963
        %1972 = vmatpush.bf16.xpose.msra.mxu0 %v1960
        %1973 = vmatmul.bf16.gmra.mxu0 %v1957
        %v1974 = vpop.f32.mrf.mxu0
        %v1975 = vadd.f32 %v1944, %v1974
        %v1976 = vpop.f32.mrf.mxu0
        %v1977 = vadd.f32 %v1944, %v1976
        %1978 = vdwg.mxu0
        %v1979 = vadd.f32 %v1975, %v1873
        %v1980 = vadd.f32 %v1977, %v1874
        %v1981 = vsel %vm483, %v1979, 0.0
        %1982 = vadd.xlane.f32.xlu0 %v1981
        %v1983 = vpop.xlane.xlu0 %1982
        %v1984 = vsel %vm483, %v1980, 0.0
        %1985 = vadd.xlane.f32.xlu0 %v1984
        %v1986 = vpop.xlane.xlu0 %1985
        %v1987 = vmul.f32 %v1983, %v1121
        %v1988 = vmul.f32 %v1986, %v1121
        %v1989 = vsub.f32 %v1979, %v1987
        %v1990 = vsub.f32 %v1980, %v1988
        %v1991 = vmul.f32 %v1989, %v1989
        %v1992 = vmul.f32 %v1990, %v1990
        %v1993 = vsel %vm483, %v1991, 0.0
        %1994 = vadd.xlane.f32.xlu0 %v1993
        %v1995 = vpop.xlane.xlu0 %1994
        %v1996 = vsel %vm483, %v1992, 0.0
        %1997 = vadd.xlane.f32.xlu0 %v1996
        %v1998 = vpop.xlane.xlu0 %1997
        %v1999 = vmul.f32 %v1995, %v1121
        %v2000 = vmul.f32 %v1998, %v1121
        %v2001 = vadd.f32 %v1999, 1e-05
        %v2002 = vadd.f32 %v2000, 1e-05
        %v2003 = vrsqrt.pop %v2001
        %v2004 = vmul.f32 %v2003, %v2001
        %v2005 = vmul.f32 %v2004, %v2003
        %v2006 = vmul.f32 0.5, %v2005
        %v2007 = vsub.f32 1.5, %v2006
        %v2008 = vmul.f32 %v2003, %v2007
        %vm2009 = vweird.f32 %v2001
        %vm2010 = vweird.f32 %v2003
        %vm2011 = vmor %vm2009, %vm2010
        %v2012 = vsel %vm2011, %v2003, %v2008
        %v2013 = vrsqrt.pop %v2002
        %v2014 = vmul.f32 %v2013, %v2002
        %v2015 = vmul.f32 %v2014, %v2013
        %v2016 = vmul.f32 0.5, %v2015
        %v2017 = vsub.f32 1.5, %v2016
        %v2018 = vmul.f32 %v2013, %v2017
        %vm2019 = vweird.f32 %v2002
        %vm2020 = vweird.f32 %v2013
        %vm2021 = vmor %vm2019, %vm2020
        %v2022 = vsel %vm2021, %v2013, %v2018
        %v2023 = vmul.f32 %v1989, %v2012
        %v2024 = vmul.f32 %v1990, %v2022
        %v2025 = vperm.slane %v456, 7
        %v2026 = vmul.f32 %v2023, %v2025
        %v2027 = vmul.f32 %v2024, %v2025
        %v2028 = vperm.slane %v457, 0
        %v2029 = vadd.f32 %v2026, %v2028
        %v2030 = vadd.f32 %v2027, %v2028
        %v2031 = vmul.f32 %v2029, %v1164
        %v2032 = vmul.f32 %v2030, %v1165
        %v2033 = vsel %vm483, %v2031, 0.0
        %2034 = vadd.xlane.f32.xlu0 %v2033
        %v2035 = vpop.xlane.xlu0 %2034
        %v2036 = vsel %vm483, %v2032, 0.0
        %2037 = vadd.xlane.f32.xlu0 %v2036
        %v2038 = vpop.xlane.xlu0 %2037
        %v2039 = vrot.slane %v2035, 4
        %v2040 = vmax.f32 %v2035, %v2039
        %v2041 = vrot.slane %v2040, 2
        %v2042 = vmax.f32 %v2040, %v2041
        %v2043 = vrot.slane %v2042, 1
        %v2044 = vmax.f32 %v2042, %v2043
        %v2045 = vrot.slane %v2038, 4
        %v2046 = vmax.f32 %v2038, %v2045
        %v2047 = vrot.slane %v2046, 2
        %v2048 = vmax.f32 %v2046, %v2047
        %v2049 = vrot.slane %v2048, 1
        %v2050 = vmax.f32 %v2048, %v2049
        %v2051 = vsub.f32 %v2035, %v2044
        %v2052 = vsub.f32 %v2038, %v2050
        %v2053 = vmul.f32 %v2051, 1.442695
        %v2054 = vpow.pop %v2053
        %v2055 = vmul.f32 %v2052, 1.442695
        %v2056 = vpow.pop %v2055
        %v2057 = vrot.slane %v2054, 4
        %v2058 = vadd.f32 %v2054, %v2057
        %v2059 = vrot.slane %v2058, 2
        %v2060 = vadd.f32 %v2058, %v2059
        %v2061 = vrot.slane %v2060, 1
        %v2062 = vadd.f32 %v2060, %v2061
        %v2063 = vrot.slane %v2056, 4
        %v2064 = vadd.f32 %v2056, %v2063
        %v2065 = vrot.slane %v2064, 2
        %v2066 = vadd.f32 %v2064, %v2065
        %v2067 = vrot.slane %v2066, 1
        %v2068 = vadd.f32 %v2066, %v2067
        %v2069 = vrcp.pop %v2062
        %v2070 = vrcp.pop %v2068
        %v2071 = vmul.f32 %v2054, %v2069
        %v2072 = vmul.f32 %v2056, %v2070
        %v2073 = vmul.f32 %v2029, %v2071
        %v2074 = vmul.f32 %v2030, %v2072
        %v2075 = vadd.f32 %v2073, %v2029
        %v2076 = vadd.f32 %v2074, %v2030
        %v2077 = vsel %vm483, %v2075, 0.0
        %2078 = vadd.xlane.f32.xlu0 %v2077
        %v2079 = vpop.xlane.xlu0 %2078
        %v2080 = vsel %vm483, %v2076, 0.0
        %2081 = vadd.xlane.f32.xlu0 %v2080
        %v2082 = vpop.xlane.xlu0 %2081
        %v2083 = vmul.f32 %v2079, %v1121
        %v2084 = vmul.f32 %v2082, %v1121
        %v2085 = vsub.f32 %v2075, %v2083
        %v2086 = vsub.f32 %v2076, %v2084
        %v2087 = vmul.f32 %v2085, %v2085
        %v2088 = vmul.f32 %v2086, %v2086
        %v2089 = vsel %vm483, %v2087, 0.0
        %2090 = vadd.xlane.f32.xlu0 %v2089
        %v2091 = vpop.xlane.xlu0 %2090
        %v2092 = vsel %vm483, %v2088, 0.0
        %2093 = vadd.xlane.f32.xlu0 %v2092
        %v2094 = vpop.xlane.xlu0 %2093
        %v2095 = vmul.f32 %v2091, %v1121
        %v2096 = vmul.f32 %v2094, %v1121
        %v2097 = vadd.f32 %v2095, 1e-05
        %v2098 = vadd.f32 %v2096, 1e-05
        %v2099 = vrsqrt.pop %v2097
        %v2100 = vmul.f32 %v2099, %v2097
        %v2101 = vmul.f32 %v2100, %v2099
        %v2102 = vmul.f32 0.5, %v2101
        %v2103 = vsub.f32 1.5, %v2102
        %v2104 = vmul.f32 %v2099, %v2103
        %vm2105 = vweird.f32 %v2097
        %vm2106 = vweird.f32 %v2099
        %vm2107 = vmor %vm2105, %vm2106
        %v2108 = vsel %vm2107, %v2099, %v2104
        %v2109 = vrsqrt.pop %v2098
        %v2110 = vmul.f32 %v2109, %v2098
        %v2111 = vmul.f32 %v2110, %v2109
        %v2112 = vmul.f32 0.5, %v2111
        %v2113 = vsub.f32 1.5, %v2112
        %v2114 = vmul.f32 %v2109, %v2113
        %vm2115 = vweird.f32 %v2098
        %vm2116 = vweird.f32 %v2109
        %vm2117 = vmor %vm2115, %vm2116
        %v2118 = vsel %vm2117, %v2109, %v2114
        %v2119 = vmul.f32 %v2085, %v2108
        %v2120 = vmul.f32 %v2086, %v2118
        %v2121 = vperm.slane %v457, 1
        %v2122 = vmul.f32 %v2119, %v2121
        %v2123 = vmul.f32 %v2120, %v2121
        %v2124 = vperm.slane %v457, 2
        %v2125 = vadd.f32 %v2122, %v2124
        %v2126 = vadd.f32 %v2123, %v2124
        %2127 = vst.msk [vmem:[%s424] sm:$0xff] %vm483, %v2125
        %2128 = vst.msk [vmem:[%s424 + $0x8] sm:$0xff] %vm483, %v2126
        %2129 = vst.msk [vmem:[%s449] sm:$0xff] %vm578, %v1821
        %2130 = vst.msk [vmem:[%s449 + $0x8] sm:$0xff] %vm578, %v1822
        %s2131 = sand.u32 %s276, 1
        %s2132 = scalar_lea.sflag [#allocation3], %s2131
        %s2133 = sand.u32 %s276, 1
        %s2134 = smul.addr %s2133, 16
        %s2135 = scalar_lea.vmem [#allocation2], %s2134
        %s2136 = smul.u32 2, %s27
        %p2137 = scmp.lt.s32.totalorder %s2136, 3
        %s2138 = scalar_select %p2137, %s2136, 3
        %s2139 = smul.addr %s2138, 8
        %s2140 = scalar_lea.vmem %s12, %s2139
        // Predicated region
        $region65: #{tpu_custom_call.1} parent=63 // pred_check
          %p2141 = pneg %p286
        $region66: #{tpu_custom_call.1} parent=63 // pred_check_branch
          %2143 = sbr.rel (%p2141) target = $region68
        $region67: #{tpu_custom_call.1} parent=63 // pred_region
          %s2144 = smul.u32 2, %s27
          %2146 = vsyncadd %s2132, 0
          %s2147 = smul.addr %s2144, 8
          %s2148 = scalar_lea.hbm %s11, %s2147
          %s2149 = sshll.u32 %s2135, 4
          %s2150 = int_to_ptr.vmem [resolvable:$true] %s2149
          %s2151 = sshll.u32 %s2148, 4
          %s2152 = int_to_ptr.hbm [resolvable:$true] %s2151
          %2157 = dma.vmem_to_hbm [thread:$0]  %s2150, 256, %s2152, %s2132, 128, 128, 8
        $region68: #{tpu_custom_call.1} parent=63 // pred_fallthru
          _
        // Predicated region
        $region69: #{tpu_custom_call.1} parent=63 // pred_check
          %p2158 = pneg %p312
        $region70: #{tpu_custom_call.1} parent=63 // pred_check_branch
          %2160 = sbr.rel (%p2158) target = $region72
        $region71: #{tpu_custom_call.1} parent=63 // pred_region
          %s2161 = smul.u32 2, %s27
        $region72: #{tpu_custom_call.1} parent=63 // pred_fallthru
          _
      $region64: #{tpu_custom_call.1} parent=5 // pred_fallthru
        _
      %p2162 = scmp.le.s32.totalorder 2, %s22
      // Predicated region
      $region73: #{tpu_custom_call.1} parent=5 // pred_check
        %p2163 = pneg %p2162
      $region74: #{tpu_custom_call.1} parent=5 // pred_check_branch
        %2165 = sbr.rel (%p2163) target = $region76
      $region75: #{tpu_custom_call.1} parent=5 // pred_region
        %s2166 = ssub.s32 %s22, 2
        // Predicated region
        $region77: #{tpu_custom_call.1} parent=75 // pred_check
          %p2167 = pneg %p292
        $region78: #{tpu_custom_call.1} parent=75 // pred_check_branch
          %2169 = sbr.rel (%p2167) target = $region80
        $region79: #{tpu_custom_call.1} parent=75 // pred_region
          %s2170 = sand.u32 %s277, 1
          %s2171 = scalar_lea.sflag [#allocation3], %s2170
          %s2172 = sand.u32 %s277, 1
          %s2173 = smul.addr %s2172, 16
          %s2174 = scalar_lea.vmem [#allocation2], %s2173
          %2176 = dma.done %s2171, 256
        $region80: #{tpu_custom_call.1} parent=75 // pred_fallthru
          _
        // Predicated region
        $region81: #{tpu_custom_call.1} parent=75 // pred_check
          %p2177 = pneg %p318
        $region82: #{tpu_custom_call.1} parent=75 // pred_check_branch
          %2179 = sbr.rel (%p2177) target = $region84
        $region83: #{tpu_custom_call.1} parent=75 // pred_region
          %s2180 = smul.u32 2, %s28
          %p2181 = scmp.lt.s32.totalorder %s2180, 3
          %s2182 = scalar_select %p2181, %s2180, 3
          %s2183 = smul.addr %s2182, 8
          %s2184 = scalar_lea.vmem %s12, %s2183
        $region84: #{tpu_custom_call.1} parent=75 // pred_fallthru
          _
      $region76: #{tpu_custom_call.1} parent=5 // pred_fallthru
        _
    $region6: #{tpu_custom_call.1} parent=1 // loop_footer
      %s26 = sadd.s32 1, %s22
    $region7: #{tpu_custom_call.1} parent=1 // loop_footer_branch
      %21 = sbr.rel target = $region3
    $region8: #{tpu_custom_call.1} parent=1 // loop_exit
      _
    %2185 = vsyncpa [#allocation3], 1
    %s2186 = scalar_lea.sflag [#allocation3], 1
    %2187 = vsyncpa %s2186, 1

</llo_original>
